<compile_context>
chip_gen: v6e
topology: v6e:2x2x1
jax: 0.10.0
libtpu: 0.0.40
codegen_flags: <defaults>
</compile_context>

<pallas_src>
import functools

import jax
import jax.numpy as jnp
from jax.experimental import pallas as pl
from jax.experimental.pallas import tpu as pltpu


def _round_up(x, m):
    return ((x + m - 1) // m) * m


def _pick_conv_batch_tile(n, per_sample_bytes, vmem_budget=12 << 20, cap=64):
    """Largest batch tile fitting the VMEM budget; keeps >=2 grid steps when
    possible; prefers exact divisors of n, else the batch is zero-padded."""
    max_tile = max(1, min(cap, int(vmem_budget // max(per_sample_bytes, 1))))
    if n >= 2:
        max_tile = min(max_tile, (n + 1) // 2)   # >=2 steps -> both v7x TCs busy
    max_tile = max(1, max_tile)
    best_div = 1
    for b in range(max_tile, 0, -1):
        if n % b == 0:
            best_div = b
            break
    if best_div * 2 >= max_tile:                 # divisor is good enough
        return best_div, n
    return max_tile, _round_up(n, max_tile)      # pad the batch instead


def _pick_fc_batch_tile(n, cap=512):
    if n <= cap:
        return n, n
    for b in range(cap - cap % 8, 7, -8):        # multiple-of-8 divisor
        if n % b == 0:
            return b, n
    return cap, _round_up(n, cap)                # pad the batch


# ----------------------------------------------------------------------------
# Conv (k=5, stride=1, pad=2) + MaxPool(2) + ReLU, fused in one kernel.
# ----------------------------------------------------------------------------
def _conv_pool_relu_kernel(x_ref, w_ref, b_ref, o_ref, patch_ref, *,
                           K, W2s, Cout, CoutP):
    # x_ref:     (B, 4, Cin, L_pad)    space-to-depth'ed, spatially flattened
    # w_ref:     (4*CoutP, T*T*Cin)    combined phase weights (zero-selected taps)
    # b_ref:     (Cout, 1)
    # o_ref:     (B, Cout, M_pad)      lane-dense pooled/relu'ed output
    # patch_ref: (B, T*T*Cin, M_pad)   deduped im2col staging buffer (36 taps)
    B, _, M_pad = o_ref.shape
    Cin = x_ref.shape[2]
    T = K + 1                                    # taps per axis after pool dedup

    # Stage the 36 deduped taps once per grid step (was 4 x 25 copies).
    for kh2 in range(T):
        for kw2 in range(T):
            ab = (kh2 % 2) * 2 + (kw2 % 2)
            start = (kh2 // 2) * W2s + (kw2 // 2)
            t = kh2 * T + kw2
            patch_ref[:, t * Cin:(t + 1) * Cin, :] = (
                x_ref[:, ab, :, start:start + M_pad])

    w = w_ref[...]                               # (4*CoutP, KKC), loaded once
    bias = b_ref[...]                            # (Cout, 1)
    for b in range(B):                           # plain 2D MXU dots, no w broadcast
        res = jnp.dot(w, patch_ref[b], preferred_element_type=jnp.float32)
        pooled = res[0:Cout]                     # phase (0,0)
        for p in range(1, 4):                    # 2x2 max-pool = running max
            pooled = jnp.maximum(pooled, res[p * CoutP:p * CoutP + Cout])
        o_ref[b] = jnp.maximum(pooled + bias, 0.0).astype(o_ref.dtype)


def conv_pool_relu(x_nchw, w_oihw, bias):
    N, Cin, H, W = x_nchw.shape
    Cout, _, K, _ = w_oihw.shape
    P = K // 2
    T = K + 1                                    # 6 deduped taps per axis
    xp = jnp.pad(x_nchw, ((0, 0), (0, 0), (P, P), (P, P)))
    Hp, Wp = H + 2 * P, W + 2 * P
    H2s, W2s = Hp // 2, Wp // 2                  # space-to-depth spatial extents
    H2, W2 = H // 2, W // 2                      # pooled output extents

    # space-to-depth: x_flat[n, a*2+b, c, r*W2s+cc] = xp[n, c, 2r+a, 2cc+b]
    x4 = xp.reshape(N, Cin, H2s, 2, W2s, 2).transpose(0, 3, 5, 1, 2, 4)
    x_flat = x4.reshape(N, 4, Cin, H2s * W2s)

    M = H2 * W2s                                 # includes junk cols (cropped later)
    M_pad = _round_up(M, 128)                    # lane-dense output width
    max_start = (K // 2) * W2s + (K // 2)        # largest in-kernel slice offset
    L_pad = _round_up(max(max_start + M_pad, H2s * W2s), 128)
    x_flat = jnp.pad(x_flat, ((0, 0), (0, 0), (0, 0), (0, L_pad - H2s * W2s)))

    # Combined per-phase weights: OIHW -> (Cout,kh,kw,Cin), embedded at offset
    # (dh,dw) into a zero (CoutP, T, T, Cin) block, flattened tap-major.
    KKC = T * T * Cin
    CoutP = _round_up(Cout, 8)                   # sublane-aligned phase row groups
    w_perm = w_oihw.transpose(0, 2, 3, 1).astype(jnp.float32)
    blocks = []
    for dh in range(2):
        for dw in range(2):
            wb = jnp.pad(w_perm,
                         ((0, CoutP - Cout), (dh, 1 - dh), (dw, 1 - dw), (0, 0)))
            blocks.append(wb.reshape(CoutP, KKC))
    w_comb = jnp.concatenate(blocks, axis=0)     # (4*CoutP, KKC)

    per_sample_bytes = 4 * (2 * 4 * Cin * L_pad + KKC * M_pad + 2 * CoutP * M_pad)
    B_tile, N_pad = _pick_conv_batch_tile(N, per_sample_bytes)
    if N_pad != N:
        x_flat = jnp.pad(x_flat, ((0, N_pad - N), (0, 0), (0, 0), (0, 0)))

    out = pl.pallas_call(
        functools.partial(_conv_pool_relu_kernel, K=K, W2s=W2s,
                          Cout=Cout, CoutP=CoutP),
        out_shape=jax.ShapeDtypeStruct((N_pad, Cout, M_pad), jnp.float32),
        grid=(N_pad // B_tile,),
        in_specs=[
            pl.BlockSpec((B_tile, 4, Cin, L_pad), lambda n: (n, 0, 0, 0)),
            pl.BlockSpec((4 * CoutP, KKC), lambda n: (0, 0)),
            pl.BlockSpec((Cout, 1), lambda n: (0, 0)),
        ],
        out_specs=pl.BlockSpec((B_tile, Cout, M_pad), lambda n: (n, 0, 0)),
        scratch_shapes=[pltpu.VMEM((B_tile, KKC, M_pad), jnp.float32)],
        compiler_params=pltpu.CompilerParams(
            dimension_semantics=("parallel",),
            vmem_limit_bytes=32 * 1024 * 1024),
    )(x_flat, w_comb, bias.reshape(Cout, 1).astype(jnp.float32))

    # Drop padded samples / junk columns; output is already channel-major NCHW.
    out = out[:N, :, :M].reshape(N, Cout, H2, W2s)[:, :, :, :W2]
    return out                                   # (N, Cout, H2, W2)


# ----------------------------------------------------------------------------
# Linear(980 -> 10) + log_softmax(dim=1), fused in one kernel (batch-tiled).
# ----------------------------------------------------------------------------
def _fc_logsoftmax_kernel(x_ref, w_ref, b_ref, o_ref):
    # x_ref: (TB, Din); w_ref: (Dout, Din) lane-dense torch layout; b_ref: (1, Dout)
    logits = jax.lax.dot_general(
        x_ref[...], w_ref[...],
        dimension_numbers=(((1,), (1,)), ((), ())),
        preferred_element_type=jnp.float32) + b_ref[...]
    m = jnp.max(logits, axis=-1, keepdims=True)
    s = logits - m
    lse = jnp.log(jnp.sum(jnp.exp(s), axis=-1, keepdims=True))
    o_ref[...] = (s - lse).astype(o_ref.dtype)


def fc_logsoftmax(x, w, b):
    # TODO(synk): this whole kernel could be fused into conv2's epilogue (pass
    #             wf/bf as constant inputs) to drop one launch + HBM round trip.
    N, Din = x.shape
    Dout = w.shape[0]
    TB, N_pad = _pick_fc_batch_tile(N)
    if N_pad != N:
        x = jnp.pad(x, ((0, N_pad - N), (0, 0)))
    out = pl.pallas_call(
        _fc_logsoftmax_kernel,
        out_shape=jax.ShapeDtypeStruct((N_pad, Dout), jnp.float32),
        grid=(N_pad // TB,),
        in_specs=[
            pl.BlockSpec((TB, Din), lambda i: (i, 0)),
            pl.BlockSpec((Dout, Din), lambda i: (0, 0)),
            pl.BlockSpec((1, Dout), lambda i: (0, 0)),
        ],
        out_specs=pl.BlockSpec((TB, Dout), lambda i: (i, 0)),
        compiler_params=pltpu.CompilerParams(
            dimension_semantics=("parallel",)),
    )(x, w, b.reshape(1, Dout))
    return out[:N]


# ----------------------------------------------------------------------------
# Full Net forward (NCHW input, PyTorch semantics).
# ----------------------------------------------------------------------------
def net_forward(x_nchw, params):
    h1 = conv_pool_relu(x_nchw, params["w1"], params["b1"])   # (N, 10, 14, 14)
    h2 = conv_pool_relu(h1, params["w2"], params["b2"])       # (N, 20, 7, 7)
    flat = h2.reshape(h2.shape[0], -1)                        # NCHW flatten -> (N, 980)
    return fc_logsoftmax(flat, params["wf"], params["bf"])    # (N, 10)


def init_params(key):
    k1, k2, k3 = jax.random.split(key, 3)
    return {
        # conv weights in PyTorch OIHW layout
        "w1": jax.random.normal(k1, (10, 1, 5, 5), jnp.float32) * 0.2,
        "b1": jnp.linspace(-0.1, 0.1, 10, dtype=jnp.float32),
        "w2": jax.random.normal(k2, (20, 10, 5, 5), jnp.float32) * (1.0 / 16.0),
        "b2": jnp.linspace(-0.1, 0.1, 20, dtype=jnp.float32),
        # fc weight kept in torch (out=10, in=980) layout (lane-dense in-kernel)
        "wf": jax.random.normal(k3, (10, 980), jnp.float32) * (1.0 / 32.0),
        "bf": jnp.linspace(-0.05, 0.05, 10, dtype=jnp.float32),
    }


def _reference_forward(x, params):
    """Pure-JAX (XLA) reference for correctness checking."""
    def conv(x, w, b):
        y = jax.lax.conv_general_dilated(
            x, w, window_strides=(1, 1), padding=((2, 2), (2, 2)),
            dimension_numbers=("NCHW", "OIHW", "NCHW"),
            precision=jax.lax.Precision.HIGHEST)
        return y + b.reshape(1, -1, 1, 1)

    def pool_relu(y):
        n, c, h, w = y.shape
        y = y.reshape(n, c, h // 2, 2, w // 2, 2).max(axis=(3, 5))
        return jnp.maximum(y, 0.0)

    h1 = pool_relu(conv(x, params["w1"], params["b1"]))
    h2 = pool_relu(conv(h1, params["w2"], params["b2"]))
    flat = h2.reshape(x.shape[0], -1)
    logits = jnp.dot(flat, params["wf"].T,
                     precision=jax.lax.Precision.HIGHEST) + params["bf"]
    return jax.nn.log_softmax(logits, axis=-1)


if __name__ == "__main__":
    key = jax.random.PRNGKey(0)
    kx, kp = jax.random.split(key)
    # fc(980) implies 28x28 single-channel input; small batch of 2.
    x = jax.random.normal(kx, (2, 1, 28, 28), jnp.float32)
    params = init_params(kp)

    out = jax.jit(net_forward)(x, params)
    out = jax.block_until_ready(out)

    assert out.shape == (2, 10), out.shape
    assert bool(jnp.all(jnp.isfinite(out)))
    # log_softmax rows must exponentiate-sum to 1
    row_sums = jnp.sum(jnp.exp(out), axis=1)
    assert bool(jnp.allclose(row_sums, 1.0, atol=1e-4)), row_sums
    # compare against a pure-JAX reference (loose tol: MXU f32 pass accumulation)
    ref = jax.jit(_reference_forward)(x, params)
    max_err = float(jnp.max(jnp.abs(out - ref)))
    assert max_err < 1e-1, max_err

    print("KERNEL_OK")
</pallas_src>

<mosaic_0001>
module attributes {stable_mosaic.version = 11 : i64} {
  func.func @_conv_pool_relu_kernel(%arg0: i32, %arg1: memref<1x4x1x384xf32, #tpu.memory_space<vmem>>, %arg2: memref<64x36xf32, #tpu.memory_space<vmem>>, %arg3: memref<10x1xf32, #tpu.memory_space<vmem>>, %arg4: memref<1x10x256xf32, #tpu.memory_space<vmem>>, %arg5: memref<1x36x256xf32, #tpu.memory_space<vmem>>) attributes {dimension_semantics = [#tpu.dimension_semantics<parallel>], iteration_bounds = array<i64: 2>, scalar_prefetch = 0 : i64, scratch_operands = 1 : i64, tpu.core_type = #tpu.core_type<tc>, window_params = [{transform_indices = @transform_0, window_bounds = array<i64: 1, 4, 1, 384>}, {pipeline_mode = #tpu.pipeline_mode<synchronous>, transform_indices = @transform_1, window_bounds = array<i64: 64, 36>}, {pipeline_mode = #tpu.pipeline_mode<synchronous>, transform_indices = @transform_2, window_bounds = array<i64: 10, 1>}, {transform_indices = @transform_3, window_bounds = array<i64: 1, 10, 256>}]} {
    %c0 = arith.constant 0 : index
    %c0_0 = arith.constant 0 : index
    %c0_1 = arith.constant 0 : index
    %c0_2 = arith.constant 0 : index
    %0 = vector.load %arg1[%c0, %c0_0, %c0_1, %c0_2] : memref<1x4x1x384xf32, #tpu.memory_space<vmem>>, vector<1x1x1x256xf32>
    %1 = vector.shape_cast %0 : vector<1x1x1x256xf32> to vector<1x1x256xf32>
    %c0_3 = arith.constant 0 : index
    %c0_4 = arith.constant 0 : index
    %c0_5 = arith.constant 0 : index
    %2 = vector.load %arg5[%c0_3, %c0_4, %c0_5] : memref<1x36x256xf32, #tpu.memory_space<vmem>>, vector<1x1x256xf32>
    tpu.vector_store %arg5[%c0_3, %c0_4, %c0_5], %1 {strides = array<i32>} : memref<1x36x256xf32, #tpu.memory_space<vmem>>, vector<1x1x256xf32>,
    %c0_6 = arith.constant 0 : index
    %c1 = arith.constant 1 : index
    %c0_7 = arith.constant 0 : index
    %c0_8 = arith.constant 0 : index
    %3 = vector.load %arg1[%c0_6, %c1, %c0_7, %c0_8] : memref<1x4x1x384xf32, #tpu.memory_space<vmem>>, vector<1x1x1x256xf32>
    %4 = vector.shape_cast %3 : vector<1x1x1x256xf32> to vector<1x1x256xf32>
    %c0_9 = arith.constant 0 : index
    %c1_10 = arith.constant 1 : index
    %c0_11 = arith.constant 0 : index
    %5 = vector.load %arg5[%c0_9, %c1_10, %c0_11] : memref<1x36x256xf32, #tpu.memory_space<vmem>>, vector<1x1x256xf32>
    tpu.vector_store %arg5[%c0_9, %c1_10, %c0_11], %4 {strides = array<i32>} : memref<1x36x256xf32, #tpu.memory_space<vmem>>, vector<1x1x256xf32>,
    %c0_12 = arith.constant 0 : index
    %c0_13 = arith.constant 0 : index
    %c0_14 = arith.constant 0 : index
    %c1_15 = arith.constant 1 : index
    %6 = vector.load %arg1[%c0_12, %c0_13, %c0_14, %c1_15] : memref<1x4x1x384xf32, #tpu.memory_space<vmem>>, vector<1x1x1x256xf32>
    %7 = vector.shape_cast %6 : vector<1x1x1x256xf32> to vector<1x1x256xf32>
    %c0_16 = arith.constant 0 : index
    %c2 = arith.constant 2 : index
    %c0_17 = arith.constant 0 : index
    %8 = vector.load %arg5[%c0_16, %c2, %c0_17] : memref<1x36x256xf32, #tpu.memory_space<vmem>>, vector<1x1x256xf32>
    tpu.vector_store %arg5[%c0_16, %c2, %c0_17], %7 {strides = array<i32>} : memref<1x36x256xf32, #tpu.memory_space<vmem>>, vector<1x1x256xf32>,
    %c0_18 = arith.constant 0 : index
    %c1_19 = arith.constant 1 : index
    %c0_20 = arith.constant 0 : index
    %c1_21 = arith.constant 1 : index
    %9 = vector.load %arg1[%c0_18, %c1_19, %c0_20, %c1_21] : memref<1x4x1x384xf32, #tpu.memory_space<vmem>>, vector<1x1x1x256xf32>
    %10 = vector.shape_cast %9 : vector<1x1x1x256xf32> to vector<1x1x256xf32>
    %c0_22 = arith.constant 0 : index
    %c3 = arith.constant 3 : index
    %c0_23 = arith.constant 0 : index
    %11 = vector.load %arg5[%c0_22, %c3, %c0_23] : memref<1x36x256xf32, #tpu.memory_space<vmem>>, vector<1x1x256xf32>
    tpu.vector_store %arg5[%c0_22, %c3, %c0_23], %10 {strides = array<i32>} : memref<1x36x256xf32, #tpu.memory_space<vmem>>, vector<1x1x256xf32>,
    %c0_24 = arith.constant 0 : index
    %c0_25 = arith.constant 0 : index
    %c0_26 = arith.constant 0 : index
    %c2_27 = arith.constant 2 : index
    %12 = vector.load %arg1[%c0_24, %c0_25, %c0_26, %c2_27] : memref<1x4x1x384xf32, #tpu.memory_space<vmem>>, vector<1x1x1x256xf32>
    %13 = vector.shape_cast %12 : vector<1x1x1x256xf32> to vector<1x1x256xf32>
    %c0_28 = arith.constant 0 : index
    %c4 = arith.constant 4 : index
    %c0_29 = arith.constant 0 : index
    %14 = vector.load %arg5[%c0_28, %c4, %c0_29] : memref<1x36x256xf32, #tpu.memory_space<vmem>>, vector<1x1x256xf32>
    tpu.vector_store %arg5[%c0_28, %c4, %c0_29], %13 {strides = array<i32>} : memref<1x36x256xf32, #tpu.memory_space<vmem>>, vector<1x1x256xf32>,
    %c0_30 = arith.constant 0 : index
    %c1_31 = arith.constant 1 : index
    %c0_32 = arith.constant 0 : index
    %c2_33 = arith.constant 2 : index
    %15 = vector.load %arg1[%c0_30, %c1_31, %c0_32, %c2_33] : memref<1x4x1x384xf32, #tpu.memory_space<vmem>>, vector<1x1x1x256xf32>
    %16 = vector.shape_cast %15 : vector<1x1x1x256xf32> to vector<1x1x256xf32>
    %c0_34 = arith.constant 0 : index
    %c5 = arith.constant 5 : index
    %c0_35 = arith.constant 0 : index
    %17 = vector.load %arg5[%c0_34, %c5, %c0_35] : memref<1x36x256xf32, #tpu.memory_space<vmem>>, vector<1x1x256xf32>
    tpu.vector_store %arg5[%c0_34, %c5, %c0_35], %16 {strides = array<i32>} : memref<1x36x256xf32, #tpu.memory_space<vmem>>, vector<1x1x256xf32>,
    %c0_36 = arith.constant 0 : index
    %c2_37 = arith.constant 2 : index
    %c0_38 = arith.constant 0 : index
    %c0_39 = arith.constant 0 : index
    %18 = vector.load %arg1[%c0_36, %c2_37, %c0_38, %c0_39] : memref<1x4x1x384xf32, #tpu.memory_space<vmem>>, vector<1x1x1x256xf32>
    %19 = vector.shape_cast %18 : vector<1x1x1x256xf32> to vector<1x1x256xf32>
    %c0_40 = arith.constant 0 : index
    %c6 = arith.constant 6 : index
    %c0_41 = arith.constant 0 : index
    %20 = vector.load %arg5[%c0_40, %c6, %c0_41] : memref<1x36x256xf32, #tpu.memory_space<vmem>>, vector<1x1x256xf32>
    tpu.vector_store %arg5[%c0_40, %c6, %c0_41], %19 {strides = array<i32>} : memref<1x36x256xf32, #tpu.memory_space<vmem>>, vector<1x1x256xf32>,
    %c0_42 = arith.constant 0 : index
    %c3_43 = arith.constant 3 : index
    %c0_44 = arith.constant 0 : index
    %c0_45 = arith.constant 0 : index
    %21 = vector.load %arg1[%c0_42, %c3_43, %c0_44, %c0_45] : memref<1x4x1x384xf32, #tpu.memory_space<vmem>>, vector<1x1x1x256xf32>
    %22 = vector.shape_cast %21 : vector<1x1x1x256xf32> to vector<1x1x256xf32>
    %c0_46 = arith.constant 0 : index
    %c7 = arith.constant 7 : index
    %c0_47 = arith.constant 0 : index
    %23 = vector.load %arg5[%c0_46, %c7, %c0_47] : memref<1x36x256xf32, #tpu.memory_space<vmem>>, vector<1x1x256xf32>
    tpu.vector_store %arg5[%c0_46, %c7, %c0_47], %22 {strides = array<i32>} : memref<1x36x256xf32, #tpu.memory_space<vmem>>, vector<1x1x256xf32>,
    %c0_48 = arith.constant 0 : index
    %c2_49 = arith.constant 2 : index
    %c0_50 = arith.constant 0 : index
    %c1_51 = arith.constant 1 : index
    %24 = vector.load %arg1[%c0_48, %c2_49, %c0_50, %c1_51] : memref<1x4x1x384xf32, #tpu.memory_space<vmem>>, vector<1x1x1x256xf32>
    %25 = vector.shape_cast %24 : vector<1x1x1x256xf32> to vector<1x1x256xf32>
    %c0_52 = arith.constant 0 : index
    %c8 = arith.constant 8 : index
    %c0_53 = arith.constant 0 : index
    %26 = vector.load %arg5[%c0_52, %c8, %c0_53] : memref<1x36x256xf32, #tpu.memory_space<vmem>>, vector<1x1x256xf32>
    tpu.vector_store %arg5[%c0_52, %c8, %c0_53], %25 {strides = array<i32>} : memref<1x36x256xf32, #tpu.memory_space<vmem>>, vector<1x1x256xf32>,
    %c0_54 = arith.constant 0 : index
    %c3_55 = arith.constant 3 : index
    %c0_56 = arith.constant 0 : index
    %c1_57 = arith.constant 1 : index
    %27 = vector.load %arg1[%c0_54, %c3_55, %c0_56, %c1_57] : memref<1x4x1x384xf32, #tpu.memory_space<vmem>>, vector<1x1x1x256xf32>
    %28 = vector.shape_cast %27 : vector<1x1x1x256xf32> to vector<1x1x256xf32>
    %c0_58 = arith.constant 0 : index
    %c9 = arith.constant 9 : index
    %c0_59 = arith.constant 0 : index
    %29 = vector.load %arg5[%c0_58, %c9, %c0_59] : memref<1x36x256xf32, #tpu.memory_space<vmem>>, vector<1x1x256xf32>
    tpu.vector_store %arg5[%c0_58, %c9, %c0_59], %28 {strides = array<i32>} : memref<1x36x256xf32, #tpu.memory_space<vmem>>, vector<1x1x256xf32>,
    %c0_60 = arith.constant 0 : index
    %c2_61 = arith.constant 2 : index
    %c0_62 = arith.constant 0 : index
    %c2_63 = arith.constant 2 : index
    %30 = vector.load %arg1[%c0_60, %c2_61, %c0_62, %c2_63] : memref<1x4x1x384xf32, #tpu.memory_space<vmem>>, vector<1x1x1x256xf32>
    %31 = vector.shape_cast %30 : vector<1x1x1x256xf32> to vector<1x1x256xf32>
    %c0_64 = arith.constant 0 : index
    %c10 = arith.constant 10 : index
    %c0_65 = arith.constant 0 : index
    %32 = vector.load %arg5[%c0_64, %c10, %c0_65] : memref<1x36x256xf32, #tpu.memory_space<vmem>>, vector<1x1x256xf32>
    tpu.vector_store %arg5[%c0_64, %c10, %c0_65], %31 {strides = array<i32>} : memref<1x36x256xf32, #tpu.memory_space<vmem>>, vector<1x1x256xf32>,
    %c0_66 = arith.constant 0 : index
    %c3_67 = arith.constant 3 : index
    %c0_68 = arith.constant 0 : index
    %c2_69 = arith.constant 2 : index
    %33 = vector.load %arg1[%c0_66, %c3_67, %c0_68, %c2_69] : memref<1x4x1x384xf32, #tpu.memory_space<vmem>>, vector<1x1x1x256xf32>
    %34 = vector.shape_cast %33 : vector<1x1x1x256xf32> to vector<1x1x256xf32>
    %c0_70 = arith.constant 0 : index
    %c11 = arith.constant 11 : index
    %c0_71 = arith.constant 0 : index
    %35 = vector.load %arg5[%c0_70, %c11, %c0_71] : memref<1x36x256xf32, #tpu.memory_space<vmem>>, vector<1x1x256xf32>
    tpu.vector_store %arg5[%c0_70, %c11, %c0_71], %34 {strides = array<i32>} : memref<1x36x256xf32, #tpu.memory_space<vmem>>, vector<1x1x256xf32>,
    %c0_72 = arith.constant 0 : index
    %c0_73 = arith.constant 0 : index
    %c0_74 = arith.constant 0 : index
    %c16 = arith.constant 16 : index
    %36 = vector.load %arg1[%c0_72, %c0_73, %c0_74, %c16] : memref<1x4x1x384xf32, #tpu.memory_space<vmem>>, vector<1x1x1x256xf32>
    %37 = vector.shape_cast %36 : vector<1x1x1x256xf32> to vector<1x1x256xf32>
    %c0_75 = arith.constant 0 : index
    %c12 = arith.constant 12 : index
    %c0_76 = arith.constant 0 : index
    %38 = vector.load %arg5[%c0_75, %c12, %c0_76] : memref<1x36x256xf32, #tpu.memory_space<vmem>>, vector<1x1x256xf32>
    tpu.vector_store %arg5[%c0_75, %c12, %c0_76], %37 {strides = array<i32>} : memref<1x36x256xf32, #tpu.memory_space<vmem>>, vector<1x1x256xf32>,
    %c0_77 = arith.constant 0 : index
    %c1_78 = arith.constant 1 : index
    %c0_79 = arith.constant 0 : index
    %c16_80 = arith.constant 16 : index
    %39 = vector.load %arg1[%c0_77, %c1_78, %c0_79, %c16_80] : memref<1x4x1x384xf32, #tpu.memory_space<vmem>>, vector<1x1x1x256xf32>
    %40 = vector.shape_cast %39 : vector<1x1x1x256xf32> to vector<1x1x256xf32>
    %c0_81 = arith.constant 0 : index
    %c13 = arith.constant 13 : index
    %c0_82 = arith.constant 0 : index
    %41 = vector.load %arg5[%c0_81, %c13, %c0_82] : memref<1x36x256xf32, #tpu.memory_space<vmem>>, vector<1x1x256xf32>
    tpu.vector_store %arg5[%c0_81, %c13, %c0_82], %40 {strides = array<i32>} : memref<1x36x256xf32, #tpu.memory_space<vmem>>, vector<1x1x256xf32>,
    %c0_83 = arith.constant 0 : index
    %c0_84 = arith.constant 0 : index
    %c0_85 = arith.constant 0 : index
    %c17 = arith.constant 17 : index
    %42 = vector.load %arg1[%c0_83, %c0_84, %c0_85, %c17] : memref<1x4x1x384xf32, #tpu.memory_space<vmem>>, vector<1x1x1x256xf32>
    %43 = vector.shape_cast %42 : vector<1x1x1x256xf32> to vector<1x1x256xf32>
    %c0_86 = arith.constant 0 : index
    %c14 = arith.constant 14 : index
    %c0_87 = arith.constant 0 : index
    %44 = vector.load %arg5[%c0_86, %c14, %c0_87] : memref<1x36x256xf32, #tpu.memory_space<vmem>>, vector<1x1x256xf32>
    tpu.vector_store %arg5[%c0_86, %c14, %c0_87], %43 {strides = array<i32>} : memref<1x36x256xf32, #tpu.memory_space<vmem>>, vector<1x1x256xf32>,
    %c0_88 = arith.constant 0 : index
    %c1_89 = arith.constant 1 : index
    %c0_90 = arith.constant 0 : index
    %c17_91 = arith.constant 17 : index
    %45 = vector.load %arg1[%c0_88, %c1_89, %c0_90, %c17_91] : memref<1x4x1x384xf32, #tpu.memory_space<vmem>>, vector<1x1x1x256xf32>
    %46 = vector.shape_cast %45 : vector<1x1x1x256xf32> to vector<1x1x256xf32>
    %c0_92 = arith.constant 0 : index
    %c15 = arith.constant 15 : index
    %c0_93 = arith.constant 0 : index
    %47 = vector.load %arg5[%c0_92, %c15, %c0_93] : memref<1x36x256xf32, #tpu.memory_space<vmem>>, vector<1x1x256xf32>
    tpu.vector_store %arg5[%c0_92, %c15, %c0_93], %46 {strides = array<i32>} : memref<1x36x256xf32, #tpu.memory_space<vmem>>, vector<1x1x256xf32>,
    %c0_94 = arith.constant 0 : index
    %c0_95 = arith.constant 0 : index
    %c0_96 = arith.constant 0 : index
    %c18 = arith.constant 18 : index
    %48 = vector.load %arg1[%c0_94, %c0_95, %c0_96, %c18] : memref<1x4x1x384xf32, #tpu.memory_space<vmem>>, vector<1x1x1x256xf32>
    %49 = vector.shape_cast %48 : vector<1x1x1x256xf32> to vector<1x1x256xf32>
    %c0_97 = arith.constant 0 : index
    %c16_98 = arith.constant 16 : index
    %c0_99 = arith.constant 0 : index
    %50 = vector.load %arg5[%c0_97, %c16_98, %c0_99] : memref<1x36x256xf32, #tpu.memory_space<vmem>>, vector<1x1x256xf32>
    tpu.vector_store %arg5[%c0_97, %c16_98, %c0_99], %49 {strides = array<i32>} : memref<1x36x256xf32, #tpu.memory_space<vmem>>, vector<1x1x256xf32>,
    %c0_100 = arith.constant 0 : index
    %c1_101 = arith.constant 1 : index
    %c0_102 = arith.constant 0 : index
    %c18_103 = arith.constant 18 : index
    %51 = vector.load %arg1[%c0_100, %c1_101, %c0_102, %c18_103] : memref<1x4x1x384xf32, #tpu.memory_space<vmem>>, vector<1x1x1x256xf32>
    %52 = vector.shape_cast %51 : vector<1x1x1x256xf32> to vector<1x1x256xf32>
    %c0_104 = arith.constant 0 : index
    %c17_105 = arith.constant 17 : index
    %c0_106 = arith.constant 0 : index
    %53 = vector.load %arg5[%c0_104, %c17_105, %c0_106] : memref<1x36x256xf32, #tpu.memory_space<vmem>>, vector<1x1x256xf32>
    tpu.vector_store %arg5[%c0_104, %c17_105, %c0_106], %52 {strides = array<i32>} : memref<1x36x256xf32, #tpu.memory_space<vmem>>, vector<1x1x256xf32>,
    %c0_107 = arith.constant 0 : index
    %c2_108 = arith.constant 2 : index
    %c0_109 = arith.constant 0 : index
    %c16_110 = arith.constant 16 : index
    %54 = vector.load %arg1[%c0_107, %c2_108, %c0_109, %c16_110] : memref<1x4x1x384xf32, #tpu.memory_space<vmem>>, vector<1x1x1x256xf32>
    %55 = vector.shape_cast %54 : vector<1x1x1x256xf32> to vector<1x1x256xf32>
    %c0_111 = arith.constant 0 : index
    %c18_112 = arith.constant 18 : index
    %c0_113 = arith.constant 0 : index
    %56 = vector.load %arg5[%c0_111, %c18_112, %c0_113] : memref<1x36x256xf32, #tpu.memory_space<vmem>>, vector<1x1x256xf32>
    tpu.vector_store %arg5[%c0_111, %c18_112, %c0_113], %55 {strides = array<i32>} : memref<1x36x256xf32, #tpu.memory_space<vmem>>, vector<1x1x256xf32>,
    %c0_114 = arith.constant 0 : index
    %c3_115 = arith.constant 3 : index
    %c0_116 = arith.constant 0 : index
    %c16_117 = arith.constant 16 : index
    %57 = vector.load %arg1[%c0_114, %c3_115, %c0_116, %c16_117] : memref<1x4x1x384xf32, #tpu.memory_space<vmem>>, vector<1x1x1x256xf32>
    %58 = vector.shape_cast %57 : vector<1x1x1x256xf32> to vector<1x1x256xf32>
    %c0_118 = arith.constant 0 : index
    %c19 = arith.constant 19 : index
    %c0_119 = arith.constant 0 : index
    %59 = vector.load %arg5[%c0_118, %c19, %c0_119] : memref<1x36x256xf32, #tpu.memory_space<vmem>>, vector<1x1x256xf32>
    tpu.vector_store %arg5[%c0_118, %c19, %c0_119], %58 {strides = array<i32>} : memref<1x36x256xf32, #tpu.memory_space<vmem>>, vector<1x1x256xf32>,
    %c0_120 = arith.constant 0 : index
    %c2_121 = arith.constant 2 : index
    %c0_122 = arith.constant 0 : index
    %c17_123 = arith.constant 17 : index
    %60 = vector.load %arg1[%c0_120, %c2_121, %c0_122, %c17_123] : memref<1x4x1x384xf32, #tpu.memory_space<vmem>>, vector<1x1x1x256xf32>
    %61 = vector.shape_cast %60 : vector<1x1x1x256xf32> to vector<1x1x256xf32>
    %c0_124 = arith.constant 0 : index
    %c20 = arith.constant 20 : index
    %c0_125 = arith.constant 0 : index
    %62 = vector.load %arg5[%c0_124, %c20, %c0_125] : memref<1x36x256xf32, #tpu.memory_space<vmem>>, vector<1x1x256xf32>
    tpu.vector_store %arg5[%c0_124, %c20, %c0_125], %61 {strides = array<i32>} : memref<1x36x256xf32, #tpu.memory_space<vmem>>, vector<1x1x256xf32>,
    %c0_126 = arith.constant 0 : index
    %c3_127 = arith.constant 3 : index
    %c0_128 = arith.constant 0 : index
    %c17_129 = arith.constant 17 : index
    %63 = vector.load %arg1[%c0_126, %c3_127, %c0_128, %c17_129] : memref<1x4x1x384xf32, #tpu.memory_space<vmem>>, vector<1x1x1x256xf32>
    %64 = vector.shape_cast %63 : vector<1x1x1x256xf32> to vector<1x1x256xf32>
    %c0_130 = arith.constant 0 : index
    %c21 = arith.constant 21 : index
    %c0_131 = arith.constant 0 : index
    %65 = vector.load %arg5[%c0_130, %c21, %c0_131] : memref<1x36x256xf32, #tpu.memory_space<vmem>>, vector<1x1x256xf32>
    tpu.vector_store %arg5[%c0_130, %c21, %c0_131], %64 {strides = array<i32>} : memref<1x36x256xf32, #tpu.memory_space<vmem>>, vector<1x1x256xf32>,
    %c0_132 = arith.constant 0 : index
    %c2_133 = arith.constant 2 : index
    %c0_134 = arith.constant 0 : index
    %c18_135 = arith.constant 18 : index
    %66 = vector.load %arg1[%c0_132, %c2_133, %c0_134, %c18_135] : memref<1x4x1x384xf32, #tpu.memory_space<vmem>>, vector<1x1x1x256xf32>
    %67 = vector.shape_cast %66 : vector<1x1x1x256xf32> to vector<1x1x256xf32>
    %c0_136 = arith.constant 0 : index
    %c22 = arith.constant 22 : index
    %c0_137 = arith.constant 0 : index
    %68 = vector.load %arg5[%c0_136, %c22, %c0_137] : memref<1x36x256xf32, #tpu.memory_space<vmem>>, vector<1x1x256xf32>
    tpu.vector_store %arg5[%c0_136, %c22, %c0_137], %67 {strides = array<i32>} : memref<1x36x256xf32, #tpu.memory_space<vmem>>, vector<1x1x256xf32>,
    %c0_138 = arith.constant 0 : index
    %c3_139 = arith.constant 3 : index
    %c0_140 = arith.constant 0 : index
    %c18_141 = arith.constant 18 : index
    %69 = vector.load %arg1[%c0_138, %c3_139, %c0_140, %c18_141] : memref<1x4x1x384xf32, #tpu.memory_space<vmem>>, vector<1x1x1x256xf32>
    %70 = vector.shape_cast %69 : vector<1x1x1x256xf32> to vector<1x1x256xf32>
    %c0_142 = arith.constant 0 : index
    %c23 = arith.constant 23 : index
    %c0_143 = arith.constant 0 : index
    %71 = vector.load %arg5[%c0_142, %c23, %c0_143] : memref<1x36x256xf32, #tpu.memory_space<vmem>>, vector<1x1x256xf32>
    tpu.vector_store %arg5[%c0_142, %c23, %c0_143], %70 {strides = array<i32>} : memref<1x36x256xf32, #tpu.memory_space<vmem>>, vector<1x1x256xf32>,
    %c0_144 = arith.constant 0 : index
    %c0_145 = arith.constant 0 : index
    %c0_146 = arith.constant 0 : index
    %c32 = arith.constant 32 : index
    %72 = vector.load %arg1[%c0_144, %c0_145, %c0_146, %c32] : memref<1x4x1x384xf32, #tpu.memory_space<vmem>>, vector<1x1x1x256xf32>
    %73 = vector.shape_cast %72 : vector<1x1x1x256xf32> to vector<1x1x256xf32>
    %c0_147 = arith.constant 0 : index
    %c24 = arith.constant 24 : index
    %c0_148 = arith.constant 0 : index
    %74 = vector.load %arg5[%c0_147, %c24, %c0_148] : memref<1x36x256xf32, #tpu.memory_space<vmem>>, vector<1x1x256xf32>
    tpu.vector_store %arg5[%c0_147, %c24, %c0_148], %73 {strides = array<i32>} : memref<1x36x256xf32, #tpu.memory_space<vmem>>, vector<1x1x256xf32>,
    %c0_149 = arith.constant 0 : index
    %c1_150 = arith.constant 1 : index
    %c0_151 = arith.constant 0 : index
    %c32_152 = arith.constant 32 : index
    %75 = vector.load %arg1[%c0_149, %c1_150, %c0_151, %c32_152] : memref<1x4x1x384xf32, #tpu.memory_space<vmem>>, vector<1x1x1x256xf32>
    %76 = vector.shape_cast %75 : vector<1x1x1x256xf32> to vector<1x1x256xf32>
    %c0_153 = arith.constant 0 : index
    %c25 = arith.constant 25 : index
    %c0_154 = arith.constant 0 : index
    %77 = vector.load %arg5[%c0_153, %c25, %c0_154] : memref<1x36x256xf32, #tpu.memory_space<vmem>>, vector<1x1x256xf32>
    tpu.vector_store %arg5[%c0_153, %c25, %c0_154], %76 {strides = array<i32>} : memref<1x36x256xf32, #tpu.memory_space<vmem>>, vector<1x1x256xf32>,
    %c0_155 = arith.constant 0 : index
    %c0_156 = arith.constant 0 : index
    %c0_157 = arith.constant 0 : index
    %c33 = arith.constant 33 : index
    %78 = vector.load %arg1[%c0_155, %c0_156, %c0_157, %c33] : memref<1x4x1x384xf32, #tpu.memory_space<vmem>>, vector<1x1x1x256xf32>
    %79 = vector.shape_cast %78 : vector<1x1x1x256xf32> to vector<1x1x256xf32>
    %c0_158 = arith.constant 0 : index
    %c26 = arith.constant 26 : index
    %c0_159 = arith.constant 0 : index
    %80 = vector.load %arg5[%c0_158, %c26, %c0_159] : memref<1x36x256xf32, #tpu.memory_space<vmem>>, vector<1x1x256xf32>
    tpu.vector_store %arg5[%c0_158, %c26, %c0_159], %79 {strides = array<i32>} : memref<1x36x256xf32, #tpu.memory_space<vmem>>, vector<1x1x256xf32>,
    %c0_160 = arith.constant 0 : index
    %c1_161 = arith.constant 1 : index
    %c0_162 = arith.constant 0 : index
    %c33_163 = arith.constant 33 : index
    %81 = vector.load %arg1[%c0_160, %c1_161, %c0_162, %c33_163] : memref<1x4x1x384xf32, #tpu.memory_space<vmem>>, vector<1x1x1x256xf32>
    %82 = vector.shape_cast %81 : vector<1x1x1x256xf32> to vector<1x1x256xf32>
    %c0_164 = arith.constant 0 : index
    %c27 = arith.constant 27 : index
    %c0_165 = arith.constant 0 : index
    %83 = vector.load %arg5[%c0_164, %c27, %c0_165] : memref<1x36x256xf32, #tpu.memory_space<vmem>>, vector<1x1x256xf32>
    tpu.vector_store %arg5[%c0_164, %c27, %c0_165], %82 {strides = array<i32>} : memref<1x36x256xf32, #tpu.memory_space<vmem>>, vector<1x1x256xf32>,
    %c0_166 = arith.constant 0 : index
    %c0_167 = arith.constant 0 : index
    %c0_168 = arith.constant 0 : index
    %c34 = arith.constant 34 : index
    %84 = vector.load %arg1[%c0_166, %c0_167, %c0_168, %c34] : memref<1x4x1x384xf32, #tpu.memory_space<vmem>>, vector<1x1x1x256xf32>
    %85 = vector.shape_cast %84 : vector<1x1x1x256xf32> to vector<1x1x256xf32>
    %c0_169 = arith.constant 0 : index
    %c28 = arith.constant 28 : index
    %c0_170 = arith.constant 0 : index
    %86 = vector.load %arg5[%c0_169, %c28, %c0_170] : memref<1x36x256xf32, #tpu.memory_space<vmem>>, vector<1x1x256xf32>
    tpu.vector_store %arg5[%c0_169, %c28, %c0_170], %85 {strides = array<i32>} : memref<1x36x256xf32, #tpu.memory_space<vmem>>, vector<1x1x256xf32>,
    %c0_171 = arith.constant 0 : index
    %c1_172 = arith.constant 1 : index
    %c0_173 = arith.constant 0 : index
    %c34_174 = arith.constant 34 : index
    %87 = vector.load %arg1[%c0_171, %c1_172, %c0_173, %c34_174] : memref<1x4x1x384xf32, #tpu.memory_space<vmem>>, vector<1x1x1x256xf32>
    %88 = vector.shape_cast %87 : vector<1x1x1x256xf32> to vector<1x1x256xf32>
    %c0_175 = arith.constant 0 : index
    %c29 = arith.constant 29 : index
    %c0_176 = arith.constant 0 : index
    %89 = vector.load %arg5[%c0_175, %c29, %c0_176] : memref<1x36x256xf32, #tpu.memory_space<vmem>>, vector<1x1x256xf32>
    tpu.vector_store %arg5[%c0_175, %c29, %c0_176], %88 {strides = array<i32>} : memref<1x36x256xf32, #tpu.memory_space<vmem>>, vector<1x1x256xf32>,
    %c0_177 = arith.constant 0 : index
    %c2_178 = arith.constant 2 : index
    %c0_179 = arith.constant 0 : index
    %c32_180 = arith.constant 32 : index
    %90 = vector.load %arg1[%c0_177, %c2_178, %c0_179, %c32_180] : memref<1x4x1x384xf32, #tpu.memory_space<vmem>>, vector<1x1x1x256xf32>
    %91 = vector.shape_cast %90 : vector<1x1x1x256xf32> to vector<1x1x256xf32>
    %c0_181 = arith.constant 0 : index
    %c30 = arith.constant 30 : index
    %c0_182 = arith.constant 0 : index
    %92 = vector.load %arg5[%c0_181, %c30, %c0_182] : memref<1x36x256xf32, #tpu.memory_space<vmem>>, vector<1x1x256xf32>
    tpu.vector_store %arg5[%c0_181, %c30, %c0_182], %91 {strides = array<i32>} : memref<1x36x256xf32, #tpu.memory_space<vmem>>, vector<1x1x256xf32>,
    %c0_183 = arith.constant 0 : index
    %c3_184 = arith.constant 3 : index
    %c0_185 = arith.constant 0 : index
    %c32_186 = arith.constant 32 : index
    %93 = vector.load %arg1[%c0_183, %c3_184, %c0_185, %c32_186] : memref<1x4x1x384xf32, #tpu.memory_space<vmem>>, vector<1x1x1x256xf32>
    %94 = vector.shape_cast %93 : vector<1x1x1x256xf32> to vector<1x1x256xf32>
    %c0_187 = arith.constant 0 : index
    %c31 = arith.constant 31 : index
    %c0_188 = arith.constant 0 : index
    %95 = vector.load %arg5[%c0_187, %c31, %c0_188] : memref<1x36x256xf32, #tpu.memory_space<vmem>>, vector<1x1x256xf32>
    tpu.vector_store %arg5[%c0_187, %c31, %c0_188], %94 {strides = array<i32>} : memref<1x36x256xf32, #tpu.memory_space<vmem>>, vector<1x1x256xf32>,
    %c0_189 = arith.constant 0 : index
    %c2_190 = arith.constant 2 : index
    %c0_191 = arith.constant 0 : index
    %c33_192 = arith.constant 33 : index
    %96 = vector.load %arg1[%c0_189, %c2_190, %c0_191, %c33_192] : memref<1x4x1x384xf32, #tpu.memory_space<vmem>>, vector<1x1x1x256xf32>
    %97 = vector.shape_cast %96 : vector<1x1x1x256xf32> to vector<1x1x256xf32>
    %c0_193 = arith.constant 0 : index
    %c32_194 = arith.constant 32 : index
    %c0_195 = arith.constant 0 : index
    %98 = vector.load %arg5[%c0_193, %c32_194, %c0_195] : memref<1x36x256xf32, #tpu.memory_space<vmem>>, vector<1x1x256xf32>
    tpu.vector_store %arg5[%c0_193, %c32_194, %c0_195], %97 {strides = array<i32>} : memref<1x36x256xf32, #tpu.memory_space<vmem>>, vector<1x1x256xf32>,
    %c0_196 = arith.constant 0 : index
    %c3_197 = arith.constant 3 : index
    %c0_198 = arith.constant 0 : index
    %c33_199 = arith.constant 33 : index
    %99 = vector.load %arg1[%c0_196, %c3_197, %c0_198, %c33_199] : memref<1x4x1x384xf32, #tpu.memory_space<vmem>>, vector<1x1x1x256xf32>
    %100 = vector.shape_cast %99 : vector<1x1x1x256xf32> to vector<1x1x256xf32>
    %c0_200 = arith.constant 0 : index
    %c33_201 = arith.constant 33 : index
    %c0_202 = arith.constant 0 : index
    %101 = vector.load %arg5[%c0_200, %c33_201, %c0_202] : memref<1x36x256xf32, #tpu.memory_space<vmem>>, vector<1x1x256xf32>
    tpu.vector_store %arg5[%c0_200, %c33_201, %c0_202], %100 {strides = array<i32>} : memref<1x36x256xf32, #tpu.memory_space<vmem>>, vector<1x1x256xf32>,
    %c0_203 = arith.constant 0 : index
    %c2_204 = arith.constant 2 : index
    %c0_205 = arith.constant 0 : index
    %c34_206 = arith.constant 34 : index
    %102 = vector.load %arg1[%c0_203, %c2_204, %c0_205, %c34_206] : memref<1x4x1x384xf32, #tpu.memory_space<vmem>>, vector<1x1x1x256xf32>
    %103 = vector.shape_cast %102 : vector<1x1x1x256xf32> to vector<1x1x256xf32>
    %c0_207 = arith.constant 0 : index
    %c34_208 = arith.constant 34 : index
    %c0_209 = arith.constant 0 : index
    %104 = vector.load %arg5[%c0_207, %c34_208, %c0_209] : memref<1x36x256xf32, #tpu.memory_space<vmem>>, vector<1x1x256xf32>
    tpu.vector_store %arg5[%c0_207, %c34_208, %c0_209], %103 {strides = array<i32>} : memref<1x36x256xf32, #tpu.memory_space<vmem>>, vector<1x1x256xf32>,
    %c0_210 = arith.constant 0 : index
    %c3_211 = arith.constant 3 : index
    %c0_212 = arith.constant 0 : index
    %c34_213 = arith.constant 34 : index
    %105 = vector.load %arg1[%c0_210, %c3_211, %c0_212, %c34_213] : memref<1x4x1x384xf32, #tpu.memory_space<vmem>>, vector<1x1x1x256xf32>
    %106 = vector.shape_cast %105 : vector<1x1x1x256xf32> to vector<1x1x256xf32>
    %c0_214 = arith.constant 0 : index
    %c35 = arith.constant 35 : index
    %c0_215 = arith.constant 0 : index
    %107 = vector.load %arg5[%c0_214, %c35, %c0_215] : memref<1x36x256xf32, #tpu.memory_space<vmem>>, vector<1x1x256xf32>
    tpu.vector_store %arg5[%c0_214, %c35, %c0_215], %106 {strides = array<i32>} : memref<1x36x256xf32, #tpu.memory_space<vmem>>, vector<1x1x256xf32>,
    %c0_216 = arith.constant 0 : index
    %c0_217 = arith.constant 0 : index
    %108 = vector.load %arg2[%c0_216, %c0_217] : memref<64x36xf32, #tpu.memory_space<vmem>>, vector<64x36xf32>
    %c0_218 = arith.constant 0 : index
    %c0_219 = arith.constant 0 : index
    %109 = vector.load %arg3[%c0_218, %c0_219] : memref<10x1xf32, #tpu.memory_space<vmem>>, vector<10x1xf32>
    %c0_220 = arith.constant 0 : index
    %c0_221 = arith.constant 0 : index
    %c0_222 = arith.constant 0 : index
    %110 = vector.load %arg5[%c0_220, %c0_221, %c0_222] : memref<1x36x256xf32, #tpu.memory_space<vmem>>, vector<1x36x256xf32>
    %111 = vector.shape_cast %110 : vector<1x36x256xf32> to vector<36x256xf32>
    %cst = arith.constant dense<0.000000e+00> : vector<64x256xf32>
    %112 = tpu.matmul %108, %111, %cst {dimension_numbers = #tpu.dot_dimension_numbers<[1], [0], [0], [1], [0, 0, 1, 1], [], []>} : vector<64x36xf32>, vector<36x256xf32>, vector<64x256xf32> -> vector<64x256xf32>
    %113 = vector.extract_strided_slice %112 {offsets = [0, 0], sizes = [10, 256], strides = [1, 1]} : vector<64x256xf32> to vector<10x256xf32>
    %114 = vector.extract_strided_slice %112 {offsets = [16, 0], sizes = [10, 256], strides = [1, 1]} : vector<64x256xf32> to vector<10x256xf32>
    %115 = arith.maximumf %113, %114 : vector<10x256xf32>
    %116 = vector.extract_strided_slice %112 {offsets = [32, 0], sizes = [10, 256], strides = [1, 1]} : vector<64x256xf32> to vector<10x256xf32>
    %117 = arith.maximumf %115, %116 : vector<10x256xf32>
    %118 = vector.extract_strided_slice %112 {offsets = [48, 0], sizes = [10, 256], strides = [1, 1]} : vector<64x256xf32> to vector<10x256xf32>
    %119 = arith.maximumf %117, %118 : vector<10x256xf32>
    %120 = vector.broadcast %109 : vector<10x1xf32> to vector<10x256xf32>
    %121 = arith.addf %119, %120 : vector<10x256xf32>
    %cst_223 = arith.constant 0.000000e+00 : f32
    %122 = vector.broadcast %cst_223 : f32 to vector<10x256xf32>
    %123 = arith.maximumf %121, %122 : vector<10x256xf32>
    %c0_224 = arith.constant 0 : index
    %c0_225 = arith.constant 0 : index
    %c0_226 = arith.constant 0 : index
    %124 = vector.load %arg4[%c0_224, %c0_225, %c0_226] : memref<1x10x256xf32, #tpu.memory_space<vmem>>, vector<1x10x256xf32>
    %125 = vector.shape_cast %124 : vector<1x10x256xf32> to vector<10x256xf32>
    %126 = vector.shape_cast %123 : vector<10x256xf32> to vector<1x10x256xf32>
    tpu.vector_store %arg4[%c0_224, %c0_225, %c0_226], %126 {strides = array<i32>} : memref<1x10x256xf32, #tpu.memory_space<vmem>>, vector<1x10x256xf32>,
    return
  }
  func.func @transform_0(%arg0: i32) -> (i32, i32, i32, i32) {
    %c0_i32 = arith.constant 0 : i32
    %c0_i32_0 = arith.constant 0 : i32
    %c0_i32_1 = arith.constant 0 : i32
    %c0_i32_2 = arith.constant 0 : i32
    return %arg0, %c0_i32, %c0_i32_0, %c0_i32_1 : i32, i32, i32, i32
  }
  func.func @transform_1(%arg0: i32) -> (i32, i32) {
    %c0_i32 = arith.constant 0 : i32
    %c0_i32_0 = arith.constant 0 : i32
    %c0_i32_1 = arith.constant 0 : i32
    return %c0_i32, %c0_i32_0 : i32, i32
  }
  func.func @transform_2(%arg0: i32) -> (i32, i32) {
    %c0_i32 = arith.constant 0 : i32
    %c0_i32_0 = arith.constant 0 : i32
    %c0_i32_1 = arith.constant 0 : i32
    return %c0_i32, %c0_i32_0 : i32, i32
  }
  func.func @transform_3(%arg0: i32) -> (i32, i32, i32) {
    %c0_i32 = arith.constant 0 : i32
    %c0_i32_0 = arith.constant 0 : i32
    %c0_i32_1 = arith.constant 0 : i32
    return %arg0, %c0_i32, %c0_i32_0 : i32, i32, i32
  }
}

module attributes {stable_mosaic.version = 11 : i64} {
  func.func @_conv_pool_relu_kernel(%arg0: i32, %arg1: memref<1x4x10x256xf32, #tpu.memory_space<vmem>>, %arg2: memref<96x360xf32, #tpu.memory_space<vmem>>, %arg3: memref<20x1xf32, #tpu.memory_space<vmem>>, %arg4: memref<1x20x128xf32, #tpu.memory_space<vmem>>, %arg5: memref<1x360x128xf32, #tpu.memory_space<vmem>>) attributes {dimension_semantics = [#tpu.dimension_semantics<parallel>], iteration_bounds = array<i64: 2>, scalar_prefetch = 0 : i64, scratch_operands = 1 : i64, tpu.core_type = #tpu.core_type<tc>, window_params = [{transform_indices = @transform_0, window_bounds = array<i64: 1, 4, 10, 256>}, {pipeline_mode = #tpu.pipeline_mode<synchronous>, transform_indices = @transform_1, window_bounds = array<i64: 96, 360>}, {pipeline_mode = #tpu.pipeline_mode<synchronous>, transform_indices = @transform_2, window_bounds = array<i64: 20, 1>}, {transform_indices = @transform_3, window_bounds = array<i64: 1, 20, 128>}]} {
    %c0 = arith.constant 0 : index
    %c0_0 = arith.constant 0 : index
    %c0_1 = arith.constant 0 : index
    %c0_2 = arith.constant 0 : index
    %0 = vector.load %arg1[%c0, %c0_0, %c0_1, %c0_2] : memref<1x4x10x256xf32, #tpu.memory_space<vmem>>, vector<1x1x10x128xf32>
    %1 = vector.shape_cast %0 : vector<1x1x10x128xf32> to vector<1x10x128xf32>
    %c0_3 = arith.constant 0 : index
    %c0_4 = arith.constant 0 : index
    %c0_5 = arith.constant 0 : index
    %2 = vector.load %arg5[%c0_3, %c0_4, %c0_5] : memref<1x360x128xf32, #tpu.memory_space<vmem>>, vector<1x10x128xf32>
    tpu.vector_store %arg5[%c0_3, %c0_4, %c0_5], %1 {strides = array<i32>} : memref<1x360x128xf32, #tpu.memory_space<vmem>>, vector<1x10x128xf32>,
    %c0_6 = arith.constant 0 : index
    %c1 = arith.constant 1 : index
    %c0_7 = arith.constant 0 : index
    %c0_8 = arith.constant 0 : index
    %3 = vector.load %arg1[%c0_6, %c1, %c0_7, %c0_8] : memref<1x4x10x256xf32, #tpu.memory_space<vmem>>, vector<1x1x10x128xf32>
    %4 = vector.shape_cast %3 : vector<1x1x10x128xf32> to vector<1x10x128xf32>
    %c0_9 = arith.constant 0 : index
    %c10 = arith.constant 10 : index
    %c0_10 = arith.constant 0 : index
    %5 = vector.load %arg5[%c0_9, %c10, %c0_10] : memref<1x360x128xf32, #tpu.memory_space<vmem>>, vector<1x10x128xf32>
    tpu.vector_store %arg5[%c0_9, %c10, %c0_10], %4 {strides = array<i32>} : memref<1x360x128xf32, #tpu.memory_space<vmem>>, vector<1x10x128xf32>,
    %c0_11 = arith.constant 0 : index
    %c0_12 = arith.constant 0 : index
    %c0_13 = arith.constant 0 : index
    %c1_14 = arith.constant 1 : index
    %6 = vector.load %arg1[%c0_11, %c0_12, %c0_13, %c1_14] : memref<1x4x10x256xf32, #tpu.memory_space<vmem>>, vector<1x1x10x128xf32>
    %7 = vector.shape_cast %6 : vector<1x1x10x128xf32> to vector<1x10x128xf32>
    %c0_15 = arith.constant 0 : index
    %c20 = arith.constant 20 : index
    %c0_16 = arith.constant 0 : index
    %8 = vector.load %arg5[%c0_15, %c20, %c0_16] : memref<1x360x128xf32, #tpu.memory_space<vmem>>, vector<1x10x128xf32>
    tpu.vector_store %arg5[%c0_15, %c20, %c0_16], %7 {strides = array<i32>} : memref<1x360x128xf32, #tpu.memory_space<vmem>>, vector<1x10x128xf32>,
    %c0_17 = arith.constant 0 : index
    %c1_18 = arith.constant 1 : index
    %c0_19 = arith.constant 0 : index
    %c1_20 = arith.constant 1 : index
    %9 = vector.load %arg1[%c0_17, %c1_18, %c0_19, %c1_20] : memref<1x4x10x256xf32, #tpu.memory_space<vmem>>, vector<1x1x10x128xf32>
    %10 = vector.shape_cast %9 : vector<1x1x10x128xf32> to vector<1x10x128xf32>
    %c0_21 = arith.constant 0 : index
    %c30 = arith.constant 30 : index
    %c0_22 = arith.constant 0 : index
    %11 = vector.load %arg5[%c0_21, %c30, %c0_22] : memref<1x360x128xf32, #tpu.memory_space<vmem>>, vector<1x10x128xf32>
    tpu.vector_store %arg5[%c0_21, %c30, %c0_22], %10 {strides = array<i32>} : memref<1x360x128xf32, #tpu.memory_space<vmem>>, vector<1x10x128xf32>,
    %c0_23 = arith.constant 0 : index
    %c0_24 = arith.constant 0 : index
    %c0_25 = arith.constant 0 : index
    %c2 = arith.constant 2 : index
    %12 = vector.load %arg1[%c0_23, %c0_24, %c0_25, %c2] : memref<1x4x10x256xf32, #tpu.memory_space<vmem>>, vector<1x1x10x128xf32>
    %13 = vector.shape_cast %12 : vector<1x1x10x128xf32> to vector<1x10x128xf32>
    %c0_26 = arith.constant 0 : index
    %c40 = arith.constant 40 : index
    %c0_27 = arith.constant 0 : index
    %14 = vector.load %arg5[%c0_26, %c40, %c0_27] : memref<1x360x128xf32, #tpu.memory_space<vmem>>, vector<1x10x128xf32>
    tpu.vector_store %arg5[%c0_26, %c40, %c0_27], %13 {strides = array<i32>} : memref<1x360x128xf32, #tpu.memory_space<vmem>>, vector<1x10x128xf32>,
    %c0_28 = arith.constant 0 : index
    %c1_29 = arith.constant 1 : index
    %c0_30 = arith.constant 0 : index
    %c2_31 = arith.constant 2 : index
    %15 = vector.load %arg1[%c0_28, %c1_29, %c0_30, %c2_31] : memref<1x4x10x256xf32, #tpu.memory_space<vmem>>, vector<1x1x10x128xf32>
    %16 = vector.shape_cast %15 : vector<1x1x10x128xf32> to vector<1x10x128xf32>
    %c0_32 = arith.constant 0 : index
    %c50 = arith.constant 50 : index
    %c0_33 = arith.constant 0 : index
    %17 = vector.load %arg5[%c0_32, %c50, %c0_33] : memref<1x360x128xf32, #tpu.memory_space<vmem>>, vector<1x10x128xf32>
    tpu.vector_store %arg5[%c0_32, %c50, %c0_33], %16 {strides = array<i32>} : memref<1x360x128xf32, #tpu.memory_space<vmem>>, vector<1x10x128xf32>,
    %c0_34 = arith.constant 0 : index
    %c2_35 = arith.constant 2 : index
    %c0_36 = arith.constant 0 : index
    %c0_37 = arith.constant 0 : index
    %18 = vector.load %arg1[%c0_34, %c2_35, %c0_36, %c0_37] : memref<1x4x10x256xf32, #tpu.memory_space<vmem>>, vector<1x1x10x128xf32>
    %19 = vector.shape_cast %18 : vector<1x1x10x128xf32> to vector<1x10x128xf32>
    %c0_38 = arith.constant 0 : index
    %c60 = arith.constant 60 : index
    %c0_39 = arith.constant 0 : index
    %20 = vector.load %arg5[%c0_38, %c60, %c0_39] : memref<1x360x128xf32, #tpu.memory_space<vmem>>, vector<1x10x128xf32>
    tpu.vector_store %arg5[%c0_38, %c60, %c0_39], %19 {strides = array<i32>} : memref<1x360x128xf32, #tpu.memory_space<vmem>>, vector<1x10x128xf32>,
    %c0_40 = arith.constant 0 : index
    %c3 = arith.constant 3 : index
    %c0_41 = arith.constant 0 : index
    %c0_42 = arith.constant 0 : index
    %21 = vector.load %arg1[%c0_40, %c3, %c0_41, %c0_42] : memref<1x4x10x256xf32, #tpu.memory_space<vmem>>, vector<1x1x10x128xf32>
    %22 = vector.shape_cast %21 : vector<1x1x10x128xf32> to vector<1x10x128xf32>
    %c0_43 = arith.constant 0 : index
    %c70 = arith.constant 70 : index
    %c0_44 = arith.constant 0 : index
    %23 = vector.load %arg5[%c0_43, %c70, %c0_44] : memref<1x360x128xf32, #tpu.memory_space<vmem>>, vector<1x10x128xf32>
    tpu.vector_store %arg5[%c0_43, %c70, %c0_44], %22 {strides = array<i32>} : memref<1x360x128xf32, #tpu.memory_space<vmem>>, vector<1x10x128xf32>,
    %c0_45 = arith.constant 0 : index
    %c2_46 = arith.constant 2 : index
    %c0_47 = arith.constant 0 : index
    %c1_48 = arith.constant 1 : index
    %24 = vector.load %arg1[%c0_45, %c2_46, %c0_47, %c1_48] : memref<1x4x10x256xf32, #tpu.memory_space<vmem>>, vector<1x1x10x128xf32>
    %25 = vector.shape_cast %24 : vector<1x1x10x128xf32> to vector<1x10x128xf32>
    %c0_49 = arith.constant 0 : index
    %c80 = arith.constant 80 : index
    %c0_50 = arith.constant 0 : index
    %26 = vector.load %arg5[%c0_49, %c80, %c0_50] : memref<1x360x128xf32, #tpu.memory_space<vmem>>, vector<1x10x128xf32>
    tpu.vector_store %arg5[%c0_49, %c80, %c0_50], %25 {strides = array<i32>} : memref<1x360x128xf32, #tpu.memory_space<vmem>>, vector<1x10x128xf32>,
    %c0_51 = arith.constant 0 : index
    %c3_52 = arith.constant 3 : index
    %c0_53 = arith.constant 0 : index
    %c1_54 = arith.constant 1 : index
    %27 = vector.load %arg1[%c0_51, %c3_52, %c0_53, %c1_54] : memref<1x4x10x256xf32, #tpu.memory_space<vmem>>, vector<1x1x10x128xf32>
    %28 = vector.shape_cast %27 : vector<1x1x10x128xf32> to vector<1x10x128xf32>
    %c0_55 = arith.constant 0 : index
    %c90 = arith.constant 90 : index
    %c0_56 = arith.constant 0 : index
    %29 = vector.load %arg5[%c0_55, %c90, %c0_56] : memref<1x360x128xf32, #tpu.memory_space<vmem>>, vector<1x10x128xf32>
    tpu.vector_store %arg5[%c0_55, %c90, %c0_56], %28 {strides = array<i32>} : memref<1x360x128xf32, #tpu.memory_space<vmem>>, vector<1x10x128xf32>,
    %c0_57 = arith.constant 0 : index
    %c2_58 = arith.constant 2 : index
    %c0_59 = arith.constant 0 : index
    %c2_60 = arith.constant 2 : index
    %30 = vector.load %arg1[%c0_57, %c2_58, %c0_59, %c2_60] : memref<1x4x10x256xf32, #tpu.memory_space<vmem>>, vector<1x1x10x128xf32>
    %31 = vector.shape_cast %30 : vector<1x1x10x128xf32> to vector<1x10x128xf32>
    %c0_61 = arith.constant 0 : index
    %c100 = arith.constant 100 : index
    %c0_62 = arith.constant 0 : index
    %32 = vector.load %arg5[%c0_61, %c100, %c0_62] : memref<1x360x128xf32, #tpu.memory_space<vmem>>, vector<1x10x128xf32>
    tpu.vector_store %arg5[%c0_61, %c100, %c0_62], %31 {strides = array<i32>} : memref<1x360x128xf32, #tpu.memory_space<vmem>>, vector<1x10x128xf32>,
    %c0_63 = arith.constant 0 : index
    %c3_64 = arith.constant 3 : index
    %c0_65 = arith.constant 0 : index
    %c2_66 = arith.constant 2 : index
    %33 = vector.load %arg1[%c0_63, %c3_64, %c0_65, %c2_66] : memref<1x4x10x256xf32, #tpu.memory_space<vmem>>, vector<1x1x10x128xf32>
    %34 = vector.shape_cast %33 : vector<1x1x10x128xf32> to vector<1x10x128xf32>
    %c0_67 = arith.constant 0 : index
    %c110 = arith.constant 110 : index
    %c0_68 = arith.constant 0 : index
    %35 = vector.load %arg5[%c0_67, %c110, %c0_68] : memref<1x360x128xf32, #tpu.memory_space<vmem>>, vector<1x10x128xf32>
    tpu.vector_store %arg5[%c0_67, %c110, %c0_68], %34 {strides = array<i32>} : memref<1x360x128xf32, #tpu.memory_space<vmem>>, vector<1x10x128xf32>,
    %c0_69 = arith.constant 0 : index
    %c0_70 = arith.constant 0 : index
    %c0_71 = arith.constant 0 : index
    %c9 = arith.constant 9 : index
    %36 = vector.load %arg1[%c0_69, %c0_70, %c0_71, %c9] : memref<1x4x10x256xf32, #tpu.memory_space<vmem>>, vector<1x1x10x128xf32>
    %37 = vector.shape_cast %36 : vector<1x1x10x128xf32> to vector<1x10x128xf32>
    %c0_72 = arith.constant 0 : index
    %c120 = arith.constant 120 : index
    %c0_73 = arith.constant 0 : index
    %38 = vector.load %arg5[%c0_72, %c120, %c0_73] : memref<1x360x128xf32, #tpu.memory_space<vmem>>, vector<1x10x128xf32>
    tpu.vector_store %arg5[%c0_72, %c120, %c0_73], %37 {strides = array<i32>} : memref<1x360x128xf32, #tpu.memory_space<vmem>>, vector<1x10x128xf32>,
    %c0_74 = arith.constant 0 : index
    %c1_75 = arith.constant 1 : index
    %c0_76 = arith.constant 0 : index
    %c9_77 = arith.constant 9 : index
    %39 = vector.load %arg1[%c0_74, %c1_75, %c0_76, %c9_77] : memref<1x4x10x256xf32, #tpu.memory_space<vmem>>, vector<1x1x10x128xf32>
    %40 = vector.shape_cast %39 : vector<1x1x10x128xf32> to vector<1x10x128xf32>
    %c0_78 = arith.constant 0 : index
    %c130 = arith.constant 130 : index
    %c0_79 = arith.constant 0 : index
    %41 = vector.load %arg5[%c0_78, %c130, %c0_79] : memref<1x360x128xf32, #tpu.memory_space<vmem>>, vector<1x10x128xf32>
    tpu.vector_store %arg5[%c0_78, %c130, %c0_79], %40 {strides = array<i32>} : memref<1x360x128xf32, #tpu.memory_space<vmem>>, vector<1x10x128xf32>,
    %c0_80 = arith.constant 0 : index
    %c0_81 = arith.constant 0 : index
    %c0_82 = arith.constant 0 : index
    %c10_83 = arith.constant 10 : index
    %42 = vector.load %arg1[%c0_80, %c0_81, %c0_82, %c10_83] : memref<1x4x10x256xf32, #tpu.memory_space<vmem>>, vector<1x1x10x128xf32>
    %43 = vector.shape_cast %42 : vector<1x1x10x128xf32> to vector<1x10x128xf32>
    %c0_84 = arith.constant 0 : index
    %c140 = arith.constant 140 : index
    %c0_85 = arith.constant 0 : index
    %44 = vector.load %arg5[%c0_84, %c140, %c0_85] : memref<1x360x128xf32, #tpu.memory_space<vmem>>, vector<1x10x128xf32>
    tpu.vector_store %arg5[%c0_84, %c140, %c0_85], %43 {strides = array<i32>} : memref<1x360x128xf32, #tpu.memory_space<vmem>>, vector<1x10x128xf32>,
    %c0_86 = arith.constant 0 : index
    %c1_87 = arith.constant 1 : index
    %c0_88 = arith.constant 0 : index
    %c10_89 = arith.constant 10 : index
    %45 = vector.load %arg1[%c0_86, %c1_87, %c0_88, %c10_89] : memref<1x4x10x256xf32, #tpu.memory_space<vmem>>, vector<1x1x10x128xf32>
    %46 = vector.shape_cast %45 : vector<1x1x10x128xf32> to vector<1x10x128xf32>
    %c0_90 = arith.constant 0 : index
    %c150 = arith.constant 150 : index
    %c0_91 = arith.constant 0 : index
    %47 = vector.load %arg5[%c0_90, %c150, %c0_91] : memref<1x360x128xf32, #tpu.memory_space<vmem>>, vector<1x10x128xf32>
    tpu.vector_store %arg5[%c0_90, %c150, %c0_91], %46 {strides = array<i32>} : memref<1x360x128xf32, #tpu.memory_space<vmem>>, vector<1x10x128xf32>,
    %c0_92 = arith.constant 0 : index
    %c0_93 = arith.constant 0 : index
    %c0_94 = arith.constant 0 : index
    %c11 = arith.constant 11 : index
    %48 = vector.load %arg1[%c0_92, %c0_93, %c0_94, %c11] : memref<1x4x10x256xf32, #tpu.memory_space<vmem>>, vector<1x1x10x128xf32>
    %49 = vector.shape_cast %48 : vector<1x1x10x128xf32> to vector<1x10x128xf32>
    %c0_95 = arith.constant 0 : index
    %c160 = arith.constant 160 : index
    %c0_96 = arith.constant 0 : index
    %50 = vector.load %arg5[%c0_95, %c160, %c0_96] : memref<1x360x128xf32, #tpu.memory_space<vmem>>, vector<1x10x128xf32>
    tpu.vector_store %arg5[%c0_95, %c160, %c0_96], %49 {strides = array<i32>} : memref<1x360x128xf32, #tpu.memory_space<vmem>>, vector<1x10x128xf32>,
    %c0_97 = arith.constant 0 : index
    %c1_98 = arith.constant 1 : index
    %c0_99 = arith.constant 0 : index
    %c11_100 = arith.constant 11 : index
    %51 = vector.load %arg1[%c0_97, %c1_98, %c0_99, %c11_100] : memref<1x4x10x256xf32, #tpu.memory_space<vmem>>, vector<1x1x10x128xf32>
    %52 = vector.shape_cast %51 : vector<1x1x10x128xf32> to vector<1x10x128xf32>
    %c0_101 = arith.constant 0 : index
    %c170 = arith.constant 170 : index
    %c0_102 = arith.constant 0 : index
    %53 = vector.load %arg5[%c0_101, %c170, %c0_102] : memref<1x360x128xf32, #tpu.memory_space<vmem>>, vector<1x10x128xf32>
    tpu.vector_store %arg5[%c0_101, %c170, %c0_102], %52 {strides = array<i32>} : memref<1x360x128xf32, #tpu.memory_space<vmem>>, vector<1x10x128xf32>,
    %c0_103 = arith.constant 0 : index
    %c2_104 = arith.constant 2 : index
    %c0_105 = arith.constant 0 : index
    %c9_106 = arith.constant 9 : index
    %54 = vector.load %arg1[%c0_103, %c2_104, %c0_105, %c9_106] : memref<1x4x10x256xf32, #tpu.memory_space<vmem>>, vector<1x1x10x128xf32>
    %55 = vector.shape_cast %54 : vector<1x1x10x128xf32> to vector<1x10x128xf32>
    %c0_107 = arith.constant 0 : index
    %c180 = arith.constant 180 : index
    %c0_108 = arith.constant 0 : index
    %56 = vector.load %arg5[%c0_107, %c180, %c0_108] : memref<1x360x128xf32, #tpu.memory_space<vmem>>, vector<1x10x128xf32>
    tpu.vector_store %arg5[%c0_107, %c180, %c0_108], %55 {strides = array<i32>} : memref<1x360x128xf32, #tpu.memory_space<vmem>>, vector<1x10x128xf32>,
    %c0_109 = arith.constant 0 : index
    %c3_110 = arith.constant 3 : index
    %c0_111 = arith.constant 0 : index
    %c9_112 = arith.constant 9 : index
    %57 = vector.load %arg1[%c0_109, %c3_110, %c0_111, %c9_112] : memref<1x4x10x256xf32, #tpu.memory_space<vmem>>, vector<1x1x10x128xf32>
    %58 = vector.shape_cast %57 : vector<1x1x10x128xf32> to vector<1x10x128xf32>
    %c0_113 = arith.constant 0 : index
    %c190 = arith.constant 190 : index
    %c0_114 = arith.constant 0 : index
    %59 = vector.load %arg5[%c0_113, %c190, %c0_114] : memref<1x360x128xf32, #tpu.memory_space<vmem>>, vector<1x10x128xf32>
    tpu.vector_store %arg5[%c0_113, %c190, %c0_114], %58 {strides = array<i32>} : memref<1x360x128xf32, #tpu.memory_space<vmem>>, vector<1x10x128xf32>,
    %c0_115 = arith.constant 0 : index
    %c2_116 = arith.constant 2 : index
    %c0_117 = arith.constant 0 : index
    %c10_118 = arith.constant 10 : index
    %60 = vector.load %arg1[%c0_115, %c2_116, %c0_117, %c10_118] : memref<1x4x10x256xf32, #tpu.memory_space<vmem>>, vector<1x1x10x128xf32>
    %61 = vector.shape_cast %60 : vector<1x1x10x128xf32> to vector<1x10x128xf32>
    %c0_119 = arith.constant 0 : index
    %c200 = arith.constant 200 : index
    %c0_120 = arith.constant 0 : index
    %62 = vector.load %arg5[%c0_119, %c200, %c0_120] : memref<1x360x128xf32, #tpu.memory_space<vmem>>, vector<1x10x128xf32>
    tpu.vector_store %arg5[%c0_119, %c200, %c0_120], %61 {strides = array<i32>} : memref<1x360x128xf32, #tpu.memory_space<vmem>>, vector<1x10x128xf32>,
    %c0_121 = arith.constant 0 : index
    %c3_122 = arith.constant 3 : index
    %c0_123 = arith.constant 0 : index
    %c10_124 = arith.constant 10 : index
    %63 = vector.load %arg1[%c0_121, %c3_122, %c0_123, %c10_124] : memref<1x4x10x256xf32, #tpu.memory_space<vmem>>, vector<1x1x10x128xf32>
    %64 = vector.shape_cast %63 : vector<1x1x10x128xf32> to vector<1x10x128xf32>
    %c0_125 = arith.constant 0 : index
    %c210 = arith.constant 210 : index
    %c0_126 = arith.constant 0 : index
    %65 = vector.load %arg5[%c0_125, %c210, %c0_126] : memref<1x360x128xf32, #tpu.memory_space<vmem>>, vector<1x10x128xf32>
    tpu.vector_store %arg5[%c0_125, %c210, %c0_126], %64 {strides = array<i32>} : memref<1x360x128xf32, #tpu.memory_space<vmem>>, vector<1x10x128xf32>,
    %c0_127 = arith.constant 0 : index
    %c2_128 = arith.constant 2 : index
    %c0_129 = arith.constant 0 : index
    %c11_130 = arith.constant 11 : index
    %66 = vector.load %arg1[%c0_127, %c2_128, %c0_129, %c11_130] : memref<1x4x10x256xf32, #tpu.memory_space<vmem>>, vector<1x1x10x128xf32>
    %67 = vector.shape_cast %66 : vector<1x1x10x128xf32> to vector<1x10x128xf32>
    %c0_131 = arith.constant 0 : index
    %c220 = arith.constant 220 : index
    %c0_132 = arith.constant 0 : index
    %68 = vector.load %arg5[%c0_131, %c220, %c0_132] : memref<1x360x128xf32, #tpu.memory_space<vmem>>, vector<1x10x128xf32>
    tpu.vector_store %arg5[%c0_131, %c220, %c0_132], %67 {strides = array<i32>} : memref<1x360x128xf32, #tpu.memory_space<vmem>>, vector<1x10x128xf32>,
    %c0_133 = arith.constant 0 : index
    %c3_134 = arith.constant 3 : index
    %c0_135 = arith.constant 0 : index
    %c11_136 = arith.constant 11 : index
    %69 = vector.load %arg1[%c0_133, %c3_134, %c0_135, %c11_136] : memref<1x4x10x256xf32, #tpu.memory_space<vmem>>, vector<1x1x10x128xf32>
    %70 = vector.shape_cast %69 : vector<1x1x10x128xf32> to vector<1x10x128xf32>
    %c0_137 = arith.constant 0 : index
    %c230 = arith.constant 230 : index
    %c0_138 = arith.constant 0 : index
    %71 = vector.load %arg5[%c0_137, %c230, %c0_138] : memref<1x360x128xf32, #tpu.memory_space<vmem>>, vector<1x10x128xf32>
    tpu.vector_store %arg5[%c0_137, %c230, %c0_138], %70 {strides = array<i32>} : memref<1x360x128xf32, #tpu.memory_space<vmem>>, vector<1x10x128xf32>,
    %c0_139 = arith.constant 0 : index
    %c0_140 = arith.constant 0 : index
    %c0_141 = arith.constant 0 : index
    %c18 = arith.constant 18 : index
    %72 = vector.load %arg1[%c0_139, %c0_140, %c0_141, %c18] : memref<1x4x10x256xf32, #tpu.memory_space<vmem>>, vector<1x1x10x128xf32>
    %73 = vector.shape_cast %72 : vector<1x1x10x128xf32> to vector<1x10x128xf32>
    %c0_142 = arith.constant 0 : index
    %c240 = arith.constant 240 : index
    %c0_143 = arith.constant 0 : index
    %74 = vector.load %arg5[%c0_142, %c240, %c0_143] : memref<1x360x128xf32, #tpu.memory_space<vmem>>, vector<1x10x128xf32>
    tpu.vector_store %arg5[%c0_142, %c240, %c0_143], %73 {strides = array<i32>} : memref<1x360x128xf32, #tpu.memory_space<vmem>>, vector<1x10x128xf32>,
    %c0_144 = arith.constant 0 : index
    %c1_145 = arith.constant 1 : index
    %c0_146 = arith.constant 0 : index
    %c18_147 = arith.constant 18 : index
    %75 = vector.load %arg1[%c0_144, %c1_145, %c0_146, %c18_147] : memref<1x4x10x256xf32, #tpu.memory_space<vmem>>, vector<1x1x10x128xf32>
    %76 = vector.shape_cast %75 : vector<1x1x10x128xf32> to vector<1x10x128xf32>
    %c0_148 = arith.constant 0 : index
    %c250 = arith.constant 250 : index
    %c0_149 = arith.constant 0 : index
    %77 = vector.load %arg5[%c0_148, %c250, %c0_149] : memref<1x360x128xf32, #tpu.memory_space<vmem>>, vector<1x10x128xf32>
    tpu.vector_store %arg5[%c0_148, %c250, %c0_149], %76 {strides = array<i32>} : memref<1x360x128xf32, #tpu.memory_space<vmem>>, vector<1x10x128xf32>,
    %c0_150 = arith.constant 0 : index
    %c0_151 = arith.constant 0 : index
    %c0_152 = arith.constant 0 : index
    %c19 = arith.constant 19 : index
    %78 = vector.load %arg1[%c0_150, %c0_151, %c0_152, %c19] : memref<1x4x10x256xf32, #tpu.memory_space<vmem>>, vector<1x1x10x128xf32>
    %79 = vector.shape_cast %78 : vector<1x1x10x128xf32> to vector<1x10x128xf32>
    %c0_153 = arith.constant 0 : index
    %c260 = arith.constant 260 : index
    %c0_154 = arith.constant 0 : index
    %80 = vector.load %arg5[%c0_153, %c260, %c0_154] : memref<1x360x128xf32, #tpu.memory_space<vmem>>, vector<1x10x128xf32>
    tpu.vector_store %arg5[%c0_153, %c260, %c0_154], %79 {strides = array<i32>} : memref<1x360x128xf32, #tpu.memory_space<vmem>>, vector<1x10x128xf32>,
    %c0_155 = arith.constant 0 : index
    %c1_156 = arith.constant 1 : index
    %c0_157 = arith.constant 0 : index
    %c19_158 = arith.constant 19 : index
    %81 = vector.load %arg1[%c0_155, %c1_156, %c0_157, %c19_158] : memref<1x4x10x256xf32, #tpu.memory_space<vmem>>, vector<1x1x10x128xf32>
    %82 = vector.shape_cast %81 : vector<1x1x10x128xf32> to vector<1x10x128xf32>
    %c0_159 = arith.constant 0 : index
    %c270 = arith.constant 270 : index
    %c0_160 = arith.constant 0 : index
    %83 = vector.load %arg5[%c0_159, %c270, %c0_160] : memref<1x360x128xf32, #tpu.memory_space<vmem>>, vector<1x10x128xf32>
    tpu.vector_store %arg5[%c0_159, %c270, %c0_160], %82 {strides = array<i32>} : memref<1x360x128xf32, #tpu.memory_space<vmem>>, vector<1x10x128xf32>,
    %c0_161 = arith.constant 0 : index
    %c0_162 = arith.constant 0 : index
    %c0_163 = arith.constant 0 : index
    %c20_164 = arith.constant 20 : index
    %84 = vector.load %arg1[%c0_161, %c0_162, %c0_163, %c20_164] : memref<1x4x10x256xf32, #tpu.memory_space<vmem>>, vector<1x1x10x128xf32>
    %85 = vector.shape_cast %84 : vector<1x1x10x128xf32> to vector<1x10x128xf32>
    %c0_165 = arith.constant 0 : index
    %c280 = arith.constant 280 : index
    %c0_166 = arith.constant 0 : index
    %86 = vector.load %arg5[%c0_165, %c280, %c0_166] : memref<1x360x128xf32, #tpu.memory_space<vmem>>, vector<1x10x128xf32>
    tpu.vector_store %arg5[%c0_165, %c280, %c0_166], %85 {strides = array<i32>} : memref<1x360x128xf32, #tpu.memory_space<vmem>>, vector<1x10x128xf32>,
    %c0_167 = arith.constant 0 : index
    %c1_168 = arith.constant 1 : index
    %c0_169 = arith.constant 0 : index
    %c20_170 = arith.constant 20 : index
    %87 = vector.load %arg1[%c0_167, %c1_168, %c0_169, %c20_170] : memref<1x4x10x256xf32, #tpu.memory_space<vmem>>, vector<1x1x10x128xf32>
    %88 = vector.shape_cast %87 : vector<1x1x10x128xf32> to vector<1x10x128xf32>
    %c0_171 = arith.constant 0 : index
    %c290 = arith.constant 290 : index
    %c0_172 = arith.constant 0 : index
    %89 = vector.load %arg5[%c0_171, %c290, %c0_172] : memref<1x360x128xf32, #tpu.memory_space<vmem>>, vector<1x10x128xf32>
    tpu.vector_store %arg5[%c0_171, %c290, %c0_172], %88 {strides = array<i32>} : memref<1x360x128xf32, #tpu.memory_space<vmem>>, vector<1x10x128xf32>,
    %c0_173 = arith.constant 0 : index
    %c2_174 = arith.constant 2 : index
    %c0_175 = arith.constant 0 : index
    %c18_176 = arith.constant 18 : index
    %90 = vector.load %arg1[%c0_173, %c2_174, %c0_175, %c18_176] : memref<1x4x10x256xf32, #tpu.memory_space<vmem>>, vector<1x1x10x128xf32>
    %91 = vector.shape_cast %90 : vector<1x1x10x128xf32> to vector<1x10x128xf32>
    %c0_177 = arith.constant 0 : index
    %c300 = arith.constant 300 : index
    %c0_178 = arith.constant 0 : index
    %92 = vector.load %arg5[%c0_177, %c300, %c0_178] : memref<1x360x128xf32, #tpu.memory_space<vmem>>, vector<1x10x128xf32>
    tpu.vector_store %arg5[%c0_177, %c300, %c0_178], %91 {strides = array<i32>} : memref<1x360x128xf32, #tpu.memory_space<vmem>>, vector<1x10x128xf32>,
    %c0_179 = arith.constant 0 : index
    %c3_180 = arith.constant 3 : index
    %c0_181 = arith.constant 0 : index
    %c18_182 = arith.constant 18 : index
    %93 = vector.load %arg1[%c0_179, %c3_180, %c0_181, %c18_182] : memref<1x4x10x256xf32, #tpu.memory_space<vmem>>, vector<1x1x10x128xf32>
    %94 = vector.shape_cast %93 : vector<1x1x10x128xf32> to vector<1x10x128xf32>
    %c0_183 = arith.constant 0 : index
    %c310 = arith.constant 310 : index
    %c0_184 = arith.constant 0 : index
    %95 = vector.load %arg5[%c0_183, %c310, %c0_184] : memref<1x360x128xf32, #tpu.memory_space<vmem>>, vector<1x10x128xf32>
    tpu.vector_store %arg5[%c0_183, %c310, %c0_184], %94 {strides = array<i32>} : memref<1x360x128xf32, #tpu.memory_space<vmem>>, vector<1x10x128xf32>,
    %c0_185 = arith.constant 0 : index
    %c2_186 = arith.constant 2 : index
    %c0_187 = arith.constant 0 : index
    %c19_188 = arith.constant 19 : index
    %96 = vector.load %arg1[%c0_185, %c2_186, %c0_187, %c19_188] : memref<1x4x10x256xf32, #tpu.memory_space<vmem>>, vector<1x1x10x128xf32>
    %97 = vector.shape_cast %96 : vector<1x1x10x128xf32> to vector<1x10x128xf32>
    %c0_189 = arith.constant 0 : index
    %c320 = arith.constant 320 : index
    %c0_190 = arith.constant 0 : index
    %98 = vector.load %arg5[%c0_189, %c320, %c0_190] : memref<1x360x128xf32, #tpu.memory_space<vmem>>, vector<1x10x128xf32>
    tpu.vector_store %arg5[%c0_189, %c320, %c0_190], %97 {strides = array<i32>} : memref<1x360x128xf32, #tpu.memory_space<vmem>>, vector<1x10x128xf32>,
    %c0_191 = arith.constant 0 : index
    %c3_192 = arith.constant 3 : index
    %c0_193 = arith.constant 0 : index
    %c19_194 = arith.constant 19 : index
    %99 = vector.load %arg1[%c0_191, %c3_192, %c0_193, %c19_194] : memref<1x4x10x256xf32, #tpu.memory_space<vmem>>, vector<1x1x10x128xf32>
    %100 = vector.shape_cast %99 : vector<1x1x10x128xf32> to vector<1x10x128xf32>
    %c0_195 = arith.constant 0 : index
    %c330 = arith.constant 330 : index
    %c0_196 = arith.constant 0 : index
    %101 = vector.load %arg5[%c0_195, %c330, %c0_196] : memref<1x360x128xf32, #tpu.memory_space<vmem>>, vector<1x10x128xf32>
    tpu.vector_store %arg5[%c0_195, %c330, %c0_196], %100 {strides = array<i32>} : memref<1x360x128xf32, #tpu.memory_space<vmem>>, vector<1x10x128xf32>,
    %c0_197 = arith.constant 0 : index
    %c2_198 = arith.constant 2 : index
    %c0_199 = arith.constant 0 : index
    %c20_200 = arith.constant 20 : index
    %102 = vector.load %arg1[%c0_197, %c2_198, %c0_199, %c20_200] : memref<1x4x10x256xf32, #tpu.memory_space<vmem>>, vector<1x1x10x128xf32>
    %103 = vector.shape_cast %102 : vector<1x1x10x128xf32> to vector<1x10x128xf32>
    %c0_201 = arith.constant 0 : index
    %c340 = arith.constant 340 : index
    %c0_202 = arith.constant 0 : index
    %104 = vector.load %arg5[%c0_201, %c340, %c0_202] : memref<1x360x128xf32, #tpu.memory_space<vmem>>, vector<1x10x128xf32>
    tpu.vector_store %arg5[%c0_201, %c340, %c0_202], %103 {strides = array<i32>} : memref<1x360x128xf32, #tpu.memory_space<vmem>>, vector<1x10x128xf32>,
    %c0_203 = arith.constant 0 : index
    %c3_204 = arith.constant 3 : index
    %c0_205 = arith.constant 0 : index
    %c20_206 = arith.constant 20 : index
    %105 = vector.load %arg1[%c0_203, %c3_204, %c0_205, %c20_206] : memref<1x4x10x256xf32, #tpu.memory_space<vmem>>, vector<1x1x10x128xf32>
    %106 = vector.shape_cast %105 : vector<1x1x10x128xf32> to vector<1x10x128xf32>
    %c0_207 = arith.constant 0 : index
    %c350 = arith.constant 350 : index
    %c0_208 = arith.constant 0 : index
    %107 = vector.load %arg5[%c0_207, %c350, %c0_208] : memref<1x360x128xf32, #tpu.memory_space<vmem>>, vector<1x10x128xf32>
    tpu.vector_store %arg5[%c0_207, %c350, %c0_208], %106 {strides = array<i32>} : memref<1x360x128xf32, #tpu.memory_space<vmem>>, vector<1x10x128xf32>,
    %c0_209 = arith.constant 0 : index
    %c0_210 = arith.constant 0 : index
    %108 = vector.load %arg2[%c0_209, %c0_210] : memref<96x360xf32, #tpu.memory_space<vmem>>, vector<96x360xf32>
    %c0_211 = arith.constant 0 : index
    %c0_212 = arith.constant 0 : index
    %109 = vector.load %arg3[%c0_211, %c0_212] : memref<20x1xf32, #tpu.memory_space<vmem>>, vector<20x1xf32>
    %c0_213 = arith.constant 0 : index
    %c0_214 = arith.constant 0 : index
    %c0_215 = arith.constant 0 : index
    %110 = vector.load %arg5[%c0_213, %c0_214, %c0_215] : memref<1x360x128xf32, #tpu.memory_space<vmem>>, vector<1x360x128xf32>
    %111 = vector.shape_cast %110 : vector<1x360x128xf32> to vector<360x128xf32>
    %cst = arith.constant dense<0.000000e+00> : vector<96x128xf32>
    %112 = tpu.matmul %108, %111, %cst {dimension_numbers = #tpu.dot_dimension_numbers<[1], [0], [0], [1], [0, 0, 1, 1], [], []>} : vector<96x360xf32>, vector<360x128xf32>, vector<96x128xf32> -> vector<96x128xf32>
    %113 = vector.extract_strided_slice %112 {offsets = [0, 0], sizes = [20, 128], strides = [1, 1]} : vector<96x128xf32> to vector<20x128xf32>
    %114 = vector.extract_strided_slice %112 {offsets = [24, 0], sizes = [20, 128], strides = [1, 1]} : vector<96x128xf32> to vector<20x128xf32>
    %115 = arith.maximumf %113, %114 : vector<20x128xf32>
    %116 = vector.extract_strided_slice %112 {offsets = [48, 0], sizes = [20, 128], strides = [1, 1]} : vector<96x128xf32> to vector<20x128xf32>
    %117 = arith.maximumf %115, %116 : vector<20x128xf32>
    %118 = vector.extract_strided_slice %112 {offsets = [72, 0], sizes = [20, 128], strides = [1, 1]} : vector<96x128xf32> to vector<20x128xf32>
    %119 = arith.maximumf %117, %118 : vector<20x128xf32>
    %120 = vector.broadcast %109 : vector<20x1xf32> to vector<20x128xf32>
    %121 = arith.addf %119, %120 : vector<20x128xf32>
    %cst_216 = arith.constant 0.000000e+00 : f32
    %122 = vector.broadcast %cst_216 : f32 to vector<20x128xf32>
    %123 = arith.maximumf %121, %122 : vector<20x128xf32>
    %c0_217 = arith.constant 0 : index
    %c0_218 = arith.constant 0 : index
    %c0_219 = arith.constant 0 : index
    %124 = vector.load %arg4[%c0_217, %c0_218, %c0_219] : memref<1x20x128xf32, #tpu.memory_space<vmem>>, vector<1x20x128xf32>
    %125 = vector.shape_cast %124 : vector<1x20x128xf32> to vector<20x128xf32>
    %126 = vector.shape_cast %123 : vector<20x128xf32> to vector<1x20x128xf32>
    tpu.vector_store %arg4[%c0_217, %c0_218, %c0_219], %126 {strides = array<i32>} : memref<1x20x128xf32, #tpu.memory_space<vmem>>, vector<1x20x128xf32>,
    return
  }
  func.func @transform_0(%arg0: i32) -> (i32, i32, i32, i32) {
    %c0_i32 = arith.constant 0 : i32
    %c0_i32_0 = arith.constant 0 : i32
    %c0_i32_1 = arith.constant 0 : i32
    %c0_i32_2 = arith.constant 0 : i32
    return %arg0, %c0_i32, %c0_i32_0, %c0_i32_1 : i32, i32, i32, i32
  }
  func.func @transform_1(%arg0: i32) -> (i32, i32) {
    %c0_i32 = arith.constant 0 : i32
    %c0_i32_0 = arith.constant 0 : i32
    %c0_i32_1 = arith.constant 0 : i32
    return %c0_i32, %c0_i32_0 : i32, i32
  }
  func.func @transform_2(%arg0: i32) -> (i32, i32) {
    %c0_i32 = arith.constant 0 : i32
    %c0_i32_0 = arith.constant 0 : i32
    %c0_i32_1 = arith.constant 0 : i32
    return %c0_i32, %c0_i32_0 : i32, i32
  }
  func.func @transform_3(%arg0: i32) -> (i32, i32, i32) {
    %c0_i32 = arith.constant 0 : i32
    %c0_i32_0 = arith.constant 0 : i32
    %c0_i32_1 = arith.constant 0 : i32
    return %arg0, %c0_i32, %c0_i32_0 : i32, i32, i32
  }
}

module attributes {stable_mosaic.version = 11 : i64} {
  func.func @_fc_logsoftmax_kernel(%arg0: i32, %arg1: memref<2x980xf32, #tpu.memory_space<vmem>>, %arg2: memref<10x980xf32, #tpu.memory_space<vmem>>, %arg3: memref<1x10xf32, #tpu.memory_space<vmem>>, %arg4: memref<2x10xf32, #tpu.memory_space<vmem>>) attributes {dimension_semantics = [#tpu.dimension_semantics<parallel>], iteration_bounds = array<i64: 1>, scalar_prefetch = 0 : i64, scratch_operands = 0 : i64, tpu.core_type = #tpu.core_type<tc>, window_params = [{transform_indices = @transform_0, window_bounds = array<i64: 2, 980>}, {pipeline_mode = #tpu.pipeline_mode<synchronous>, transform_indices = @transform_1, window_bounds = array<i64: 10, 980>}, {pipeline_mode = #tpu.pipeline_mode<synchronous>, transform_indices = @transform_2, window_bounds = array<i64: 1, 10>}, {transform_indices = @transform_3, window_bounds = array<i64: 2, 10>}]} {
    %c0 = arith.constant 0 : index
    %c0_0 = arith.constant 0 : index
    %0 = vector.load %arg1[%c0, %c0_0] : memref<2x980xf32, #tpu.memory_space<vmem>>, vector<2x980xf32>
    %c0_1 = arith.constant 0 : index
    %c0_2 = arith.constant 0 : index
    %1 = vector.load %arg2[%c0_1, %c0_2] : memref<10x980xf32, #tpu.memory_space<vmem>>, vector<10x980xf32>
    %cst = arith.constant dense<0.000000e+00> : vector<2x10xf32>
    %2 = tpu.matmul %0, %1, %cst {dimension_numbers = #tpu.dot_dimension_numbers<[1], [1], [0], [0], [0, 0, 1, 0], [], []>} : vector<2x980xf32>, vector<10x980xf32>, vector<2x10xf32> -> vector<2x10xf32>
    %c0_3 = arith.constant 0 : index
    %c0_4 = arith.constant 0 : index
    %3 = vector.load %arg3[%c0_3, %c0_4] : memref<1x10xf32, #tpu.memory_space<vmem>>, vector<1x10xf32>
    %4 = vector.broadcast %3 : vector<1x10xf32> to vector<2x10xf32>
    %5 = arith.addf %2, %4 : vector<2x10xf32>
    %cst_5 = arith.constant dense<0xFF800000> : vector<2xf32>
    %6 = vector.multi_reduction <maximumf>, %5, %cst_5 [1] : vector<2x10xf32> to vector<2xf32>
    %7 = vector.shape_cast %6 : vector<2xf32> to vector<2x1xf32>
    %8 = vector.broadcast %7 : vector<2x1xf32> to vector<2x10xf32>
    %9 = arith.subf %5, %8 : vector<2x10xf32>
    %10 = math.exp %9 : vector<2x10xf32>
    %cst_6 = arith.constant dense<0.000000e+00> : vector<2xf32>
    %11 = vector.multi_reduction <add>, %10, %cst_6 [1] : vector<2x10xf32> to vector<2xf32>
    %12 = vector.shape_cast %11 : vector<2xf32> to vector<2x1xf32>
    %13 = math.log %12 : vector<2x1xf32>
    %14 = vector.broadcast %13 : vector<2x1xf32> to vector<2x10xf32>
    %15 = arith.subf %9, %14 : vector<2x10xf32>
    %c0_7 = arith.constant 0 : index
    %c0_8 = arith.constant 0 : index
    %16 = vector.load %arg4[%c0_7, %c0_8] : memref<2x10xf32, #tpu.memory_space<vmem>>, vector<2x10xf32>
    tpu.vector_store %arg4[%c0_7, %c0_8], %15 {strides = array<i32>} : memref<2x10xf32, #tpu.memory_space<vmem>>, vector<2x10xf32>,
    return
  }
  func.func @transform_0(%arg0: i32) -> (i32, i32) {
    %c0_i32 = arith.constant 0 : i32
    %c0_i32_0 = arith.constant 0 : i32
    return %arg0, %c0_i32 : i32, i32
  }
  func.func @transform_1(%arg0: i32) -> (i32, i32) {
    %c0_i32 = arith.constant 0 : i32
    %c0_i32_0 = arith.constant 0 : i32
    %c0_i32_1 = arith.constant 0 : i32
    return %c0_i32, %c0_i32_0 : i32, i32
  }
  func.func @transform_2(%arg0: i32) -> (i32, i32) {
    %c0_i32 = arith.constant 0 : i32
    %c0_i32_0 = arith.constant 0 : i32
    %c0_i32_1 = arith.constant 0 : i32
    return %c0_i32, %c0_i32_0 : i32, i32
  }
  func.func @transform_3(%arg0: i32) -> (i32, i32) {
    %c0_i32 = arith.constant 0 : i32
    %c0_i32_0 = arith.constant 0 : i32
    return %arg0, %c0_i32 : i32, i32
  }
}

</mosaic_0001>

<llo_original>
// kernel: net_forward.3
$region0: #{net_forward.3}
  #allocation0 [shape = 'u32[]', space=smem, size = 0x4, offset = 0x4, fixed_abs, tag = 'smem constant byte address 0x4 - core index']
  #allocation1 [shape = 'u32[144,128]{1,0:T(1,128)}', space=vmem, size = 0x12000, scoped, tag = 'internal scratch']
  #allocation2 [shape = 'f32[1,36,256]{2,1,0:T(8,128)}', space=vmem, size = 0xa000, scoped, tag = 'scratch operand']
  %s0 = inlined_call_operand.vmem [shape: f32[2,4,1,384], index: 0, kind: input, shape index: {}]
  %s1 = inlined_call_operand.vmem [shape: f32[64,36], index: 1, kind: input, shape index: {}]
  %s2 = inlined_call_operand.vmem [shape: f32[10,1], index: 2, kind: input, shape index: {}]
  %s3 = inlined_call_operand.vmem [shape: f32[2,10,256], index: 3, kind: output, shape index: {}]
  %s4 = sld [smem:[#allocation0]]
  $region45: #{net_forward.3} parent=0
    _
  %s6 = ssub.s32 1, %s4
  %s7 = scalar_select 0, %s6, %s4
  loop: start=0, step=1, limit=4
  $region2: #{net_forward.3} parent=0 // loop_pre_header
    _
  $region3: #{net_forward.3} parent=0 // loop_header
    %s9 = sphi 0, %s13
    %p10 = scmp.ge.s32.totalorder %s9, 4
    %s19 = sphi 0, %s21
    %s22 = sphi 0, %s19
    %s23 = sphi 0, %s22
    %s39 = sphi 0, %s23
    %s43 = sphi 0, %s43
    %s45 = sphi 0, %s43
    %s46 = sphi 0, %s45
    %s60 = sphi 0, %s46
    %s64 = sphi 0, %s64
    %s66 = sphi 0, %s64
    %s67 = sphi 0, %s66
    %s81 = sphi 0, %s67
    %s87 = sphi 0, %s89
    %s90 = sphi 0, %s87
    %s91 = sphi 0, %s90
    %s107 = sphi 0, %s91
  $region4: #{net_forward.3} parent=0 // loop_header_branch
    %12 = sbr.rel (%p10) target = $region8
  $region5: #{net_forward.3} parent=0 // loop_body
    %s14 = ssub.s32 %s9, 1
    %s15 = ssub.s32 %s9, 2
    %s16 = sadd.s32 %s9, 1
    %s17 = ssub.s32 %s9, %s16
    %p18 = scmp.eq.s32.totalorder %s17, 0
    %s20 = sadd.s32 %s19, 1
    %s21 = scalar_select %p18, %s19, %s20
    %p24 = pneg %p18
    %p25 = scmp.eq.s32.totalorder %s9, 1
    %p26 = por %p24, %p25
    %p27 = scmp.ne.s32.totalorder %s19, %s22
    %p28 = scmp.eq.s32.totalorder %s9, 0
    %p29 = por %p27, %p28
    %p30 = scmp.ne.s32.totalorder %s19, %s22
    %p31 = scmp.eq.s32.totalorder %s14, 1
    %p32 = por %p30, %p31
    %p33 = scmp.ne.s32.totalorder %s22, %s23
    %p34 = scmp.eq.s32.totalorder %s14, 0
    %p35 = por %p33, %p34
    %p36 = scmp.ne.s32.totalorder %s22, %s23
    %p37 = scmp.eq.s32.totalorder %s15, 1
    %p38 = por %p36, %p37
    %p40 = scmp.ne.s32.totalorder %s23, %s39
    %p41 = scmp.eq.s32.totalorder %s15, 0
    %p42 = por %p40, %p41
    %s44 = sadd.s32 %s43, 1
    %p47 = scmp.eq.s32.totalorder %s9, 1
    %p48 = scmp.ne.s32.totalorder %s43, %s45
    %p49 = scmp.eq.s32.totalorder %s9, 0
    %p50 = por %p48, %p49
    %p51 = scmp.ne.s32.totalorder %s43, %s45
    %p52 = scmp.eq.s32.totalorder %s14, 1
    %p53 = por %p51, %p52
    %p54 = scmp.ne.s32.totalorder %s45, %s46
    %p55 = scmp.eq.s32.totalorder %s14, 0
    %p56 = por %p54, %p55
    %p57 = scmp.ne.s32.totalorder %s45, %s46
    %p58 = scmp.eq.s32.totalorder %s15, 1
    %p59 = por %p57, %p58
    %p61 = scmp.ne.s32.totalorder %s46, %s60
    %p62 = scmp.eq.s32.totalorder %s15, 0
    %p63 = por %p61, %p62
    %s65 = sadd.s32 %s64, 1
    %p68 = scmp.eq.s32.totalorder %s9, 1
    %p69 = scmp.ne.s32.totalorder %s64, %s66
    %p70 = scmp.eq.s32.totalorder %s9, 0
    %p71 = por %p69, %p70
    %p72 = scmp.ne.s32.totalorder %s64, %s66
    %p73 = scmp.eq.s32.totalorder %s14, 1
    %p74 = por %p72, %p73
    %p75 = scmp.ne.s32.totalorder %s66, %s67
    %p76 = scmp.eq.s32.totalorder %s14, 0
    %p77 = por %p75, %p76
    %p78 = scmp.ne.s32.totalorder %s66, %s67
    %p79 = scmp.eq.s32.totalorder %s15, 1
    %p80 = por %p78, %p79
    %p82 = scmp.ne.s32.totalorder %s67, %s81
    %p83 = scmp.eq.s32.totalorder %s15, 0
    %p84 = por %p82, %p83
    %s85 = ssub.s32 %s9, %s16
    %p86 = scmp.eq.s32.totalorder %s85, 0
    %s88 = sadd.s32 %s87, 1
    %s89 = scalar_select %p86, %s87, %s88
    %p92 = pneg %p86
    %p93 = scmp.eq.s32.totalorder %s9, 1
    %p94 = por %p92, %p93
    %p95 = scmp.ne.s32.totalorder %s87, %s90
    %p96 = scmp.eq.s32.totalorder %s9, 0
    %p97 = por %p95, %p96
    %p98 = scmp.ne.s32.totalorder %s87, %s90
    %p99 = scmp.eq.s32.totalorder %s14, 1
    %p100 = por %p98, %p99
    %p101 = scmp.ne.s32.totalorder %s90, %s91
    %p102 = scmp.eq.s32.totalorder %s14, 0
    %p103 = por %p101, %p102
    %p104 = scmp.ne.s32.totalorder %s90, %s91
    %p105 = scmp.eq.s32.totalorder %s15, 1
    %p106 = por %p104, %p105
    %p108 = scmp.ne.s32.totalorder %s91, %s107
    %p109 = scmp.eq.s32.totalorder %s15, 0
    %p110 = por %p108, %p109
    %p111 = scmp.le.s32.totalorder 1, %s9
    %p112 = scmp.lt.s32.totalorder %s9, 3
    %p113 = pnand %p111, %p112
    %p114 = pneg %p113
    // Predicated region
    $region9: #{net_forward.3} parent=5 // pred_check
      _
    $region10: #{net_forward.3} parent=5 // pred_check_branch
      %116 = sbr.rel (%p113) target = $region12
    $region11: #{net_forward.3} parent=5 // pred_region
      %s117 = ssub.s32 %s9, 1
      // Predicated region
      $region13: #{net_forward.3} parent=11 // pred_check
        %p118 = pneg %p56
      $region14: #{net_forward.3} parent=11 // pred_check_branch
        %120 = sbr.rel (%p118) target = $region16
      $region15: #{net_forward.3} parent=11 // pred_region
        _
      $region16: #{net_forward.3} parent=11 // pred_fallthru
        _
      // Predicated region
      $region17: #{net_forward.3} parent=11 // pred_check
        %p121 = pneg %p77
      $region18: #{net_forward.3} parent=11 // pred_check_branch
        %123 = sbr.rel (%p121) target = $region20
      $region19: #{net_forward.3} parent=11 // pred_region
        _
      $region20: #{net_forward.3} parent=11 // pred_fallthru
        _
    $region12: #{net_forward.3} parent=5 // pred_fallthru
      _
    %p124 = scmp.lt.s32.totalorder %s9, 2
    // Predicated region
    $region21: #{net_forward.3} parent=5 // pred_check
      %p125 = pneg %p124
    $region22: #{net_forward.3} parent=5 // pred_check_branch
      %127 = sbr.rel (%p125) target = $region24
    $region23: #{net_forward.3} parent=5 // pred_region
      // Predicated region
      $region25: #{net_forward.3} parent=23 // pred_check
        %p128 = pneg %p29
      $region26: #{net_forward.3} parent=23 // pred_check_branch
        %130 = sbr.rel (%p128) target = $region28
      $region27: #{net_forward.3} parent=23 // pred_region
        %p131 = scmp.lt.s32.totalorder %s9, 1
        %s132 = scalar_select %p131, %s9, 1
        %s133 = smul.addr %s132, 12
        %s134 = scalar_lea.vmem %s0, %s133
      $region28: #{net_forward.3} parent=23 // pred_fallthru
        _
    $region24: #{net_forward.3} parent=5 // pred_fallthru
      _
    %p135 = scmp.le.s32.totalorder 1, %s9
    %p136 = scmp.lt.s32.totalorder %s9, 3
    %p137 = pnand %p135, %p136
    %p138 = pneg %p137
    // Predicated region
    $region29: #{net_forward.3} parent=5 // pred_check
      _
    $region30: #{net_forward.3} parent=5 // pred_check_branch
      %140 = sbr.rel (%p137) target = $region32
    $region31: #{net_forward.3} parent=5 // pred_region
      %s141 = ssub.s32 %s9, 1
      %p142 = scmp.lt.s32.totalorder %s14, 1
      %s143 = scalar_select %p142, %s14, 1
      %s144 = smul.addr %s143, 12
      %s145 = scalar_lea.vmem %s0, %s144
      %p146 = pneg %p35
      %p147 = pneg %p32
      %p148 = pneg %p56
      %p149 = pneg %p53
      %p150 = pneg %p77
      %p151 = pneg %p74
      %p152 = pneg %p103
      %p153 = pneg %p100
      %p154 = scmp.lt.s32.totalorder %s14, 1
      %s155 = scalar_select %p154, %s14, 1
      %s156 = smul.addr %s155, 4
      %s157 = smul.addr %s156, 8
      %s158 = scalar_lea.vmem %s3, %s157
      %p159 = scmp.lt.s32.totalorder %s14, 1
      %s160 = scalar_select %p159, %s14, 1
      %s161 = smul.addr %s160, 12
      %s162 = scalar_lea.vmem %s0, %s161
      %p163 = scmp.lt.s32.totalorder %s14, 1
      %s164 = scalar_select %p163, %s14, 1
      %s165 = smul.addr %s164, 4
      %s166 = smul.addr %s165, 8
      %s167 = scalar_lea.vmem %s3, %s166
      %v168 = vld [vmem:[%s162] sm:$0x3]
      %v169 = vlaneseq
      %vm170 = vcmp.ge.s32.totalorder %v169, 0
      %vm171 = vcmp.lt.s32.totalorder %v169, 256
      %vm172 = vmand %vm170, %vm171
      %173 = vst.msk [vmem:[#allocation2] ss:$8 sm:$0x3] %vm172, %v168
      %174 = vst.msk [vmem:[#allocation2] ss:$8 sm:$0x0] %vm172, %v168
      %s175 = scalar_lea.vmem %s162, 3
      %v176 = vld [vmem:[%s175] sm:$0x3]
      %s177 = scalar_lea.vmem [#allocation2], 1
      %178 = vst.msk [vmem:[%s177] ss:$8 sm:$0x3] %vm172, %v176
      %179 = vst.msk [vmem:[%s177] ss:$8 sm:$0x0] %vm172, %v176
      %v180 = vld [vmem:[%s162] sm:$0x7]
      %182 = vrot.lane.b32.xlu0 %v180, 127
      %v183 = vpop.permute.xlu0 %182
      %v184 = vrot.slane %v183, 1
      %vm185 = vcmask 1039360
      %v186 = vsel %vm185, %v183, %v184
      %s188 = scalar_lea.vmem [#allocation2], 2
      %189 = vst.msk [vmem:[%s188] ss:$8 sm:$0x3] %vm172, %v186
      %190 = vst.msk [vmem:[%s188] ss:$8 sm:$0x0] %vm172, %v186
      %v191 = vld [vmem:[%s175] sm:$0x7]
      %193 = vrot.lane.b32.xlu0 %v191, 127
      %v194 = vpop.permute.xlu0 %193
      %v195 = vrot.slane %v194, 1
      %v196 = vsel %vm185, %v194, %v195
      %s198 = scalar_lea.vmem [#allocation2], 3
      %199 = vst.msk [vmem:[%s198] ss:$8 sm:$0x3] %vm172, %v196
      %200 = vst.msk [vmem:[%s198] ss:$8 sm:$0x0] %vm172, %v196
      %v201 = vld [vmem:[%s162] sm:$0x7]
      %203 = vrot.lane.b32.xlu0 %v201, 126
      %v204 = vpop.permute.xlu0 %203
      %v205 = vrot.slane %v204, 1
      %vm206 = vcmask 1031168
      %v207 = vsel %vm206, %v204, %v205
      %s209 = scalar_lea.vmem [#allocation2], 4
      %210 = vst.msk [vmem:[%s209] ss:$8 sm:$0x3] %vm172, %v207
      %211 = vst.msk [vmem:[%s209] ss:$8 sm:$0x0] %vm172, %v207
      %v212 = vld [vmem:[%s175] sm:$0x7]
      %214 = vrot.lane.b32.xlu0 %v212, 126
      %v215 = vpop.permute.xlu0 %214
      %v216 = vrot.slane %v215, 1
      %v217 = vsel %vm206, %v215, %v216
      %s219 = scalar_lea.vmem [#allocation2], 5
      %220 = vst.msk [vmem:[%s219] ss:$8 sm:$0x3] %vm172, %v217
      %221 = vst.msk [vmem:[%s219] ss:$8 sm:$0x0] %vm172, %v217
      %s222 = scalar_lea.vmem %s162, 6
      %v223 = vld [vmem:[%s222] sm:$0x3]
      %s224 = scalar_lea.vmem [#allocation2], 6
      %225 = vst.msk [vmem:[%s224] ss:$8 sm:$0x3] %vm172, %v223
      %226 = vst.msk [vmem:[%s224] ss:$8 sm:$0x0] %vm172, %v223
      %s227 = scalar_lea.vmem %s162, 9
      %v228 = vld [vmem:[%s227] sm:$0x3]
      %s229 = scalar_lea.vmem [#allocation2], 7
      %230 = vst.msk [vmem:[%s229] ss:$8 sm:$0x3] %vm172, %v228
      %231 = vst.msk [vmem:[%s229] ss:$8 sm:$0x0] %vm172, %v228
      %v232 = vld [vmem:[%s222] sm:$0x7]
      %234 = vrot.lane.b32.xlu0 %v232, 127
      %v235 = vpop.permute.xlu0 %234
      %v236 = vrot.slane %v235, 1
      %v237 = vsel %vm185, %v235, %v236
      %s239 = scalar_lea.vmem [#allocation2], 16
      %240 = vst.msk [vmem:[%s239] ss:$8 sm:$0x3] %vm172, %v237
      %241 = vst.msk [vmem:[%s239] ss:$8 sm:$0x0] %vm172, %v237
      %v242 = vld [vmem:[%s227] sm:$0x7]
      %244 = vrot.lane.b32.xlu0 %v242, 127
      %v245 = vpop.permute.xlu0 %244
      %v246 = vrot.slane %v245, 1
      %v247 = vsel %vm185, %v245, %v246
      %s249 = scalar_lea.vmem [#allocation2], 17
      %250 = vst.msk [vmem:[%s249] ss:$8 sm:$0x3] %vm172, %v247
      %251 = vst.msk [vmem:[%s249] ss:$8 sm:$0x0] %vm172, %v247
      %v252 = vld [vmem:[%s222] sm:$0x7]
      %254 = vrot.lane.b32.xlu0 %v252, 126
      %v255 = vpop.permute.xlu0 %254
      %v256 = vrot.slane %v255, 1
      %v257 = vsel %vm206, %v255, %v256
      %s259 = scalar_lea.vmem [#allocation2], 18
      %260 = vst.msk [vmem:[%s259] ss:$8 sm:$0x3] %vm172, %v257
      %261 = vst.msk [vmem:[%s259] ss:$8 sm:$0x0] %vm172, %v257
      %v262 = vld [vmem:[%s227] sm:$0x7]
      %264 = vrot.lane.b32.xlu0 %v262, 126
      %v265 = vpop.permute.xlu0 %264
      %v266 = vrot.slane %v265, 1
      %v267 = vsel %vm206, %v265, %v266
      %s269 = scalar_lea.vmem [#allocation2], 19
      %270 = vst.msk [vmem:[%s269] ss:$8 sm:$0x3] %vm172, %v267
      %271 = vst.msk [vmem:[%s269] ss:$8 sm:$0x0] %vm172, %v267
      %v272 = vld [vmem:[%s162] sm:$0x7]
      %274 = vrot.lane.b32.xlu0 %v272, 112
      %v275 = vpop.permute.xlu0 %274
      %v276 = vrot.slane %v275, 1
      %vm277 = vcmask 916480
      %v278 = vsel %vm277, %v275, %v276
      %s280 = scalar_lea.vmem [#allocation2], 20
      %281 = vst.msk [vmem:[%s280] ss:$8 sm:$0x3] %vm172, %v278
      %282 = vst.msk [vmem:[%s280] ss:$8 sm:$0x0] %vm172, %v278
      %v283 = vld [vmem:[%s175] sm:$0x7]
      %285 = vrot.lane.b32.xlu0 %v283, 112
      %v286 = vpop.permute.xlu0 %285
      %v287 = vrot.slane %v286, 1
      %v288 = vsel %vm277, %v286, %v287
      %s290 = scalar_lea.vmem [#allocation2], 21
      %291 = vst.msk [vmem:[%s290] ss:$8 sm:$0x3] %vm172, %v288
      %292 = vst.msk [vmem:[%s290] ss:$8 sm:$0x0] %vm172, %v288
      %v293 = vld [vmem:[%s162] sm:$0x7]
      %295 = vrot.lane.b32.xlu0 %v293, 111
      %v296 = vpop.permute.xlu0 %295
      %v297 = vrot.slane %v296, 1
      %vm298 = vcmask 908288
      %v299 = vsel %vm298, %v296, %v297
      %s301 = scalar_lea.vmem [#allocation2], 22
      %302 = vst.msk [vmem:[%s301] ss:$8 sm:$0x3] %vm172, %v299
      %303 = vst.msk [vmem:[%s301] ss:$8 sm:$0x0] %vm172, %v299
      %v304 = vld [vmem:[%s175] sm:$0x7]
      %306 = vrot.lane.b32.xlu0 %v304, 111
      %v307 = vpop.permute.xlu0 %306
      %v308 = vrot.slane %v307, 1
      %v309 = vsel %vm298, %v307, %v308
      %s311 = scalar_lea.vmem [#allocation2], 23
      %312 = vst.msk [vmem:[%s311] ss:$8 sm:$0x3] %vm172, %v309
      %313 = vst.msk [vmem:[%s311] ss:$8 sm:$0x0] %vm172, %v309
      %v314 = vld [vmem:[%s162] sm:$0x7]
      %316 = vrot.lane.b32.xlu0 %v314, 110
      %v317 = vpop.permute.xlu0 %316
      %v318 = vrot.slane %v317, 1
      %vm319 = vcmask 900096
      %v320 = vsel %vm319, %v317, %v318
      %s322 = scalar_lea.vmem [#allocation2], 32
      %323 = vst.msk [vmem:[%s322] ss:$8 sm:$0x3] %vm172, %v320
      %324 = vst.msk [vmem:[%s322] ss:$8 sm:$0x0] %vm172, %v320
      %v325 = vld [vmem:[%s175] sm:$0x7]
      %327 = vrot.lane.b32.xlu0 %v325, 110
      %v328 = vpop.permute.xlu0 %327
      %v329 = vrot.slane %v328, 1
      %v330 = vsel %vm319, %v328, %v329
      %s332 = scalar_lea.vmem [#allocation2], 33
      %333 = vst.msk [vmem:[%s332] ss:$8 sm:$0x3] %vm172, %v330
      %334 = vst.msk [vmem:[%s332] ss:$8 sm:$0x0] %vm172, %v330
      %v335 = vld [vmem:[%s222] sm:$0x7]
      %337 = vrot.lane.b32.xlu0 %v335, 112
      %v338 = vpop.permute.xlu0 %337
      %v339 = vrot.slane %v338, 1
      %v340 = vsel %vm277, %v338, %v339
      %s342 = scalar_lea.vmem [#allocation2], 34
      %343 = vst.msk [vmem:[%s342] ss:$8 sm:$0x3] %vm172, %v340
      %344 = vst.msk [vmem:[%s342] ss:$8 sm:$0x0] %vm172, %v340
      %v345 = vld [vmem:[%s227] sm:$0x7]
      %347 = vrot.lane.b32.xlu0 %v345, 112
      %v348 = vpop.permute.xlu0 %347
      %v349 = vrot.slane %v348, 1
      %v350 = vsel %vm277, %v348, %v349
      %s352 = scalar_lea.vmem [#allocation2], 35
      %353 = vst.msk [vmem:[%s352] ss:$8 sm:$0x3] %vm172, %v350
      %354 = vst.msk [vmem:[%s352] ss:$8 sm:$0x0] %vm172, %v350
      %v355 = vld [vmem:[%s222] sm:$0x7]
      %357 = vrot.lane.b32.xlu0 %v355, 111
      %v358 = vpop.permute.xlu0 %357
      %v359 = vrot.slane %v358, 1
      %v360 = vsel %vm298, %v358, %v359
      %s362 = scalar_lea.vmem [#allocation2], 36
      %363 = vst.msk [vmem:[%s362] ss:$8 sm:$0x3] %vm172, %v360
      %364 = vst.msk [vmem:[%s362] ss:$8 sm:$0x0] %vm172, %v360
      %v365 = vld [vmem:[%s227] sm:$0x7]
      %367 = vrot.lane.b32.xlu0 %v365, 111
      %v368 = vpop.permute.xlu0 %367
      %v369 = vrot.slane %v368, 1
      %v370 = vsel %vm298, %v368, %v369
      %s372 = scalar_lea.vmem [#allocation2], 37
      %373 = vst.msk [vmem:[%s372] ss:$8 sm:$0x3] %vm172, %v370
      %374 = vst.msk [vmem:[%s372] ss:$8 sm:$0x0] %vm172, %v370
      %v375 = vld [vmem:[%s222] sm:$0x7]
      %377 = vrot.lane.b32.xlu0 %v375, 110
      %v378 = vpop.permute.xlu0 %377
      %v379 = vrot.slane %v378, 1
      %v380 = vsel %vm319, %v378, %v379
      %s382 = scalar_lea.vmem [#allocation2], 38
      %383 = vst.msk [vmem:[%s382] ss:$8 sm:$0x3] %vm172, %v380
      %384 = vst.msk [vmem:[%s382] ss:$8 sm:$0x0] %vm172, %v380
      %v385 = vld [vmem:[%s227] sm:$0x7]
      %387 = vrot.lane.b32.xlu0 %v385, 110
      %v388 = vpop.permute.xlu0 %387
      %v389 = vrot.slane %v388, 1
      %v390 = vsel %vm319, %v388, %v389
      %s392 = scalar_lea.vmem [#allocation2], 39
      %393 = vst.msk [vmem:[%s392] ss:$8 sm:$0x3] %vm172, %v390
      %394 = vst.msk [vmem:[%s392] ss:$8 sm:$0x0] %vm172, %v390
      %v395 = vld [vmem:[%s162] sm:$0x7]
      %397 = vrot.lane.b32.xlu0 %v395, 96
      %v398 = vpop.permute.xlu0 %397
      %v399 = vrot.slane %v398, 1
      %vm400 = vcmask 785408
      %v401 = vsel %vm400, %v398, %v399
      %s403 = scalar_lea.vmem [#allocation2], 48
      %404 = vst.msk [vmem:[%s403] ss:$8 sm:$0x3] %vm172, %v401
      %405 = vst.msk [vmem:[%s403] ss:$8 sm:$0x0] %vm172, %v401
      %v406 = vld [vmem:[%s175] sm:$0x7]
      %408 = vrot.lane.b32.xlu0 %v406, 96
      %v409 = vpop.permute.xlu0 %408
      %v410 = vrot.slane %v409, 1
      %v411 = vsel %vm400, %v409, %v410
      %s413 = scalar_lea.vmem [#allocation2], 49
      %414 = vst.msk [vmem:[%s413] ss:$8 sm:$0x3] %vm172, %v411
      %415 = vst.msk [vmem:[%s413] ss:$8 sm:$0x0] %vm172, %v411
      %v416 = vld [vmem:[%s162] sm:$0x7]
      %418 = vrot.lane.b32.xlu0 %v416, 95
      %v419 = vpop.permute.xlu0 %418
      %v420 = vrot.slane %v419, 1
      %vm421 = vcmask 777216
      %v422 = vsel %vm421, %v419, %v420
      %s424 = scalar_lea.vmem [#allocation2], 50
      %425 = vst.msk [vmem:[%s424] ss:$8 sm:$0x3] %vm172, %v422
      %426 = vst.msk [vmem:[%s424] ss:$8 sm:$0x0] %vm172, %v422
      %v427 = vld [vmem:[%s175] sm:$0x7]
      %429 = vrot.lane.b32.xlu0 %v427, 95
      %v430 = vpop.permute.xlu0 %429
      %v431 = vrot.slane %v430, 1
      %v432 = vsel %vm421, %v430, %v431
      %s434 = scalar_lea.vmem [#allocation2], 51
      %435 = vst.msk [vmem:[%s434] ss:$8 sm:$0x3] %vm172, %v432
      %436 = vst.msk [vmem:[%s434] ss:$8 sm:$0x0] %vm172, %v432
      %v437 = vld [vmem:[%s162] sm:$0x7]
      %439 = vrot.lane.b32.xlu0 %v437, 94
      %v440 = vpop.permute.xlu0 %439
      %v441 = vrot.slane %v440, 1
      %vm442 = vcmask 769024
      %v443 = vsel %vm442, %v440, %v441
      %s445 = scalar_lea.vmem [#allocation2], 52
      %446 = vst.msk [vmem:[%s445] ss:$8 sm:$0x3] %vm172, %v443
      %447 = vst.msk [vmem:[%s445] ss:$8 sm:$0x0] %vm172, %v443
      %v448 = vld [vmem:[%s175] sm:$0x7]
      %450 = vrot.lane.b32.xlu0 %v448, 94
      %v451 = vpop.permute.xlu0 %450
      %v452 = vrot.slane %v451, 1
      %v453 = vsel %vm442, %v451, %v452
      %s455 = scalar_lea.vmem [#allocation2], 53
      %456 = vst.msk [vmem:[%s455] ss:$8 sm:$0x3] %vm172, %v453
      %457 = vst.msk [vmem:[%s455] ss:$8 sm:$0x0] %vm172, %v453
      %v458 = vld [vmem:[%s222] sm:$0x7]
      %460 = vrot.lane.b32.xlu0 %v458, 96
      %v461 = vpop.permute.xlu0 %460
      %v462 = vrot.slane %v461, 1
      %v463 = vsel %vm400, %v461, %v462
      %s465 = scalar_lea.vmem [#allocation2], 54
      %466 = vst.msk [vmem:[%s465] ss:$8 sm:$0x3] %vm172, %v463
      %467 = vst.msk [vmem:[%s465] ss:$8 sm:$0x0] %vm172, %v463
      %v468 = vld [vmem:[%s227] sm:$0x7]
      %470 = vrot.lane.b32.xlu0 %v468, 96
      %v471 = vpop.permute.xlu0 %470
      %v472 = vrot.slane %v471, 1
      %v473 = vsel %vm400, %v471, %v472
      %s475 = scalar_lea.vmem [#allocation2], 55
      %476 = vst.msk [vmem:[%s475] ss:$8 sm:$0x3] %vm172, %v473
      %477 = vst.msk [vmem:[%s475] ss:$8 sm:$0x0] %vm172, %v473
      %v478 = vld [vmem:[%s222] sm:$0x7]
      %480 = vrot.lane.b32.xlu0 %v478, 95
      %v481 = vpop.permute.xlu0 %480
      %v482 = vrot.slane %v481, 1
      %v483 = vsel %vm421, %v481, %v482
      %s485 = scalar_lea.vmem [#allocation2], 64
      %486 = vst.msk [vmem:[%s485] ss:$8 sm:$0x3] %vm172, %v483
      %487 = vst.msk [vmem:[%s485] ss:$8 sm:$0x0] %vm172, %v483
      %v488 = vld [vmem:[%s227] sm:$0x7]
      %490 = vrot.lane.b32.xlu0 %v488, 95
      %v491 = vpop.permute.xlu0 %490
      %v492 = vrot.slane %v491, 1
      %v493 = vsel %vm421, %v491, %v492
      %s495 = scalar_lea.vmem [#allocation2], 65
      %496 = vst.msk [vmem:[%s495] ss:$8 sm:$0x3] %vm172, %v493
      %497 = vst.msk [vmem:[%s495] ss:$8 sm:$0x0] %vm172, %v493
      %v498 = vld [vmem:[%s222] sm:$0x7]
      %500 = vrot.lane.b32.xlu0 %v498, 94
      %v501 = vpop.permute.xlu0 %500
      %v502 = vrot.slane %v501, 1
      %v503 = vsel %vm442, %v501, %v502
      %s505 = scalar_lea.vmem [#allocation2], 66
      %506 = vst.msk [vmem:[%s505] ss:$8 sm:$0x3] %vm172, %v503
      %507 = vst.msk [vmem:[%s505] ss:$8 sm:$0x0] %vm172, %v503
      %v508 = vld [vmem:[%s227] sm:$0x7]
      %510 = vrot.lane.b32.xlu0 %v508, 94
      %v511 = vpop.permute.xlu0 %510
      %v512 = vrot.slane %v511, 1
      %v513 = vsel %vm442, %v511, %v512
      %s515 = scalar_lea.vmem [#allocation2], 67
      %516 = vst.msk [vmem:[%s515] ss:$8 sm:$0x3] %vm172, %v513
      %517 = vst.msk [vmem:[%s515] ss:$8 sm:$0x0] %vm172, %v513
      %v518 = vld [vmem:[%s1] sm:$0xff]
      %v519 = vld [vmem:[%s1 + $0x8] sm:$0xff]
      %v520 = vld [vmem:[%s1 + $0x10] sm:$0xff]
      %v521 = vld [vmem:[%s1 + $0x18] sm:$0xff]
      %v522 = vld [vmem:[%s1 + $0x20] sm:$0xff]
      %v523 = vld [vmem:[%s1 + $0x28] sm:$0xff]
      %v524 = vld [vmem:[%s1 + $0x30] sm:$0xff]
      %v525 = vld [vmem:[%s1 + $0x38] sm:$0xff]
      %v526 = vld [vmem:[%s2] sm:$0xff]
      %v527 = vld [vmem:[%s2 + $0x8] sm:$0x3]
      %v528 = vld [vmem:[#allocation2] sm:$0xff]
      %v529 = vld [vmem:[#allocation2 + $0x8] sm:$0xff]
      %v530 = vld [vmem:[#allocation2 + $0x10] sm:$0xff]
      %v531 = vld [vmem:[#allocation2 + $0x18] sm:$0xff]
      %v532 = vld [vmem:[#allocation2 + $0x20] sm:$0xff]
      %v533 = vld [vmem:[#allocation2 + $0x28] sm:$0xff]
      %v534 = vld [vmem:[#allocation2 + $0x30] sm:$0xff]
      %v535 = vld [vmem:[#allocation2 + $0x38] sm:$0xff]
      %v536 = vld [vmem:[#allocation2 + $0x40] sm:$0xf]
      %v537 = vld [vmem:[#allocation2 + $0x48] sm:$0xf]
      %vm538 = vcmask 293888
      %v540 = vsel %vm538, %v518, 0
      %v543 = vsel %vm538, %v519, 0
      %v546 = vsel %vm538, %v520, 0
      %v549 = vsel %vm538, %v521, 0
      %v552 = vsel %vm538, %v522, 0
      %v555 = vsel %vm538, %v523, 0
      %v558 = vsel %vm538, %v524, 0
      %v561 = vsel %vm538, %v525, 0
      %vm563 = vcmask 1043456
      %v565 = vsel %vm563, %v536, 0
      %v568 = vsel %vm563, %v537, 0
      %570 = vmatprep.subr.mxu0 0.0
      %571 = vmatpush1.msra.mxu0 0.0
      %572 = vmatprep.subr.mxu0 0.0
      %573 = vmatpush1.msra.mxu0 0.0
      %574 = vmatprep.subr.mxu0 0.0
      %575 = vmatpush1.msra.mxu0 0.0
      %576 = vmatprep.subr.mxu0 0.0
      %577 = vmatpush1.msra.mxu0 0.0
      %578 = vmatprep.subr.mxu0 0.0
      %579 = vmatpush1.msra.mxu0 0.0
      %580 = vmatprep.subr.mxu0 0.0
      %581 = vmatpush1.msra.mxu0 0.0
      %582 = vmatprep.subr.mxu0 0.0
      %583 = vmatpush1.msra.mxu0 0.0
      %584 = vmatprep.subr.mxu0 0.0
      %585 = vmatpush1.msra.mxu0 0.0
      %586 = vmatprep.subr.mxu0 0.0
      %587 = vmatpush1.msra.mxu0 0.0
      %588 = vmatprep.subr.mxu0 0.0
      %589 = vmatpush1.msra.mxu0 0.0
      %590 = vmatprep.subr.mxu0 0.0
      %591 = vmatpush1.msra.mxu0 0.0
      %592 = vmatprep.subr.mxu0 %v568
      %593 = vmatpush1.msra.mxu0 %v565
      %594 = vmatprep.subr.mxu0 %v535
      %595 = vmatpush1.msra.mxu0 %v534
      %596 = vmatprep.subr.mxu0 %v533
      %597 = vmatpush1.msra.mxu0 %v532
      %598 = vmatprep.subr.mxu0 %v531
      %599 = vmatpush1.msra.mxu0 %v530
      %600 = vmatprep.subr.mxu0 %v529
      %601 = vmatpush1.msra.mxu0 %v528
      %602 = vmatprep.subr.mxu0 0.0
      %603 = vmatpush2.msra.mxu0 0.0
      %604 = vmatprep.subr.mxu0 0.0
      %605 = vmatpush2.msra.mxu0 0.0
      %606 = vmatprep.subr.mxu0 0.0
      %607 = vmatpush2.msra.mxu0 0.0
      %608 = vmatprep.subr.mxu0 0.0
      %609 = vmatpush2.msra.mxu0 0.0
      %610 = vmatprep.subr.mxu0 0.0
      %611 = vmatpush2.msra.mxu0 0.0
      %612 = vmatprep.subr.mxu0 0.0
      %613 = vmatpush2.msra.mxu0 0.0
      %614 = vmatprep.subr.mxu0 0.0
      %615 = vmatpush2.msra.mxu0 0.0
      %616 = vmatprep.subr.mxu0 0.0
      %617 = vmatpush2.msra.mxu0 0.0
      %618 = vmatprep.subr.mxu0 0.0
      %619 = vmatpush2.msra.mxu0 0.0
      %620 = vmatprep.subr.mxu0 0.0
      %621 = vmatpush2.msra.mxu0 0.0
      %622 = vmatprep.subr.mxu0 0.0
      %623 = vmatpush2.msra.mxu0 0.0
      %624 = vmatprep.subr.mxu0 0.0
      %625 = vmatpush2.msra.mxu0 0.0
      %626 = vmatprep.subr.mxu0 0.0
      %627 = vmatpush2.msra.mxu0 0.0
      %628 = vmatprep.subr.mxu0 0.0
      %629 = vmatpush2.msra.mxu0 0.0
      %630 = vmatprep.subr.mxu0 0.0
      %631 = vmatpush2.msra.mxu0 0.0
      %632 = vmatprep.subr.mxu0 0.0
      %633 = vmatpush2.msra.mxu0 0.0
      %634 = vmatprep.mubr.f32.mxu0 0.0
      %635 = vmatmul.mubr.f32.gmra.mxu0 %v540
      %v636 = vpop.f32.mrf.mxu0
      %v637 = vadd.f32 0.0, %v636
      %v638 = vpop.f32.mrf.mxu0
      %v639 = vadd.f32 0.0, %v638
      %640 = vmatprep.mubr.f32.mxu0 0.0
      %641 = vmatmul.mubr.f32.gmra.mxu0 %v543
      %v642 = vpop.f32.mrf.mxu0
      %v643 = vadd.f32 0.0, %v642
      %v644 = vpop.f32.mrf.mxu0
      %v645 = vadd.f32 0.0, %v644
      %646 = vmatprep.mubr.f32.mxu0 0.0
      %647 = vmatmul.mubr.f32.gmra.mxu0 %v546
      %v648 = vpop.f32.mrf.mxu0
      %v649 = vadd.f32 0.0, %v648
      %v650 = vpop.f32.mrf.mxu0
      %v651 = vadd.f32 0.0, %v650
      %652 = vmatprep.mubr.f32.mxu0 0.0
      %653 = vmatmul.mubr.f32.gmra.mxu0 %v549
      %v654 = vpop.f32.mrf.mxu0
      %v655 = vadd.f32 0.0, %v654
      %v656 = vpop.f32.mrf.mxu0
      %v657 = vadd.f32 0.0, %v656
      %658 = vmatprep.mubr.f32.mxu0 0.0
      %659 = vmatmul.mubr.f32.gmra.mxu0 %v552
      %v660 = vpop.f32.mrf.mxu0
      %v661 = vadd.f32 0.0, %v660
      %v662 = vpop.f32.mrf.mxu0
      %v663 = vadd.f32 0.0, %v662
      %664 = vmatprep.mubr.f32.mxu0 0.0
      %665 = vmatmul.mubr.f32.gmra.mxu0 %v555
      %v666 = vpop.f32.mrf.mxu0
      %v667 = vadd.f32 0.0, %v666
      %v668 = vpop.f32.mrf.mxu0
      %v669 = vadd.f32 0.0, %v668
      %670 = vmatprep.mubr.f32.mxu0 0.0
      %671 = vmatmul.mubr.f32.gmra.mxu0 %v558
      %v672 = vpop.f32.mrf.mxu0
      %v673 = vadd.f32 0.0, %v672
      %v674 = vpop.f32.mrf.mxu0
      %v675 = vadd.f32 0.0, %v674
      %676 = vmatprep.mubr.f32.mxu0 0.0
      %677 = vmatmul.mubr.f32.gmra.mxu0 %v561
      %v678 = vpop.f32.mrf.mxu0
      %v679 = vadd.f32 0.0, %v678
      %v680 = vpop.f32.mrf.mxu0
      %v681 = vadd.f32 0.0, %v680
      %682 = vdwg.mxu0
      %v683 = vmax.f32 %v637, %v649
      %v684 = vmax.f32 %v639, %v651
      %v685 = vmax.f32 %v643, %v655
      %v686 = vmax.f32 %v645, %v657
      %v687 = vmax.f32 %v683, %v661
      %v688 = vmax.f32 %v684, %v663
      %v689 = vmax.f32 %v685, %v667
      %v690 = vmax.f32 %v686, %v669
      %v691 = vmax.f32 %v687, %v673
      %v692 = vmax.f32 %v688, %v675
      %v693 = vmax.f32 %v689, %v679
      %v694 = vmax.f32 %v690, %v681
      %696 = vset.pattern.permute.xlu0 0
      %697 = vperm.xlu0 %696, %v526
      %v698 = vpop.permute.xlu0 %697
      %701 = vset.pattern.permute.xlu0 0
      %702 = vperm.xlu0 %701, %v527
      %v703 = vpop.permute.xlu0 %702
      %v705 = vadd.f32 %v691, %v698
      %v706 = vadd.f32 %v692, %v698
      %v707 = vadd.f32 %v693, %v703
      %v708 = vadd.f32 %v694, %v703
      %v709 = vmax.f32 %v705, 0.0
      %v710 = vmax.f32 %v706, 0.0
      %v711 = vmax.f32 %v707, 0.0
      %v712 = vmax.f32 %v708, 0.0
      %713 = vst [vmem:[%s167] sm:$0xff] %v709
      %714 = vst [vmem:[%s167 + $0x8] sm:$0xff] %v710
      %715 = vst [vmem:[%s167 + $0x10] sm:$0x3] %v711
      %716 = vst [vmem:[%s167 + $0x18] sm:$0x3] %v712
      %p717 = scmp.lt.s32.totalorder %s14, 1
      %s718 = scalar_select %p717, %s14, 1
      %s719 = smul.addr %s718, 4
      %s720 = smul.addr %s719, 8
      %s721 = scalar_lea.vmem %s3, %s720
      // Predicated region
      $region33: #{net_forward.3} parent=31 // pred_check
        %p722 = pneg %p100
      $region34: #{net_forward.3} parent=31 // pred_check_branch
        %724 = sbr.rel (%p722) target = $region36
      $region35: #{net_forward.3} parent=31 // pred_region
        _
      $region36: #{net_forward.3} parent=31 // pred_fallthru
        _
    $region32: #{net_forward.3} parent=5 // pred_fallthru
      _
    %p725 = scmp.le.s32.totalorder 2, %s9
    // Predicated region
    $region37: #{net_forward.3} parent=5 // pred_check
      %p726 = pneg %p725
    $region38: #{net_forward.3} parent=5 // pred_check_branch
      %728 = sbr.rel (%p726) target = $region40
    $region39: #{net_forward.3} parent=5 // pred_region
      %s729 = ssub.s32 %s9, 2
      // Predicated region
      $region41: #{net_forward.3} parent=39 // pred_check
        %p730 = pneg %p106
      $region42: #{net_forward.3} parent=39 // pred_check_branch
        %732 = sbr.rel (%p730) target = $region44
      $region43: #{net_forward.3} parent=39 // pred_region
        %p733 = scmp.lt.s32.totalorder %s15, 1
        %s734 = scalar_select %p733, %s15, 1
        %s735 = smul.addr %s734, 4
        %s736 = smul.addr %s735, 8
        %s737 = scalar_lea.vmem %s3, %s736
      $region44: #{net_forward.3} parent=39 // pred_fallthru
        _
    $region40: #{net_forward.3} parent=5 // pred_fallthru
      _
  $region6: #{net_forward.3} parent=0 // loop_footer
    %s13 = sadd.s32 1, %s9
  $region7: #{net_forward.3} parent=0 // loop_footer_branch
    %8 = sbr.rel target = $region3
  $region8: #{net_forward.3} parent=0 // loop_exit
    _

// kernel: net_forward.5
$region0: #{net_forward.5}
  #allocation0 [shape = 'u32[]', space=smem, size = 0x4, offset = 0x4, fixed_abs, tag = 'smem constant byte address 0x4 - core index']
  #allocation1 [shape = 'u32[144,128]{1,0:T(1,128)}', space=vmem, size = 0x12000, scoped, tag = 'internal scratch']
  %s0 = inlined_call_operand.vmem [shape: f32[2,980], index: 0, kind: input, shape index: {}]
  %s1 = inlined_call_operand.vmem [shape: f32[10,980], index: 1, kind: input, shape index: {}]
  %s2 = inlined_call_operand.vmem [shape: f32[1,10], index: 2, kind: input, shape index: {}]
  %s3 = inlined_call_operand.hbm [shape: f32[2,10], index: 3, kind: output, shape index: {}]
  %s4 = sld [smem:[#allocation0]]
  $region22: #{net_forward.5} parent=0
    _
  %s6 = ssub.s32 1, %s4
  %s7 = scalar_select 0, %s6, %s4
  $region1: #{net_forward.5} parent=0
    #allocation2 [shape = 'u8[1024]{0}', space=vmem, size = 0x400, scoped, tag = 'output window, operand 0, single buffered']
    #allocation3 [shape = 's32[1]{0}', space=sflag, size = 0x4, scoped, tag = 'scoped memory for net_forward.5']
    %8 = vsyncpa [#allocation3], 0
    // Predicated region
    $region2: #{net_forward.5} parent=1 // pred_check
      _
    $region3: #{net_forward.5} parent=1 // pred_check_branch
      %10 = sbr.rel (0) target = $region5
    $region4: #{net_forward.5} parent=1 // pred_region
      _
    $region5: #{net_forward.5} parent=1 // pred_fallthru
      _
    // Predicated region
    $region6: #{net_forward.5} parent=1 // pred_check
      _
    $region7: #{net_forward.5} parent=1 // pred_check_branch
      %12 = sbr.rel (0) target = $region9
    $region8: #{net_forward.5} parent=1 // pred_region
      _
    $region9: #{net_forward.5} parent=1 // pred_fallthru
      _
    // Predicated region
    $region10: #{net_forward.5} parent=1 // pred_check
      _
    $region11: #{net_forward.5} parent=1 // pred_check_branch
      %14 = sbr.rel (0) target = $region13
    $region12: #{net_forward.5} parent=1 // pred_region
      _
    $region13: #{net_forward.5} parent=1 // pred_fallthru
      _
    %v15 = vld [vmem:[%s0] sm:$0xff]
    %v16 = vld [vmem:[%s0 + $0x8] sm:$0xff]
    %v17 = vld [vmem:[%s1] sm:$0xff]
    %v18 = vld [vmem:[%s1 + $0x8] sm:$0xff]
    %v19 = vld [vmem:[%s1 + $0x10] sm:$0xff]
    %v20 = vld [vmem:[%s1 + $0x18] sm:$0xff]
    %v21 = vld [vmem:[%s1 + $0x20] sm:$0xff]
    %v22 = vld [vmem:[%s1 + $0x28] sm:$0xff]
    %v23 = vld [vmem:[%s1 + $0x30] sm:$0xff]
    %v24 = vld [vmem:[%s1 + $0x38] sm:$0xff]
    %v25 = vld [vmem:[%s1 + $0x40] sm:$0x3]
    %v26 = vld [vmem:[%s1 + $0x48] sm:$0x3]
    %v27 = vld [vmem:[%s1 + $0x50] sm:$0x3]
    %v28 = vld [vmem:[%s1 + $0x58] sm:$0x3]
    %v29 = vld [vmem:[%s1 + $0x60] sm:$0x3]
    %v30 = vld [vmem:[%s1 + $0x68] sm:$0x3]
    %v31 = vld [vmem:[%s1 + $0x70] sm:$0x3]
    %v32 = vld [vmem:[%s1 + $0x78] sm:$0x3]
    %v33 = vld [vmem:[%s2] sm:$0x1]
    %v35 = vlaneseq
    %v36 = vshrl.u32 %v35, 7
    %v37 = vsub.s32 0, %v36
    %v38 = vrot.slane %v33, %v37
    %v42 = vcombine.high %v15, %v15
    %v44 = vunpack.c.l.s4 1983009808
    %v45 = vunpack.c.0.s8 %v44
    %v46 = vlaneseq
    %v47 = vshrl.u32 %v46, 7
    %v48 = vsub.s32 %v45, %v47
    %v49 = vrot.slane %v15, %v48
    %v51 = vunpack.c.l.s4 1983009808
    %v52 = vunpack.c.0.s8 %v51
    %v53 = vlaneseq
    %v54 = vshrl.u32 %v53, 7
    %v55 = vsub.s32 %v52, %v54
    %v56 = vrot.slane %v42, %v55
    %v57 = vcombine.high %v49, %v49
    %v58 = vcombine.high %v56, %v56
    %v59 = vcombine.high %v16, %v16
    %v61 = vunpack.c.l.s4 1983009808
    %v62 = vunpack.c.0.s8 %v61
    %v63 = vlaneseq
    %v64 = vshrl.u32 %v63, 7
    %v65 = vsub.s32 %v62, %v64
    %v66 = vrot.slane %v16, %v65
    %v68 = vunpack.c.l.s4 1983009808
    %v69 = vunpack.c.0.s8 %v68
    %v70 = vlaneseq
    %v71 = vshrl.u32 %v70, 7
    %v72 = vsub.s32 %v69, %v71
    %v73 = vrot.slane %v59, %v72
    %v74 = vcombine.high %v66, %v66
    %v75 = vcombine.high %v73, %v73
    %vm83 = vcmask 687104
    %v84 = vsel %vm83, %v75, 0
    %v87 = vsel %vm83, %v24, 0
    %v90 = vsel %vm83, %v32, 0
    %92 = vmatprep.subr.mxu0 0.0
    %93 = vmatpush1.xpose.msra.mxu0 0.0
    %94 = vmatprep.subr.mxu0 0.0
    %95 = vmatpush1.xpose.msra.mxu0 0.0
    %96 = vmatprep.subr.mxu0 0.0
    %97 = vmatpush1.xpose.msra.mxu0 0.0
    %98 = vmatprep.subr.mxu0 0.0
    %99 = vmatpush1.xpose.msra.mxu0 0.0
    %100 = vmatprep.subr.mxu0 0.0
    %101 = vmatpush1.xpose.msra.mxu0 0.0
    %102 = vmatprep.subr.mxu0 0.0
    %103 = vmatpush1.xpose.msra.mxu0 0.0
    %104 = vmatprep.subr.mxu0 0.0
    %105 = vmatpush1.xpose.msra.mxu0 0.0
    %106 = vmatprep.subr.mxu0 0.0
    %107 = vmatpush1.xpose.msra.mxu0 0.0
    %108 = vmatprep.subr.mxu0 0.0
    %109 = vmatpush1.xpose.msra.mxu0 0.0
    %110 = vmatprep.subr.mxu0 0.0
    %111 = vmatpush1.xpose.msra.mxu0 0.0
    %112 = vmatprep.subr.mxu0 0.0
    %113 = vmatpush1.xpose.msra.mxu0 0.0
    %114 = vmatprep.subr.mxu0 0.0
    %115 = vmatpush1.xpose.msra.mxu0 0.0
    %116 = vmatprep.subr.mxu0 0.0
    %117 = vmatpush1.xpose.msra.mxu0 0.0
    %118 = vmatprep.subr.mxu0 0.0
    %119 = vmatpush1.xpose.msra.mxu0 0.0
    %120 = vmatprep.subr.mxu0 %v26
    %121 = vmatpush1.xpose.msra.mxu0 %v25
    %122 = vmatprep.subr.mxu0 %v18
    %123 = vmatpush1.xpose.msra.mxu0 %v17
    %124 = vmatprep.subr.mxu0 0.0
    %125 = vmatpush2.xpose.msra.mxu0 0.0
    %126 = vmatprep.subr.mxu0 0.0
    %127 = vmatpush2.xpose.msra.mxu0 0.0
    %128 = vmatprep.subr.mxu0 0.0
    %129 = vmatpush2.xpose.msra.mxu0 0.0
    %130 = vmatprep.subr.mxu0 0.0
    %131 = vmatpush2.xpose.msra.mxu0 0.0
    %132 = vmatprep.subr.mxu0 0.0
    %133 = vmatpush2.xpose.msra.mxu0 0.0
    %134 = vmatprep.subr.mxu0 0.0
    %135 = vmatpush2.xpose.msra.mxu0 0.0
    %136 = vmatprep.subr.mxu0 0.0
    %137 = vmatpush2.xpose.msra.mxu0 0.0
    %138 = vmatprep.subr.mxu0 0.0
    %139 = vmatpush2.xpose.msra.mxu0 0.0
    %140 = vmatprep.subr.mxu0 0.0
    %141 = vmatpush2.xpose.msra.mxu0 0.0
    %142 = vmatprep.subr.mxu0 0.0
    %143 = vmatpush2.xpose.msra.mxu0 0.0
    %144 = vmatprep.subr.mxu0 0.0
    %145 = vmatpush2.xpose.msra.mxu0 0.0
    %146 = vmatprep.subr.mxu0 0.0
    %147 = vmatpush2.xpose.msra.mxu0 0.0
    %148 = vmatprep.subr.mxu0 0.0
    %149 = vmatpush2.xpose.msra.mxu0 0.0
    %150 = vmatprep.subr.mxu0 0.0
    %151 = vmatpush2.xpose.msra.mxu0 0.0
    %152 = vmatprep.subr.mxu0 0.0
    %153 = vmatpush2.xpose.msra.mxu0 0.0
    %154 = vmatprep.subr.mxu0 0.0
    %155 = vmatpush2.xpose.msra.mxu0 0.0
    %156 = vmatprep.mubr.f32.mxu0 %v57
    %157 = vmatmul.mubr.f32.gmra.mxu0 %v49
    %v158 = vpop.f32.mrf.mxu0
    %v159 = vadd.f32 %v38, %v158
    %v160 = vpop.f32.mrf.mxu0
    %161 = vdwg.mxu0
    %162 = vmatprep.subr.mxu0 0.0
    %163 = vmatpush1.xpose.msra.mxu0 0.0
    %164 = vmatprep.subr.mxu0 0.0
    %165 = vmatpush1.xpose.msra.mxu0 0.0
    %166 = vmatprep.subr.mxu0 0.0
    %167 = vmatpush1.xpose.msra.mxu0 0.0
    %168 = vmatprep.subr.mxu0 0.0
    %169 = vmatpush1.xpose.msra.mxu0 0.0
    %170 = vmatprep.subr.mxu0 0.0
    %171 = vmatpush1.xpose.msra.mxu0 0.0
    %172 = vmatprep.subr.mxu0 0.0
    %173 = vmatpush1.xpose.msra.mxu0 0.0
    %174 = vmatprep.subr.mxu0 0.0
    %175 = vmatpush1.xpose.msra.mxu0 0.0
    %176 = vmatprep.subr.mxu0 0.0
    %177 = vmatpush1.xpose.msra.mxu0 0.0
    %178 = vmatprep.subr.mxu0 0.0
    %179 = vmatpush1.xpose.msra.mxu0 0.0
    %180 = vmatprep.subr.mxu0 0.0
    %181 = vmatpush1.xpose.msra.mxu0 0.0
    %182 = vmatprep.subr.mxu0 0.0
    %183 = vmatpush1.xpose.msra.mxu0 0.0
    %184 = vmatprep.subr.mxu0 0.0
    %185 = vmatpush1.xpose.msra.mxu0 0.0
    %186 = vmatprep.subr.mxu0 0.0
    %187 = vmatpush1.xpose.msra.mxu0 0.0
    %188 = vmatprep.subr.mxu0 0.0
    %189 = vmatpush1.xpose.msra.mxu0 0.0
    %190 = vmatprep.subr.mxu0 %v28
    %191 = vmatpush1.xpose.msra.mxu0 %v27
    %192 = vmatprep.subr.mxu0 %v20
    %193 = vmatpush1.xpose.msra.mxu0 %v19
    %194 = vmatprep.subr.mxu0 0.0
    %195 = vmatpush2.xpose.msra.mxu0 0.0
    %196 = vmatprep.subr.mxu0 0.0
    %197 = vmatpush2.xpose.msra.mxu0 0.0
    %198 = vmatprep.subr.mxu0 0.0
    %199 = vmatpush2.xpose.msra.mxu0 0.0
    %200 = vmatprep.subr.mxu0 0.0
    %201 = vmatpush2.xpose.msra.mxu0 0.0
    %202 = vmatprep.subr.mxu0 0.0
    %203 = vmatpush2.xpose.msra.mxu0 0.0
    %204 = vmatprep.subr.mxu0 0.0
    %205 = vmatpush2.xpose.msra.mxu0 0.0
    %206 = vmatprep.subr.mxu0 0.0
    %207 = vmatpush2.xpose.msra.mxu0 0.0
    %208 = vmatprep.subr.mxu0 0.0
    %209 = vmatpush2.xpose.msra.mxu0 0.0
    %210 = vmatprep.subr.mxu0 0.0
    %211 = vmatpush2.xpose.msra.mxu0 0.0
    %212 = vmatprep.subr.mxu0 0.0
    %213 = vmatpush2.xpose.msra.mxu0 0.0
    %214 = vmatprep.subr.mxu0 0.0
    %215 = vmatpush2.xpose.msra.mxu0 0.0
    %216 = vmatprep.subr.mxu0 0.0
    %217 = vmatpush2.xpose.msra.mxu0 0.0
    %218 = vmatprep.subr.mxu0 0.0
    %219 = vmatpush2.xpose.msra.mxu0 0.0
    %220 = vmatprep.subr.mxu0 0.0
    %221 = vmatpush2.xpose.msra.mxu0 0.0
    %222 = vmatprep.subr.mxu0 0.0
    %223 = vmatpush2.xpose.msra.mxu0 0.0
    %224 = vmatprep.subr.mxu0 0.0
    %225 = vmatpush2.xpose.msra.mxu0 0.0
    %226 = vmatprep.mubr.f32.mxu0 %v58
    %227 = vmatmul.mubr.f32.gmra.mxu0 %v56
    %v228 = vpop.f32.mrf.mxu0
    %v229 = vadd.f32 %v159, %v228
    %v230 = vpop.f32.mrf.mxu0
    %231 = vdwg.mxu0
    %232 = vmatprep.subr.mxu0 0.0
    %233 = vmatpush1.xpose.msra.mxu0 0.0
    %234 = vmatprep.subr.mxu0 0.0
    %235 = vmatpush1.xpose.msra.mxu0 0.0
    %236 = vmatprep.subr.mxu0 0.0
    %237 = vmatpush1.xpose.msra.mxu0 0.0
    %238 = vmatprep.subr.mxu0 0.0
    %239 = vmatpush1.xpose.msra.mxu0 0.0
    %240 = vmatprep.subr.mxu0 0.0
    %241 = vmatpush1.xpose.msra.mxu0 0.0
    %242 = vmatprep.subr.mxu0 0.0
    %243 = vmatpush1.xpose.msra.mxu0 0.0
    %244 = vmatprep.subr.mxu0 0.0
    %245 = vmatpush1.xpose.msra.mxu0 0.0
    %246 = vmatprep.subr.mxu0 0.0
    %247 = vmatpush1.xpose.msra.mxu0 0.0
    %248 = vmatprep.subr.mxu0 0.0
    %249 = vmatpush1.xpose.msra.mxu0 0.0
    %250 = vmatprep.subr.mxu0 0.0
    %251 = vmatpush1.xpose.msra.mxu0 0.0
    %252 = vmatprep.subr.mxu0 0.0
    %253 = vmatpush1.xpose.msra.mxu0 0.0
    %254 = vmatprep.subr.mxu0 0.0
    %255 = vmatpush1.xpose.msra.mxu0 0.0
    %256 = vmatprep.subr.mxu0 0.0
    %257 = vmatpush1.xpose.msra.mxu0 0.0
    %258 = vmatprep.subr.mxu0 0.0
    %259 = vmatpush1.xpose.msra.mxu0 0.0
    %260 = vmatprep.subr.mxu0 %v30
    %261 = vmatpush1.xpose.msra.mxu0 %v29
    %262 = vmatprep.subr.mxu0 %v22
    %263 = vmatpush1.xpose.msra.mxu0 %v21
    %264 = vmatprep.subr.mxu0 0.0
    %265 = vmatpush2.xpose.msra.mxu0 0.0
    %266 = vmatprep.subr.mxu0 0.0
    %267 = vmatpush2.xpose.msra.mxu0 0.0
    %268 = vmatprep.subr.mxu0 0.0
    %269 = vmatpush2.xpose.msra.mxu0 0.0
    %270 = vmatprep.subr.mxu0 0.0
    %271 = vmatpush2.xpose.msra.mxu0 0.0
    %272 = vmatprep.subr.mxu0 0.0
    %273 = vmatpush2.xpose.msra.mxu0 0.0
    %274 = vmatprep.subr.mxu0 0.0
    %275 = vmatpush2.xpose.msra.mxu0 0.0
    %276 = vmatprep.subr.mxu0 0.0
    %277 = vmatpush2.xpose.msra.mxu0 0.0
    %278 = vmatprep.subr.mxu0 0.0
    %279 = vmatpush2.xpose.msra.mxu0 0.0
    %280 = vmatprep.subr.mxu0 0.0
    %281 = vmatpush2.xpose.msra.mxu0 0.0
    %282 = vmatprep.subr.mxu0 0.0
    %283 = vmatpush2.xpose.msra.mxu0 0.0
    %284 = vmatprep.subr.mxu0 0.0
    %285 = vmatpush2.xpose.msra.mxu0 0.0
    %286 = vmatprep.subr.mxu0 0.0
    %287 = vmatpush2.xpose.msra.mxu0 0.0
    %288 = vmatprep.subr.mxu0 0.0
    %289 = vmatpush2.xpose.msra.mxu0 0.0
    %290 = vmatprep.subr.mxu0 0.0
    %291 = vmatpush2.xpose.msra.mxu0 0.0
    %292 = vmatprep.subr.mxu0 0.0
    %293 = vmatpush2.xpose.msra.mxu0 0.0
    %294 = vmatprep.subr.mxu0 0.0
    %295 = vmatpush2.xpose.msra.mxu0 0.0
    %296 = vmatprep.mubr.f32.mxu0 %v74
    %297 = vmatmul.mubr.f32.gmra.mxu0 %v66
    %v298 = vpop.f32.mrf.mxu0
    %v299 = vadd.f32 %v229, %v298
    %v300 = vpop.f32.mrf.mxu0
    %301 = vdwg.mxu0
    %302 = vmatprep.subr.mxu0 0.0
    %303 = vmatpush1.xpose.msra.mxu0 0.0
    %304 = vmatprep.subr.mxu0 0.0
    %305 = vmatpush1.xpose.msra.mxu0 0.0
    %306 = vmatprep.subr.mxu0 0.0
    %307 = vmatpush1.xpose.msra.mxu0 0.0
    %308 = vmatprep.subr.mxu0 0.0
    %309 = vmatpush1.xpose.msra.mxu0 0.0
    %310 = vmatprep.subr.mxu0 0.0
    %311 = vmatpush1.xpose.msra.mxu0 0.0
    %312 = vmatprep.subr.mxu0 0.0
    %313 = vmatpush1.xpose.msra.mxu0 0.0
    %314 = vmatprep.subr.mxu0 0.0
    %315 = vmatpush1.xpose.msra.mxu0 0.0
    %316 = vmatprep.subr.mxu0 0.0
    %317 = vmatpush1.xpose.msra.mxu0 0.0
    %318 = vmatprep.subr.mxu0 0.0
    %319 = vmatpush1.xpose.msra.mxu0 0.0
    %320 = vmatprep.subr.mxu0 0.0
    %321 = vmatpush1.xpose.msra.mxu0 0.0
    %322 = vmatprep.subr.mxu0 0.0
    %323 = vmatpush1.xpose.msra.mxu0 0.0
    %324 = vmatprep.subr.mxu0 0.0
    %325 = vmatpush1.xpose.msra.mxu0 0.0
    %326 = vmatprep.subr.mxu0 0.0
    %327 = vmatpush1.xpose.msra.mxu0 0.0
    %328 = vmatprep.subr.mxu0 0.0
    %329 = vmatpush1.xpose.msra.mxu0 0.0
    %330 = vmatprep.subr.mxu0 %v90
    %331 = vmatpush1.xpose.msra.mxu0 %v31
    %332 = vmatprep.subr.mxu0 %v87
    %333 = vmatpush1.xpose.msra.mxu0 %v23
    %334 = vmatprep.subr.mxu0 0.0
    %335 = vmatpush2.xpose.msra.mxu0 0.0
    %336 = vmatprep.subr.mxu0 0.0
    %337 = vmatpush2.xpose.msra.mxu0 0.0
    %338 = vmatprep.subr.mxu0 0.0
    %339 = vmatpush2.xpose.msra.mxu0 0.0
    %340 = vmatprep.subr.mxu0 0.0
    %341 = vmatpush2.xpose.msra.mxu0 0.0
    %342 = vmatprep.subr.mxu0 0.0
    %343 = vmatpush2.xpose.msra.mxu0 0.0
    %344 = vmatprep.subr.mxu0 0.0
    %345 = vmatpush2.xpose.msra.mxu0 0.0
    %346 = vmatprep.subr.mxu0 0.0
    %347 = vmatpush2.xpose.msra.mxu0 0.0
    %348 = vmatprep.subr.mxu0 0.0
    %349 = vmatpush2.xpose.msra.mxu0 0.0
    %350 = vmatprep.subr.mxu0 0.0
    %351 = vmatpush2.xpose.msra.mxu0 0.0
    %352 = vmatprep.subr.mxu0 0.0
    %353 = vmatpush2.xpose.msra.mxu0 0.0
    %354 = vmatprep.subr.mxu0 0.0
    %355 = vmatpush2.xpose.msra.mxu0 0.0
    %356 = vmatprep.subr.mxu0 0.0
    %357 = vmatpush2.xpose.msra.mxu0 0.0
    %358 = vmatprep.subr.mxu0 0.0
    %359 = vmatpush2.xpose.msra.mxu0 0.0
    %360 = vmatprep.subr.mxu0 0.0
    %361 = vmatpush2.xpose.msra.mxu0 0.0
    %362 = vmatprep.subr.mxu0 0.0
    %363 = vmatpush2.xpose.msra.mxu0 0.0
    %364 = vmatprep.subr.mxu0 0.0
    %365 = vmatpush2.xpose.msra.mxu0 0.0
    %366 = vmatprep.mubr.f32.mxu0 %v84
    %367 = vmatmul.mubr.f32.gmra.mxu0 %v73
    %v368 = vpop.f32.mrf.mxu0
    %v369 = vadd.f32 %v299, %v368
    %v370 = vpop.f32.mrf.mxu0
    %371 = vdwg.mxu0
    %vm372 = vcmask 74752
    %v373 = vsel %vm372, %v369, -inf
    %374 = vmax.xlane.f32.xlu0 %v373
    %v375 = vpop.xlane.xlu0 %374
    %v376 = vsub.f32 %v369, %v375
    %v377 = vmul.f32 %v376, 1.442695
    %v378 = vpow.pop %v377
    %v379 = vsel %vm372, %v378, 0.0
    %380 = vadd.xlane.f32.xlu0 %v379
    %v381 = vpop.xlane.xlu0 %380
    %v382 = vlog2.pop %v381
    %v383 = vmul.f32 %v382, 0.6931472
    %v384 = vsub.f32 %v376, %v383
    %385 = vst.msk [vmem:[#allocation2] sm:$0x3] %vm372, %v384
    // Predicated region
    $region14: #{net_forward.5} parent=1 // pred_check
      _
    $region15: #{net_forward.5} parent=1 // pred_check_branch
      %387 = sbr.rel (0) target = $region17
    $region16: #{net_forward.5} parent=1 // pred_region
      %s389 = ssub.s32 32, 32
      %390 = vsyncadd [#allocation3], %s389
      %s392 = sshll.u32 [#allocation2], 4
      %s393 = int_to_ptr.vmem [resolvable:$true] %s392
      %395 = dma.vmem_to_hbm [thread:$0]  %s393, 32, %s3, [#allocation3]
    $region17: #{net_forward.5} parent=1 // pred_fallthru
      _
    // Predicated region
    $region18: #{net_forward.5} parent=1 // pred_check
      _
    $region19: #{net_forward.5} parent=1 // pred_check_branch
      %397 = sbr.rel (0) target = $region21
    $region20: #{net_forward.5} parent=1 // pred_region
      %398 = dma.done [#allocation3], 32
    $region21: #{net_forward.5} parent=1 // pred_fallthru
      _
    %399 = vsyncpa [#allocation3], 1

// kernel: net_forward.4
$region0: #{net_forward.4}
  #allocation0 [shape = 'u32[]', space=smem, size = 0x4, offset = 0x4, fixed_abs, tag = 'smem constant byte address 0x4 - core index']
  #allocation1 [shape = 'u32[144,128]{1,0:T(1,128)}', space=vmem, size = 0x12000, scoped, tag = 'internal scratch']
  #allocation2 [shape = 'f32[1,360,128]{2,1,0:T(8,128)}', space=vmem, size = 0x2d000, scoped, tag = 'scratch operand']
  %s0 = inlined_call_operand.vmem [shape: f32[2,4,10,256], index: 0, kind: input, shape index: {}]
  %s1 = inlined_call_operand.vmem [shape: f32[96,360], index: 1, kind: input, shape index: {}]
  %s2 = inlined_call_operand.vmem [shape: f32[20,1], index: 2, kind: input, shape index: {}]
  %s3 = inlined_call_operand.vmem [shape: f32[2,20,128], index: 3, kind: output, shape index: {}]
  %s4 = sld [smem:[#allocation0]]
  $region45: #{net_forward.4} parent=0
    _
  %s6 = ssub.s32 1, %s4
  %s7 = scalar_select 0, %s6, %s4
  loop: start=0, step=1, limit=4
  $region2: #{net_forward.4} parent=0 // loop_pre_header
    _
  $region3: #{net_forward.4} parent=0 // loop_header
    %s9 = sphi 0, %s13
    %p10 = scmp.ge.s32.totalorder %s9, 4
    %s19 = sphi 0, %s21
    %s22 = sphi 0, %s19
    %s23 = sphi 0, %s22
    %s39 = sphi 0, %s23
    %s43 = sphi 0, %s43
    %s45 = sphi 0, %s43
    %s46 = sphi 0, %s45
    %s60 = sphi 0, %s46
    %s64 = sphi 0, %s64
    %s66 = sphi 0, %s64
    %s67 = sphi 0, %s66
    %s81 = sphi 0, %s67
    %s87 = sphi 0, %s89
    %s90 = sphi 0, %s87
    %s91 = sphi 0, %s90
    %s107 = sphi 0, %s91
  $region4: #{net_forward.4} parent=0 // loop_header_branch
    %12 = sbr.rel (%p10) target = $region8
  $region5: #{net_forward.4} parent=0 // loop_body
    %s14 = ssub.s32 %s9, 1
    %s15 = ssub.s32 %s9, 2
    %s16 = sadd.s32 %s9, 1
    %s17 = ssub.s32 %s9, %s16
    %p18 = scmp.eq.s32.totalorder %s17, 0
    %s20 = sadd.s32 %s19, 1
    %s21 = scalar_select %p18, %s19, %s20
    %p24 = pneg %p18
    %p25 = scmp.eq.s32.totalorder %s9, 1
    %p26 = por %p24, %p25
    %p27 = scmp.ne.s32.totalorder %s19, %s22
    %p28 = scmp.eq.s32.totalorder %s9, 0
    %p29 = por %p27, %p28
    %p30 = scmp.ne.s32.totalorder %s19, %s22
    %p31 = scmp.eq.s32.totalorder %s14, 1
    %p32 = por %p30, %p31
    %p33 = scmp.ne.s32.totalorder %s22, %s23
    %p34 = scmp.eq.s32.totalorder %s14, 0
    %p35 = por %p33, %p34
    %p36 = scmp.ne.s32.totalorder %s22, %s23
    %p37 = scmp.eq.s32.totalorder %s15, 1
    %p38 = por %p36, %p37
    %p40 = scmp.ne.s32.totalorder %s23, %s39
    %p41 = scmp.eq.s32.totalorder %s15, 0
    %p42 = por %p40, %p41
    %s44 = sadd.s32 %s43, 1
    %p47 = scmp.eq.s32.totalorder %s9, 1
    %p48 = scmp.ne.s32.totalorder %s43, %s45
    %p49 = scmp.eq.s32.totalorder %s9, 0
    %p50 = por %p48, %p49
    %p51 = scmp.ne.s32.totalorder %s43, %s45
    %p52 = scmp.eq.s32.totalorder %s14, 1
    %p53 = por %p51, %p52
    %p54 = scmp.ne.s32.totalorder %s45, %s46
    %p55 = scmp.eq.s32.totalorder %s14, 0
    %p56 = por %p54, %p55
    %p57 = scmp.ne.s32.totalorder %s45, %s46
    %p58 = scmp.eq.s32.totalorder %s15, 1
    %p59 = por %p57, %p58
    %p61 = scmp.ne.s32.totalorder %s46, %s60
    %p62 = scmp.eq.s32.totalorder %s15, 0
    %p63 = por %p61, %p62
    %s65 = sadd.s32 %s64, 1
    %p68 = scmp.eq.s32.totalorder %s9, 1
    %p69 = scmp.ne.s32.totalorder %s64, %s66
    %p70 = scmp.eq.s32.totalorder %s9, 0
    %p71 = por %p69, %p70
    %p72 = scmp.ne.s32.totalorder %s64, %s66
    %p73 = scmp.eq.s32.totalorder %s14, 1
    %p74 = por %p72, %p73
    %p75 = scmp.ne.s32.totalorder %s66, %s67
    %p76 = scmp.eq.s32.totalorder %s14, 0
    %p77 = por %p75, %p76
    %p78 = scmp.ne.s32.totalorder %s66, %s67
    %p79 = scmp.eq.s32.totalorder %s15, 1
    %p80 = por %p78, %p79
    %p82 = scmp.ne.s32.totalorder %s67, %s81
    %p83 = scmp.eq.s32.totalorder %s15, 0
    %p84 = por %p82, %p83
    %s85 = ssub.s32 %s9, %s16
    %p86 = scmp.eq.s32.totalorder %s85, 0
    %s88 = sadd.s32 %s87, 1
    %s89 = scalar_select %p86, %s87, %s88
    %p92 = pneg %p86
    %p93 = scmp.eq.s32.totalorder %s9, 1
    %p94 = por %p92, %p93
    %p95 = scmp.ne.s32.totalorder %s87, %s90
    %p96 = scmp.eq.s32.totalorder %s9, 0
    %p97 = por %p95, %p96
    %p98 = scmp.ne.s32.totalorder %s87, %s90
    %p99 = scmp.eq.s32.totalorder %s14, 1
    %p100 = por %p98, %p99
    %p101 = scmp.ne.s32.totalorder %s90, %s91
    %p102 = scmp.eq.s32.totalorder %s14, 0
    %p103 = por %p101, %p102
    %p104 = scmp.ne.s32.totalorder %s90, %s91
    %p105 = scmp.eq.s32.totalorder %s15, 1
    %p106 = por %p104, %p105
    %p108 = scmp.ne.s32.totalorder %s91, %s107
    %p109 = scmp.eq.s32.totalorder %s15, 0
    %p110 = por %p108, %p109
    %p111 = scmp.le.s32.totalorder 1, %s9
    %p112 = scmp.lt.s32.totalorder %s9, 3
    %p113 = pnand %p111, %p112
    %p114 = pneg %p113
    // Predicated region
    $region9: #{net_forward.4} parent=5 // pred_check
      _
    $region10: #{net_forward.4} parent=5 // pred_check_branch
      %116 = sbr.rel (%p113) target = $region12
    $region11: #{net_forward.4} parent=5 // pred_region
      %s117 = ssub.s32 %s9, 1
      // Predicated region
      $region13: #{net_forward.4} parent=11 // pred_check
        %p118 = pneg %p56
      $region14: #{net_forward.4} parent=11 // pred_check_branch
        %120 = sbr.rel (%p118) target = $region16
      $region15: #{net_forward.4} parent=11 // pred_region
        _
      $region16: #{net_forward.4} parent=11 // pred_fallthru
        _
      // Predicated region
      $region17: #{net_forward.4} parent=11 // pred_check
        %p121 = pneg %p77
      $region18: #{net_forward.4} parent=11 // pred_check_branch
        %123 = sbr.rel (%p121) target = $region20
      $region19: #{net_forward.4} parent=11 // pred_region
        _
      $region20: #{net_forward.4} parent=11 // pred_fallthru
        _
    $region12: #{net_forward.4} parent=5 // pred_fallthru
      _
    %p124 = scmp.lt.s32.totalorder %s9, 2
    // Predicated region
    $region21: #{net_forward.4} parent=5 // pred_check
      %p125 = pneg %p124
    $region22: #{net_forward.4} parent=5 // pred_check_branch
      %127 = sbr.rel (%p125) target = $region24
    $region23: #{net_forward.4} parent=5 // pred_region
      // Predicated region
      $region25: #{net_forward.4} parent=23 // pred_check
        %p128 = pneg %p29
      $region26: #{net_forward.4} parent=23 // pred_check_branch
        %130 = sbr.rel (%p128) target = $region28
      $region27: #{net_forward.4} parent=23 // pred_region
        %p131 = scmp.lt.s32.totalorder %s9, 1
        %s132 = scalar_select %p131, %s9, 1
        %s133 = smul.addr %s132, 16
        %s134 = smul.addr %s133, 8
        %s135 = scalar_lea.vmem %s0, %s134
      $region28: #{net_forward.4} parent=23 // pred_fallthru
        _
    $region24: #{net_forward.4} parent=5 // pred_fallthru
      _
    %p136 = scmp.le.s32.totalorder 1, %s9
    %p137 = scmp.lt.s32.totalorder %s9, 3
    %p138 = pnand %p136, %p137
    %p139 = pneg %p138
    // Predicated region
    $region29: #{net_forward.4} parent=5 // pred_check
      _
    $region30: #{net_forward.4} parent=5 // pred_check_branch
      %141 = sbr.rel (%p138) target = $region32
    $region31: #{net_forward.4} parent=5 // pred_region
      %s142 = ssub.s32 %s9, 1
      %p143 = scmp.lt.s32.totalorder %s14, 1
      %s144 = scalar_select %p143, %s14, 1
      %s145 = smul.addr %s144, 16
      %s146 = smul.addr %s145, 8
      %s147 = scalar_lea.vmem %s0, %s146
      %p148 = pneg %p35
      %p149 = pneg %p32
      %p150 = pneg %p56
      %p151 = pneg %p53
      %p152 = pneg %p77
      %p153 = pneg %p74
      %p154 = pneg %p103
      %p155 = pneg %p100
      %p156 = scmp.lt.s32.totalorder %s14, 1
      %s157 = scalar_select %p156, %s14, 1
      %s158 = smul.addr %s157, 3
      %s159 = smul.addr %s158, 8
      %s160 = scalar_lea.vmem %s3, %s159
      %p161 = scmp.lt.s32.totalorder %s14, 1
      %s162 = scalar_select %p161, %s14, 1
      %s163 = smul.addr %s162, 16
      %s164 = smul.addr %s163, 8
      %s165 = scalar_lea.vmem %s0, %s164
      %p166 = scmp.lt.s32.totalorder %s14, 1
      %s167 = scalar_select %p166, %s14, 1
      %s168 = smul.addr %s167, 3
      %s169 = smul.addr %s168, 8
      %s170 = scalar_lea.vmem %s3, %s169
      %v171 = vld [vmem:[%s165] sm:$0xff]
      %v172 = vld [vmem:[%s165 + $0x10] sm:$0x3]
      %173 = vst [vmem:[#allocation2] sm:$0xff] %v171
      %174 = vst [vmem:[#allocation2 + $0x8] sm:$0x3] %v172
      %s175 = scalar_lea.vmem %s165, 32
      %v176 = vld [vmem:[%s175] sm:$0xff]
      %v177 = vld [vmem:[%s175 + $0x10] sm:$0x3]
      %178 = vst [vmem:[#allocation2 + $0xa] sm:$0xff] %v176
      %179 = vst [vmem:[#allocation2 + $0x12] sm:$0x3] %v177
      %v180 = vld [vmem:[%s165] sm:$0xff]
      %v181 = vld [vmem:[%s165 + $0x8] sm:$0xff]
      %v182 = vld [vmem:[%s165 + $0x10] sm:$0x3]
      %v183 = vld [vmem:[%s165 + $0x18] sm:$0x3]
      %188 = vrot.lane.b32.xlu0 %v180, 127
      %v189 = vpop.permute.xlu0 %188
      %190 = vrot.lane.b32.xlu0 %v181, 127
      %v191 = vpop.permute.xlu0 %190
      %192 = vrot.lane.b32.xlu0 %v182, 127
      %v193 = vpop.permute.xlu0 %192
      %194 = vrot.lane.b32.xlu0 %v183, 127
      %v195 = vpop.permute.xlu0 %194
      %vm196 = vcmask 1039360
      %v197 = vsel %vm196, %v189, %v191
      %v198 = vsel %vm196, %v193, %v195
      %201 = vst [vmem:[#allocation2 + $0x14] sm:$0xff] %v197
      %202 = vst [vmem:[#allocation2 + $0x1c] sm:$0x3] %v198
      %v203 = vld [vmem:[%s175] sm:$0xff]
      %v204 = vld [vmem:[%s175 + $0x8] sm:$0xff]
      %v205 = vld [vmem:[%s175 + $0x10] sm:$0x3]
      %v206 = vld [vmem:[%s175 + $0x18] sm:$0x3]
      %211 = vrot.lane.b32.xlu0 %v203, 127
      %v212 = vpop.permute.xlu0 %211
      %213 = vrot.lane.b32.xlu0 %v204, 127
      %v214 = vpop.permute.xlu0 %213
      %215 = vrot.lane.b32.xlu0 %v205, 127
      %v216 = vpop.permute.xlu0 %215
      %217 = vrot.lane.b32.xlu0 %v206, 127
      %v218 = vpop.permute.xlu0 %217
      %v219 = vsel %vm196, %v212, %v214
      %v220 = vsel %vm196, %v216, %v218
      %223 = vst [vmem:[#allocation2 + $0x1e] sm:$0xff] %v219
      %224 = vst [vmem:[#allocation2 + $0x26] sm:$0x3] %v220
      %v225 = vld [vmem:[%s165] sm:$0xff]
      %v226 = vld [vmem:[%s165 + $0x8] sm:$0xff]
      %v227 = vld [vmem:[%s165 + $0x10] sm:$0x3]
      %v228 = vld [vmem:[%s165 + $0x18] sm:$0x3]
      %233 = vrot.lane.b32.xlu0 %v225, 126
      %v234 = vpop.permute.xlu0 %233
      %235 = vrot.lane.b32.xlu0 %v226, 126
      %v236 = vpop.permute.xlu0 %235
      %237 = vrot.lane.b32.xlu0 %v227, 126
      %v238 = vpop.permute.xlu0 %237
      %239 = vrot.lane.b32.xlu0 %v228, 126
      %v240 = vpop.permute.xlu0 %239
      %vm241 = vcmask 1031168
      %v242 = vsel %vm241, %v234, %v236
      %v243 = vsel %vm241, %v238, %v240
      %246 = vst [vmem:[#allocation2 + $0x28] sm:$0xff] %v242
      %247 = vst [vmem:[#allocation2 + $0x30] sm:$0x3] %v243
      %v248 = vld [vmem:[%s175] sm:$0xff]
      %v249 = vld [vmem:[%s175 + $0x8] sm:$0xff]
      %v250 = vld [vmem:[%s175 + $0x10] sm:$0x3]
      %v251 = vld [vmem:[%s175 + $0x18] sm:$0x3]
      %256 = vrot.lane.b32.xlu0 %v248, 126
      %v257 = vpop.permute.xlu0 %256
      %258 = vrot.lane.b32.xlu0 %v249, 126
      %v259 = vpop.permute.xlu0 %258
      %260 = vrot.lane.b32.xlu0 %v250, 126
      %v261 = vpop.permute.xlu0 %260
      %262 = vrot.lane.b32.xlu0 %v251, 126
      %v263 = vpop.permute.xlu0 %262
      %v264 = vsel %vm241, %v257, %v259
      %v265 = vsel %vm241, %v261, %v263
      %268 = vst [vmem:[#allocation2 + $0x32] sm:$0xff] %v264
      %269 = vst [vmem:[#allocation2 + $0x3a] sm:$0x3] %v265
      %s270 = scalar_lea.vmem %s165, 64
      %v271 = vld [vmem:[%s270] sm:$0xff]
      %v272 = vld [vmem:[%s270 + $0x10] sm:$0x3]
      %273 = vst [vmem:[#allocation2 + $0x3c] sm:$0xff] %v271
      %274 = vst [vmem:[#allocation2 + $0x44] sm:$0x3] %v272
      %s275 = scalar_lea.vmem %s165, 96
      %v276 = vld [vmem:[%s275] sm:$0xff]
      %v277 = vld [vmem:[%s275 + $0x10] sm:$0x3]
      %278 = vst [vmem:[#allocation2 + $0x46] sm:$0xff] %v276
      %279 = vst [vmem:[#allocation2 + $0x4e] sm:$0x3] %v277
      %v280 = vld [vmem:[%s270] sm:$0xff]
      %v281 = vld [vmem:[%s270 + $0x8] sm:$0xff]
      %v282 = vld [vmem:[%s270 + $0x10] sm:$0x3]
      %v283 = vld [vmem:[%s270 + $0x18] sm:$0x3]
      %288 = vrot.lane.b32.xlu0 %v280, 127
      %v289 = vpop.permute.xlu0 %288
      %290 = vrot.lane.b32.xlu0 %v281, 127
      %v291 = vpop.permute.xlu0 %290
      %292 = vrot.lane.b32.xlu0 %v282, 127
      %v293 = vpop.permute.xlu0 %292
      %294 = vrot.lane.b32.xlu0 %v283, 127
      %v295 = vpop.permute.xlu0 %294
      %v296 = vsel %vm196, %v289, %v291
      %v297 = vsel %vm196, %v293, %v295
      %300 = vst [vmem:[#allocation2 + $0x50] sm:$0xff] %v296
      %301 = vst [vmem:[#allocation2 + $0x58] sm:$0x3] %v297
      %v302 = vld [vmem:[%s275] sm:$0xff]
      %v303 = vld [vmem:[%s275 + $0x8] sm:$0xff]
      %v304 = vld [vmem:[%s275 + $0x10] sm:$0x3]
      %v305 = vld [vmem:[%s275 + $0x18] sm:$0x3]
      %310 = vrot.lane.b32.xlu0 %v302, 127
      %v311 = vpop.permute.xlu0 %310
      %312 = vrot.lane.b32.xlu0 %v303, 127
      %v313 = vpop.permute.xlu0 %312
      %314 = vrot.lane.b32.xlu0 %v304, 127
      %v315 = vpop.permute.xlu0 %314
      %316 = vrot.lane.b32.xlu0 %v305, 127
      %v317 = vpop.permute.xlu0 %316
      %v318 = vsel %vm196, %v311, %v313
      %v319 = vsel %vm196, %v315, %v317
      %322 = vst [vmem:[#allocation2 + $0x5a] sm:$0xff] %v318
      %323 = vst [vmem:[#allocation2 + $0x62] sm:$0x3] %v319
      %v324 = vld [vmem:[%s270] sm:$0xff]
      %v325 = vld [vmem:[%s270 + $0x8] sm:$0xff]
      %v326 = vld [vmem:[%s270 + $0x10] sm:$0x3]
      %v327 = vld [vmem:[%s270 + $0x18] sm:$0x3]
      %332 = vrot.lane.b32.xlu0 %v324, 126
      %v333 = vpop.permute.xlu0 %332
      %334 = vrot.lane.b32.xlu0 %v325, 126
      %v335 = vpop.permute.xlu0 %334
      %336 = vrot.lane.b32.xlu0 %v326, 126
      %v337 = vpop.permute.xlu0 %336
      %338 = vrot.lane.b32.xlu0 %v327, 126
      %v339 = vpop.permute.xlu0 %338
      %v340 = vsel %vm241, %v333, %v335
      %v341 = vsel %vm241, %v337, %v339
      %344 = vst [vmem:[#allocation2 + $0x64] sm:$0xff] %v340
      %345 = vst [vmem:[#allocation2 + $0x6c] sm:$0x3] %v341
      %v346 = vld [vmem:[%s275] sm:$0xff]
      %v347 = vld [vmem:[%s275 + $0x8] sm:$0xff]
      %v348 = vld [vmem:[%s275 + $0x10] sm:$0x3]
      %v349 = vld [vmem:[%s275 + $0x18] sm:$0x3]
      %354 = vrot.lane.b32.xlu0 %v346, 126
      %v355 = vpop.permute.xlu0 %354
      %356 = vrot.lane.b32.xlu0 %v347, 126
      %v357 = vpop.permute.xlu0 %356
      %358 = vrot.lane.b32.xlu0 %v348, 126
      %v359 = vpop.permute.xlu0 %358
      %360 = vrot.lane.b32.xlu0 %v349, 126
      %v361 = vpop.permute.xlu0 %360
      %v362 = vsel %vm241, %v355, %v357
      %v363 = vsel %vm241, %v359, %v361
      %366 = vst [vmem:[#allocation2 + $0x6e] sm:$0xff] %v362
      %367 = vst [vmem:[#allocation2 + $0x76] sm:$0x3] %v363
      %v368 = vld [vmem:[%s165] sm:$0xff]
      %v369 = vld [vmem:[%s165 + $0x8] sm:$0xff]
      %v370 = vld [vmem:[%s165 + $0x10] sm:$0x3]
      %v371 = vld [vmem:[%s165 + $0x18] sm:$0x3]
      %376 = vrot.lane.b32.xlu0 %v368, 119
      %v377 = vpop.permute.xlu0 %376
      %378 = vrot.lane.b32.xlu0 %v369, 119
      %v379 = vpop.permute.xlu0 %378
      %380 = vrot.lane.b32.xlu0 %v370, 119
      %v381 = vpop.permute.xlu0 %380
      %382 = vrot.lane.b32.xlu0 %v371, 119
      %v383 = vpop.permute.xlu0 %382
      %vm384 = vcmask 973824
      %v385 = vsel %vm384, %v377, %v379
      %v386 = vsel %vm384, %v381, %v383
      %389 = vst [vmem:[#allocation2 + $0x78] sm:$0xff] %v385
      %390 = vst [vmem:[#allocation2 + $0x80] sm:$0x3] %v386
      %v391 = vld [vmem:[%s175] sm:$0xff]
      %v392 = vld [vmem:[%s175 + $0x8] sm:$0xff]
      %v393 = vld [vmem:[%s175 + $0x10] sm:$0x3]
      %v394 = vld [vmem:[%s175 + $0x18] sm:$0x3]
      %399 = vrot.lane.b32.xlu0 %v391, 119
      %v400 = vpop.permute.xlu0 %399
      %401 = vrot.lane.b32.xlu0 %v392, 119
      %v402 = vpop.permute.xlu0 %401
      %403 = vrot.lane.b32.xlu0 %v393, 119
      %v404 = vpop.permute.xlu0 %403
      %405 = vrot.lane.b32.xlu0 %v394, 119
      %v406 = vpop.permute.xlu0 %405
      %v407 = vsel %vm384, %v400, %v402
      %v408 = vsel %vm384, %v404, %v406
      %411 = vst [vmem:[#allocation2 + $0x82] sm:$0xff] %v407
      %412 = vst [vmem:[#allocation2 + $0x8a] sm:$0x3] %v408
      %v413 = vld [vmem:[%s165] sm:$0xff]
      %v414 = vld [vmem:[%s165 + $0x8] sm:$0xff]
      %v415 = vld [vmem:[%s165 + $0x10] sm:$0x3]
      %v416 = vld [vmem:[%s165 + $0x18] sm:$0x3]
      %421 = vrot.lane.b32.xlu0 %v413, 118
      %v422 = vpop.permute.xlu0 %421
      %423 = vrot.lane.b32.xlu0 %v414, 118
      %v424 = vpop.permute.xlu0 %423
      %425 = vrot.lane.b32.xlu0 %v415, 118
      %v426 = vpop.permute.xlu0 %425
      %427 = vrot.lane.b32.xlu0 %v416, 118
      %v428 = vpop.permute.xlu0 %427
      %vm429 = vcmask 965632
      %v430 = vsel %vm429, %v422, %v424
      %v431 = vsel %vm429, %v426, %v428
      %434 = vst [vmem:[#allocation2 + $0x8c] sm:$0xff] %v430
      %435 = vst [vmem:[#allocation2 + $0x94] sm:$0x3] %v431
      %v436 = vld [vmem:[%s175] sm:$0xff]
      %v437 = vld [vmem:[%s175 + $0x8] sm:$0xff]
      %v438 = vld [vmem:[%s175 + $0x10] sm:$0x3]
      %v439 = vld [vmem:[%s175 + $0x18] sm:$0x3]
      %444 = vrot.lane.b32.xlu0 %v436, 118
      %v445 = vpop.permute.xlu0 %444
      %446 = vrot.lane.b32.xlu0 %v437, 118
      %v447 = vpop.permute.xlu0 %446
      %448 = vrot.lane.b32.xlu0 %v438, 118
      %v449 = vpop.permute.xlu0 %448
      %450 = vrot.lane.b32.xlu0 %v439, 118
      %v451 = vpop.permute.xlu0 %450
      %v452 = vsel %vm429, %v445, %v447
      %v453 = vsel %vm429, %v449, %v451
      %456 = vst [vmem:[#allocation2 + $0x96] sm:$0xff] %v452
      %457 = vst [vmem:[#allocation2 + $0x9e] sm:$0x3] %v453
      %v458 = vld [vmem:[%s165] sm:$0xff]
      %v459 = vld [vmem:[%s165 + $0x8] sm:$0xff]
      %v460 = vld [vmem:[%s165 + $0x10] sm:$0x3]
      %v461 = vld [vmem:[%s165 + $0x18] sm:$0x3]
      %466 = vrot.lane.b32.xlu0 %v458, 117
      %v467 = vpop.permute.xlu0 %466
      %468 = vrot.lane.b32.xlu0 %v459, 117
      %v469 = vpop.permute.xlu0 %468
      %470 = vrot.lane.b32.xlu0 %v460, 117
      %v471 = vpop.permute.xlu0 %470
      %472 = vrot.lane.b32.xlu0 %v461, 117
      %v473 = vpop.permute.xlu0 %472
      %vm474 = vcmask 957440
      %v475 = vsel %vm474, %v467, %v469
      %v476 = vsel %vm474, %v471, %v473
      %479 = vst [vmem:[#allocation2 + $0xa0] sm:$0xff] %v475
      %480 = vst [vmem:[#allocation2 + $0xa8] sm:$0x3] %v476
      %v481 = vld [vmem:[%s175] sm:$0xff]
      %v482 = vld [vmem:[%s175 + $0x8] sm:$0xff]
      %v483 = vld [vmem:[%s175 + $0x10] sm:$0x3]
      %v484 = vld [vmem:[%s175 + $0x18] sm:$0x3]
      %489 = vrot.lane.b32.xlu0 %v481, 117
      %v490 = vpop.permute.xlu0 %489
      %491 = vrot.lane.b32.xlu0 %v482, 117
      %v492 = vpop.permute.xlu0 %491
      %493 = vrot.lane.b32.xlu0 %v483, 117
      %v494 = vpop.permute.xlu0 %493
      %495 = vrot.lane.b32.xlu0 %v484, 117
      %v496 = vpop.permute.xlu0 %495
      %v497 = vsel %vm474, %v490, %v492
      %v498 = vsel %vm474, %v494, %v496
      %501 = vst [vmem:[#allocation2 + $0xaa] sm:$0xff] %v497
      %502 = vst [vmem:[#allocation2 + $0xb2] sm:$0x3] %v498
      %v503 = vld [vmem:[%s270] sm:$0xff]
      %v504 = vld [vmem:[%s270 + $0x8] sm:$0xff]
      %v505 = vld [vmem:[%s270 + $0x10] sm:$0x3]
      %v506 = vld [vmem:[%s270 + $0x18] sm:$0x3]
      %511 = vrot.lane.b32.xlu0 %v503, 119
      %v512 = vpop.permute.xlu0 %511
      %513 = vrot.lane.b32.xlu0 %v504, 119
      %v514 = vpop.permute.xlu0 %513
      %515 = vrot.lane.b32.xlu0 %v505, 119
      %v516 = vpop.permute.xlu0 %515
      %517 = vrot.lane.b32.xlu0 %v506, 119
      %v518 = vpop.permute.xlu0 %517
      %v519 = vsel %vm384, %v512, %v514
      %v520 = vsel %vm384, %v516, %v518
      %523 = vst [vmem:[#allocation2 + $0xb4] sm:$0xff] %v519
      %524 = vst [vmem:[#allocation2 + $0xbc] sm:$0x3] %v520
      %v525 = vld [vmem:[%s275] sm:$0xff]
      %v526 = vld [vmem:[%s275 + $0x8] sm:$0xff]
      %v527 = vld [vmem:[%s275 + $0x10] sm:$0x3]
      %v528 = vld [vmem:[%s275 + $0x18] sm:$0x3]
      %533 = vrot.lane.b32.xlu0 %v525, 119
      %v534 = vpop.permute.xlu0 %533
      %535 = vrot.lane.b32.xlu0 %v526, 119
      %v536 = vpop.permute.xlu0 %535
      %537 = vrot.lane.b32.xlu0 %v527, 119
      %v538 = vpop.permute.xlu0 %537
      %539 = vrot.lane.b32.xlu0 %v528, 119
      %v540 = vpop.permute.xlu0 %539
      %v541 = vsel %vm384, %v534, %v536
      %v542 = vsel %vm384, %v538, %v540
      %545 = vst [vmem:[#allocation2 + $0xbe] sm:$0xff] %v541
      %546 = vst [vmem:[#allocation2 + $0xc6] sm:$0x3] %v542
      %v547 = vld [vmem:[%s270] sm:$0xff]
      %v548 = vld [vmem:[%s270 + $0x8] sm:$0xff]
      %v549 = vld [vmem:[%s270 + $0x10] sm:$0x3]
      %v550 = vld [vmem:[%s270 + $0x18] sm:$0x3]
      %555 = vrot.lane.b32.xlu0 %v547, 118
      %v556 = vpop.permute.xlu0 %555
      %557 = vrot.lane.b32.xlu0 %v548, 118
      %v558 = vpop.permute.xlu0 %557
      %559 = vrot.lane.b32.xlu0 %v549, 118
      %v560 = vpop.permute.xlu0 %559
      %561 = vrot.lane.b32.xlu0 %v550, 118
      %v562 = vpop.permute.xlu0 %561
      %v563 = vsel %vm429, %v556, %v558
      %v564 = vsel %vm429, %v560, %v562
      %567 = vst [vmem:[#allocation2 + $0xc8] sm:$0xff] %v563
      %568 = vst [vmem:[#allocation2 + $0xd0] sm:$0x3] %v564
      %v569 = vld [vmem:[%s275] sm:$0xff]
      %v570 = vld [vmem:[%s275 + $0x8] sm:$0xff]
      %v571 = vld [vmem:[%s275 + $0x10] sm:$0x3]
      %v572 = vld [vmem:[%s275 + $0x18] sm:$0x3]
      %577 = vrot.lane.b32.xlu0 %v569, 118
      %v578 = vpop.permute.xlu0 %577
      %579 = vrot.lane.b32.xlu0 %v570, 118
      %v580 = vpop.permute.xlu0 %579
      %581 = vrot.lane.b32.xlu0 %v571, 118
      %v582 = vpop.permute.xlu0 %581
      %583 = vrot.lane.b32.xlu0 %v572, 118
      %v584 = vpop.permute.xlu0 %583
      %v585 = vsel %vm429, %v578, %v580
      %v586 = vsel %vm429, %v582, %v584
      %589 = vst [vmem:[#allocation2 + $0xd2] sm:$0xff] %v585
      %590 = vst [vmem:[#allocation2 + $0xda] sm:$0x3] %v586
      %v591 = vld [vmem:[%s270] sm:$0xff]
      %v592 = vld [vmem:[%s270 + $0x8] sm:$0xff]
      %v593 = vld [vmem:[%s270 + $0x10] sm:$0x3]
      %v594 = vld [vmem:[%s270 + $0x18] sm:$0x3]
      %599 = vrot.lane.b32.xlu0 %v591, 117
      %v600 = vpop.permute.xlu0 %599
      %601 = vrot.lane.b32.xlu0 %v592, 117
      %v602 = vpop.permute.xlu0 %601
      %603 = vrot.lane.b32.xlu0 %v593, 117
      %v604 = vpop.permute.xlu0 %603
      %605 = vrot.lane.b32.xlu0 %v594, 117
      %v606 = vpop.permute.xlu0 %605
      %v607 = vsel %vm474, %v600, %v602
      %v608 = vsel %vm474, %v604, %v606
      %611 = vst [vmem:[#allocation2 + $0xdc] sm:$0xff] %v607
      %612 = vst [vmem:[#allocation2 + $0xe4] sm:$0x3] %v608
      %v613 = vld [vmem:[%s275] sm:$0xff]
      %v614 = vld [vmem:[%s275 + $0x8] sm:$0xff]
      %v615 = vld [vmem:[%s275 + $0x10] sm:$0x3]
      %v616 = vld [vmem:[%s275 + $0x18] sm:$0x3]
      %621 = vrot.lane.b32.xlu0 %v613, 117
      %v622 = vpop.permute.xlu0 %621
      %623 = vrot.lane.b32.xlu0 %v614, 117
      %v624 = vpop.permute.xlu0 %623
      %625 = vrot.lane.b32.xlu0 %v615, 117
      %v626 = vpop.permute.xlu0 %625
      %627 = vrot.lane.b32.xlu0 %v616, 117
      %v628 = vpop.permute.xlu0 %627
      %v629 = vsel %vm474, %v622, %v624
      %v630 = vsel %vm474, %v626, %v628
      %633 = vst [vmem:[#allocation2 + $0xe6] sm:$0xff] %v629
      %634 = vst [vmem:[#allocation2 + $0xee] sm:$0x3] %v630
      %v635 = vld [vmem:[%s165] sm:$0xff]
      %v636 = vld [vmem:[%s165 + $0x8] sm:$0xff]
      %v637 = vld [vmem:[%s165 + $0x10] sm:$0x3]
      %v638 = vld [vmem:[%s165 + $0x18] sm:$0x3]
      %643 = vrot.lane.b32.xlu0 %v635, 110
      %v644 = vpop.permute.xlu0 %643
      %645 = vrot.lane.b32.xlu0 %v636, 110
      %v646 = vpop.permute.xlu0 %645
      %647 = vrot.lane.b32.xlu0 %v637, 110
      %v648 = vpop.permute.xlu0 %647
      %649 = vrot.lane.b32.xlu0 %v638, 110
      %v650 = vpop.permute.xlu0 %649
      %vm651 = vcmask 900096
      %v652 = vsel %vm651, %v644, %v646
      %v653 = vsel %vm651, %v648, %v650
      %656 = vst [vmem:[#allocation2 + $0xf0] sm:$0xff] %v652
      %657 = vst [vmem:[#allocation2 + $0xf8] sm:$0x3] %v653
      %v658 = vld [vmem:[%s175] sm:$0xff]
      %v659 = vld [vmem:[%s175 + $0x8] sm:$0xff]
      %v660 = vld [vmem:[%s175 + $0x10] sm:$0x3]
      %v661 = vld [vmem:[%s175 + $0x18] sm:$0x3]
      %666 = vrot.lane.b32.xlu0 %v658, 110
      %v667 = vpop.permute.xlu0 %666
      %668 = vrot.lane.b32.xlu0 %v659, 110
      %v669 = vpop.permute.xlu0 %668
      %670 = vrot.lane.b32.xlu0 %v660, 110
      %v671 = vpop.permute.xlu0 %670
      %672 = vrot.lane.b32.xlu0 %v661, 110
      %v673 = vpop.permute.xlu0 %672
      %v674 = vsel %vm651, %v667, %v669
      %v675 = vsel %vm651, %v671, %v673
      %678 = vst [vmem:[#allocation2 + $0xfa] sm:$0xff] %v674
      %679 = vst [vmem:[#allocation2 + $0x102] sm:$0x3] %v675
      %v680 = vld [vmem:[%s165] sm:$0xff]
      %v681 = vld [vmem:[%s165 + $0x8] sm:$0xff]
      %v682 = vld [vmem:[%s165 + $0x10] sm:$0x3]
      %v683 = vld [vmem:[%s165 + $0x18] sm:$0x3]
      %688 = vrot.lane.b32.xlu0 %v680, 109
      %v689 = vpop.permute.xlu0 %688
      %690 = vrot.lane.b32.xlu0 %v681, 109
      %v691 = vpop.permute.xlu0 %690
      %692 = vrot.lane.b32.xlu0 %v682, 109
      %v693 = vpop.permute.xlu0 %692
      %694 = vrot.lane.b32.xlu0 %v683, 109
      %v695 = vpop.permute.xlu0 %694
      %vm696 = vcmask 891904
      %v697 = vsel %vm696, %v689, %v691
      %v698 = vsel %vm696, %v693, %v695
      %701 = vst [vmem:[#allocation2 + $0x104] sm:$0xff] %v697
      %702 = vst [vmem:[#allocation2 + $0x10c] sm:$0x3] %v698
      %v703 = vld [vmem:[%s175] sm:$0xff]
      %v704 = vld [vmem:[%s175 + $0x8] sm:$0xff]
      %v705 = vld [vmem:[%s175 + $0x10] sm:$0x3]
      %v706 = vld [vmem:[%s175 + $0x18] sm:$0x3]
      %711 = vrot.lane.b32.xlu0 %v703, 109
      %v712 = vpop.permute.xlu0 %711
      %713 = vrot.lane.b32.xlu0 %v704, 109
      %v714 = vpop.permute.xlu0 %713
      %715 = vrot.lane.b32.xlu0 %v705, 109
      %v716 = vpop.permute.xlu0 %715
      %717 = vrot.lane.b32.xlu0 %v706, 109
      %v718 = vpop.permute.xlu0 %717
      %v719 = vsel %vm696, %v712, %v714
      %v720 = vsel %vm696, %v716, %v718
      %723 = vst [vmem:[#allocation2 + $0x10e] sm:$0xff] %v719
      %724 = vst [vmem:[#allocation2 + $0x116] sm:$0x3] %v720
      %v725 = vld [vmem:[%s165] sm:$0xff]
      %v726 = vld [vmem:[%s165 + $0x8] sm:$0xff]
      %v727 = vld [vmem:[%s165 + $0x10] sm:$0x3]
      %v728 = vld [vmem:[%s165 + $0x18] sm:$0x3]
      %733 = vrot.lane.b32.xlu0 %v725, 108
      %v734 = vpop.permute.xlu0 %733
      %735 = vrot.lane.b32.xlu0 %v726, 108
      %v736 = vpop.permute.xlu0 %735
      %737 = vrot.lane.b32.xlu0 %v727, 108
      %v738 = vpop.permute.xlu0 %737
      %739 = vrot.lane.b32.xlu0 %v728, 108
      %v740 = vpop.permute.xlu0 %739
      %vm741 = vcmask 883712
      %v742 = vsel %vm741, %v734, %v736
      %v743 = vsel %vm741, %v738, %v740
      %746 = vst [vmem:[#allocation2 + $0x118] sm:$0xff] %v742
      %747 = vst [vmem:[#allocation2 + $0x120] sm:$0x3] %v743
      %v748 = vld [vmem:[%s175] sm:$0xff]
      %v749 = vld [vmem:[%s175 + $0x8] sm:$0xff]
      %v750 = vld [vmem:[%s175 + $0x10] sm:$0x3]
      %v751 = vld [vmem:[%s175 + $0x18] sm:$0x3]
      %756 = vrot.lane.b32.xlu0 %v748, 108
      %v757 = vpop.permute.xlu0 %756
      %758 = vrot.lane.b32.xlu0 %v749, 108
      %v759 = vpop.permute.xlu0 %758
      %760 = vrot.lane.b32.xlu0 %v750, 108
      %v761 = vpop.permute.xlu0 %760
      %762 = vrot.lane.b32.xlu0 %v751, 108
      %v763 = vpop.permute.xlu0 %762
      %v764 = vsel %vm741, %v757, %v759
      %v765 = vsel %vm741, %v761, %v763
      %768 = vst [vmem:[#allocation2 + $0x122] sm:$0xff] %v764
      %769 = vst [vmem:[#allocation2 + $0x12a] sm:$0x3] %v765
      %v770 = vld [vmem:[%s270] sm:$0xff]
      %v771 = vld [vmem:[%s270 + $0x8] sm:$0xff]
      %v772 = vld [vmem:[%s270 + $0x10] sm:$0x3]
      %v773 = vld [vmem:[%s270 + $0x18] sm:$0x3]
      %778 = vrot.lane.b32.xlu0 %v770, 110
      %v779 = vpop.permute.xlu0 %778
      %780 = vrot.lane.b32.xlu0 %v771, 110
      %v781 = vpop.permute.xlu0 %780
      %782 = vrot.lane.b32.xlu0 %v772, 110
      %v783 = vpop.permute.xlu0 %782
      %784 = vrot.lane.b32.xlu0 %v773, 110
      %v785 = vpop.permute.xlu0 %784
      %v786 = vsel %vm651, %v779, %v781
      %v787 = vsel %vm651, %v783, %v785
      %790 = vst [vmem:[#allocation2 + $0x12c] sm:$0xff] %v786
      %791 = vst [vmem:[#allocation2 + $0x134] sm:$0x3] %v787
      %v792 = vld [vmem:[%s275] sm:$0xff]
      %v793 = vld [vmem:[%s275 + $0x8] sm:$0xff]
      %v794 = vld [vmem:[%s275 + $0x10] sm:$0x3]
      %v795 = vld [vmem:[%s275 + $0x18] sm:$0x3]
      %800 = vrot.lane.b32.xlu0 %v792, 110
      %v801 = vpop.permute.xlu0 %800
      %802 = vrot.lane.b32.xlu0 %v793, 110
      %v803 = vpop.permute.xlu0 %802
      %804 = vrot.lane.b32.xlu0 %v794, 110
      %v805 = vpop.permute.xlu0 %804
      %806 = vrot.lane.b32.xlu0 %v795, 110
      %v807 = vpop.permute.xlu0 %806
      %v808 = vsel %vm651, %v801, %v803
      %v809 = vsel %vm651, %v805, %v807
      %812 = vst [vmem:[#allocation2 + $0x136] sm:$0xff] %v808
      %813 = vst [vmem:[#allocation2 + $0x13e] sm:$0x3] %v809
      %v814 = vld [vmem:[%s270] sm:$0xff]
      %v815 = vld [vmem:[%s270 + $0x8] sm:$0xff]
      %v816 = vld [vmem:[%s270 + $0x10] sm:$0x3]
      %v817 = vld [vmem:[%s270 + $0x18] sm:$0x3]
      %822 = vrot.lane.b32.xlu0 %v814, 109
      %v823 = vpop.permute.xlu0 %822
      %824 = vrot.lane.b32.xlu0 %v815, 109
      %v825 = vpop.permute.xlu0 %824
      %826 = vrot.lane.b32.xlu0 %v816, 109
      %v827 = vpop.permute.xlu0 %826
      %828 = vrot.lane.b32.xlu0 %v817, 109
      %v829 = vpop.permute.xlu0 %828
      %v830 = vsel %vm696, %v823, %v825
      %v831 = vsel %vm696, %v827, %v829
      %834 = vst [vmem:[#allocation2 + $0x140] sm:$0xff] %v830
      %835 = vst [vmem:[#allocation2 + $0x148] sm:$0x3] %v831
      %v836 = vld [vmem:[%s275] sm:$0xff]
      %v837 = vld [vmem:[%s275 + $0x8] sm:$0xff]
      %v838 = vld [vmem:[%s275 + $0x10] sm:$0x3]
      %v839 = vld [vmem:[%s275 + $0x18] sm:$0x3]
      %844 = vrot.lane.b32.xlu0 %v836, 109
      %v845 = vpop.permute.xlu0 %844
      %846 = vrot.lane.b32.xlu0 %v837, 109
      %v847 = vpop.permute.xlu0 %846
      %848 = vrot.lane.b32.xlu0 %v838, 109
      %v849 = vpop.permute.xlu0 %848
      %850 = vrot.lane.b32.xlu0 %v839, 109
      %v851 = vpop.permute.xlu0 %850
      %v852 = vsel %vm696, %v845, %v847
      %v853 = vsel %vm696, %v849, %v851
      %856 = vst [vmem:[#allocation2 + $0x14a] sm:$0xff] %v852
      %857 = vst [vmem:[#allocation2 + $0x152] sm:$0x3] %v853
      %v858 = vld [vmem:[%s270] sm:$0xff]
      %v859 = vld [vmem:[%s270 + $0x8] sm:$0xff]
      %v860 = vld [vmem:[%s270 + $0x10] sm:$0x3]
      %v861 = vld [vmem:[%s270 + $0x18] sm:$0x3]
      %866 = vrot.lane.b32.xlu0 %v858, 108
      %v867 = vpop.permute.xlu0 %866
      %868 = vrot.lane.b32.xlu0 %v859, 108
      %v869 = vpop.permute.xlu0 %868
      %870 = vrot.lane.b32.xlu0 %v860, 108
      %v871 = vpop.permute.xlu0 %870
      %872 = vrot.lane.b32.xlu0 %v861, 108
      %v873 = vpop.permute.xlu0 %872
      %v874 = vsel %vm741, %v867, %v869
      %v875 = vsel %vm741, %v871, %v873
      %878 = vst [vmem:[#allocation2 + $0x154] sm:$0xff] %v874
      %879 = vst [vmem:[#allocation2 + $0x15c] sm:$0x3] %v875
      %v880 = vld [vmem:[%s275] sm:$0xff]
      %v881 = vld [vmem:[%s275 + $0x8] sm:$0xff]
      %v882 = vld [vmem:[%s275 + $0x10] sm:$0x3]
      %v883 = vld [vmem:[%s275 + $0x18] sm:$0x3]
      %888 = vrot.lane.b32.xlu0 %v880, 108
      %v889 = vpop.permute.xlu0 %888
      %890 = vrot.lane.b32.xlu0 %v881, 108
      %v891 = vpop.permute.xlu0 %890
      %892 = vrot.lane.b32.xlu0 %v882, 108
      %v893 = vpop.permute.xlu0 %892
      %894 = vrot.lane.b32.xlu0 %v883, 108
      %v895 = vpop.permute.xlu0 %894
      %v896 = vsel %vm741, %v889, %v891
      %v897 = vsel %vm741, %v893, %v895
      %900 = vst [vmem:[#allocation2 + $0x15e] sm:$0xff] %v896
      %901 = vst [vmem:[#allocation2 + $0x166] sm:$0x3] %v897
      %v902 = vld [vmem:[%s1] sm:$0xff]
      %v903 = vld [vmem:[%s1 + $0x8] sm:$0xff]
      %v904 = vld [vmem:[%s1 + $0x10] sm:$0xff]
      %v905 = vld [vmem:[%s1 + $0x18] sm:$0xff]
      %v906 = vld [vmem:[%s1 + $0x20] sm:$0xff]
      %v907 = vld [vmem:[%s1 + $0x28] sm:$0xff]
      %v908 = vld [vmem:[%s1 + $0x30] sm:$0xff]
      %v909 = vld [vmem:[%s1 + $0x38] sm:$0xff]
      %v910 = vld [vmem:[%s1 + $0x40] sm:$0xff]
      %v911 = vld [vmem:[%s1 + $0x48] sm:$0xff]
      %v912 = vld [vmem:[%s1 + $0x50] sm:$0xff]
      %v913 = vld [vmem:[%s1 + $0x58] sm:$0xff]
      %v914 = vld [vmem:[%s1 + $0x60] sm:$0xff]
      %v915 = vld [vmem:[%s1 + $0x68] sm:$0xff]
      %v916 = vld [vmem:[%s1 + $0x70] sm:$0xff]
      %v917 = vld [vmem:[%s1 + $0x78] sm:$0xff]
      %v918 = vld [vmem:[%s1 + $0x80] sm:$0xff]
      %v919 = vld [vmem:[%s1 + $0x88] sm:$0xff]
      %v920 = vld [vmem:[%s1 + $0x90] sm:$0xff]
      %v921 = vld [vmem:[%s1 + $0x98] sm:$0xff]
      %v922 = vld [vmem:[%s1 + $0xa0] sm:$0xff]
      %v923 = vld [vmem:[%s1 + $0xa8] sm:$0xff]
      %v924 = vld [vmem:[%s1 + $0xb0] sm:$0xff]
      %v925 = vld [vmem:[%s1 + $0xb8] sm:$0xff]
      %v926 = vld [vmem:[%s1 + $0xc0] sm:$0xff]
      %v927 = vld [vmem:[%s1 + $0xc8] sm:$0xff]
      %v928 = vld [vmem:[%s1 + $0xd0] sm:$0xff]
      %v929 = vld [vmem:[%s1 + $0xd8] sm:$0xff]
      %v930 = vld [vmem:[%s1 + $0xe0] sm:$0xff]
      %v931 = vld [vmem:[%s1 + $0xe8] sm:$0xff]
      %v932 = vld [vmem:[%s1 + $0xf0] sm:$0xff]
      %v933 = vld [vmem:[%s1 + $0xf8] sm:$0xff]
      %v934 = vld [vmem:[%s1 + $0x100] sm:$0xff]
      %v935 = vld [vmem:[%s1 + $0x108] sm:$0xff]
      %v936 = vld [vmem:[%s1 + $0x110] sm:$0xff]
      %v937 = vld [vmem:[%s1 + $0x118] sm:$0xff]
      %v938 = vld [vmem:[%s2] sm:$0xff]
      %v939 = vld [vmem:[%s2 + $0x8] sm:$0xff]
      %v940 = vld [vmem:[%s2 + $0x10] sm:$0xf]
      %v941 = vld [vmem:[#allocation2] sm:$0xff]
      %v942 = vld [vmem:[#allocation2 + $0x8] sm:$0xff]
      %v943 = vld [vmem:[#allocation2 + $0x10] sm:$0xff]
      %v944 = vld [vmem:[#allocation2 + $0x18] sm:$0xff]
      %v945 = vld [vmem:[#allocation2 + $0x20] sm:$0xff]
      %v946 = vld [vmem:[#allocation2 + $0x28] sm:$0xff]
      %v947 = vld [vmem:[#allocation2 + $0x30] sm:$0xff]
      %v948 = vld [vmem:[#allocation2 + $0x38] sm:$0xff]
      %v949 = vld [vmem:[#allocation2 + $0x40] sm:$0xff]
      %v950 = vld [vmem:[#allocation2 + $0x48] sm:$0xff]
      %v951 = vld [vmem:[#allocation2 + $0x50] sm:$0xff]
      %v952 = vld [vmem:[#allocation2 + $0x58] sm:$0xff]
      %v953 = vld [vmem:[#allocation2 + $0x60] sm:$0xff]
      %v954 = vld [vmem:[#allocation2 + $0x68] sm:$0xff]
      %v955 = vld [vmem:[#allocation2 + $0x70] sm:$0xff]
      %v956 = vld [vmem:[#allocation2 + $0x78] sm:$0xff]
      %v957 = vld [vmem:[#allocation2 + $0x80] sm:$0xff]
      %v958 = vld [vmem:[#allocation2 + $0x88] sm:$0xff]
      %v959 = vld [vmem:[#allocation2 + $0x90] sm:$0xff]
      %v960 = vld [vmem:[#allocation2 + $0x98] sm:$0xff]
      %v961 = vld [vmem:[#allocation2 + $0xa0] sm:$0xff]
      %v962 = vld [vmem:[#allocation2 + $0xa8] sm:$0xff]
      %v963 = vld [vmem:[#allocation2 + $0xb0] sm:$0xff]
      %v964 = vld [vmem:[#allocation2 + $0xb8] sm:$0xff]
      %v965 = vld [vmem:[#allocation2 + $0xc0] sm:$0xff]
      %v966 = vld [vmem:[#allocation2 + $0xc8] sm:$0xff]
      %v967 = vld [vmem:[#allocation2 + $0xd0] sm:$0xff]
      %v968 = vld [vmem:[#allocation2 + $0xd8] sm:$0xff]
      %v969 = vld [vmem:[#allocation2 + $0xe0] sm:$0xff]
      %v970 = vld [vmem:[#allocation2 + $0xe8] sm:$0xff]
      %v971 = vld [vmem:[#allocation2 + $0xf0] sm:$0xff]
      %v972 = vld [vmem:[#allocation2 + $0xf8] sm:$0xff]
      %v973 = vld [vmem:[#allocation2 + $0x100] sm:$0xff]
      %v974 = vld [vmem:[#allocation2 + $0x108] sm:$0xff]
      %v975 = vld [vmem:[#allocation2 + $0x110] sm:$0xff]
      %v976 = vld [vmem:[#allocation2 + $0x118] sm:$0xff]
      %v977 = vld [vmem:[#allocation2 + $0x120] sm:$0xff]
      %v978 = vld [vmem:[#allocation2 + $0x128] sm:$0xff]
      %v979 = vld [vmem:[#allocation2 + $0x130] sm:$0xff]
      %v980 = vld [vmem:[#allocation2 + $0x138] sm:$0xff]
      %v981 = vld [vmem:[#allocation2 + $0x140] sm:$0xff]
      %v982 = vld [vmem:[#allocation2 + $0x148] sm:$0xff]
      %v983 = vld [vmem:[#allocation2 + $0x150] sm:$0xff]
      %v984 = vld [vmem:[#allocation2 + $0x158] sm:$0xff]
      %v985 = vld [vmem:[#allocation2 + $0x160] sm:$0xff]
      %vm986 = vcmask 850944
      %v988 = vsel %vm986, %v904, 0
      %v991 = vsel %vm986, %v907, 0
      %v994 = vsel %vm986, %v910, 0
      %v997 = vsel %vm986, %v913, 0
      %v1000 = vsel %vm986, %v916, 0
      %v1003 = vsel %vm986, %v919, 0
      %v1006 = vsel %vm986, %v922, 0
      %v1009 = vsel %vm986, %v925, 0
      %v1012 = vsel %vm986, %v928, 0
      %v1015 = vsel %vm986, %v931, 0
      %v1018 = vsel %vm986, %v934, 0
      %v1021 = vsel %vm986, %v937, 0
      %1023 = vmatprep.subr.mxu0 0.0
      %1024 = vmatpush1.msra.mxu0 %v956
      %1025 = vmatprep.subr.mxu0 0.0
      %1026 = vmatpush1.msra.mxu0 %v955
      %1027 = vmatprep.subr.mxu0 0.0
      %1028 = vmatpush1.msra.mxu0 %v954
      %1029 = vmatprep.subr.mxu0 0.0
      %1030 = vmatpush1.msra.mxu0 %v953
      %1031 = vmatprep.subr.mxu0 0.0
      %1032 = vmatpush1.msra.mxu0 %v952
      %1033 = vmatprep.subr.mxu0 0.0
      %1034 = vmatpush1.msra.mxu0 %v951
      %1035 = vmatprep.subr.mxu0 0.0
      %1036 = vmatpush1.msra.mxu0 %v950
      %1037 = vmatprep.subr.mxu0 0.0
      %1038 = vmatpush1.msra.mxu0 %v949
      %1039 = vmatprep.subr.mxu0 0.0
      %1040 = vmatpush1.msra.mxu0 %v948
      %1041 = vmatprep.subr.mxu0 0.0
      %1042 = vmatpush1.msra.mxu0 %v947
      %1043 = vmatprep.subr.mxu0 0.0
      %1044 = vmatpush1.msra.mxu0 %v946
      %1045 = vmatprep.subr.mxu0 0.0
      %1046 = vmatpush1.msra.mxu0 %v945
      %1047 = vmatprep.subr.mxu0 0.0
      %1048 = vmatpush1.msra.mxu0 %v944
      %1049 = vmatprep.subr.mxu0 0.0
      %1050 = vmatpush1.msra.mxu0 %v943
      %1051 = vmatprep.subr.mxu0 0.0
      %1052 = vmatpush1.msra.mxu0 %v942
      %1053 = vmatprep.subr.mxu0 0.0
      %1054 = vmatpush1.msra.mxu0 %v941
      %1055 = vmatprep.subr.mxu0 0.0
      %1056 = vmatpush2.msra.mxu0 %v972
      %1057 = vmatprep.subr.mxu0 0.0
      %1058 = vmatpush2.msra.mxu0 %v971
      %1059 = vmatprep.subr.mxu0 0.0
      %1060 = vmatpush2.msra.mxu0 %v970
      %1061 = vmatprep.subr.mxu0 0.0
      %1062 = vmatpush2.msra.mxu0 %v969
      %1063 = vmatprep.subr.mxu0 0.0
      %1064 = vmatpush2.msra.mxu0 %v968
      %1065 = vmatprep.subr.mxu0 0.0
      %1066 = vmatpush2.msra.mxu0 %v967
      %1067 = vmatprep.subr.mxu0 0.0
      %1068 = vmatpush2.msra.mxu0 %v966
      %1069 = vmatprep.subr.mxu0 0.0
      %1070 = vmatpush2.msra.mxu0 %v965
      %1071 = vmatprep.subr.mxu0 0.0
      %1072 = vmatpush2.msra.mxu0 %v964
      %1073 = vmatprep.subr.mxu0 0.0
      %1074 = vmatpush2.msra.mxu0 %v963
      %1075 = vmatprep.subr.mxu0 0.0
      %1076 = vmatpush2.msra.mxu0 %v962
      %1077 = vmatprep.subr.mxu0 0.0
      %1078 = vmatpush2.msra.mxu0 %v961
      %1079 = vmatprep.subr.mxu0 0.0
      %1080 = vmatpush2.msra.mxu0 %v960
      %1081 = vmatprep.subr.mxu0 0.0
      %1082 = vmatpush2.msra.mxu0 %v959
      %1083 = vmatprep.subr.mxu0 0.0
      %1084 = vmatpush2.msra.mxu0 %v958
      %1085 = vmatprep.subr.mxu0 0.0
      %1086 = vmatpush2.msra.mxu0 %v957
      %1087 = vmatprep.mubr.f32.mxu0 %v903
      %1088 = vmatmul.mubr.f32.gmra.mxu0 %v902
      %v1089 = vpop.f32.mrf.mxu0
      %v1090 = vadd.f32 0.0, %v1089
      %v1091 = vpop.f32.mrf.mxu0
      %1092 = vmatprep.mubr.f32.mxu0 %v906
      %1093 = vmatmul.mubr.f32.gmra.mxu0 %v905
      %v1094 = vpop.f32.mrf.mxu0
      %v1095 = vadd.f32 0.0, %v1094
      %v1096 = vpop.f32.mrf.mxu0
      %1097 = vmatprep.mubr.f32.mxu0 %v909
      %1098 = vmatmul.mubr.f32.gmra.mxu0 %v908
      %v1099 = vpop.f32.mrf.mxu0
      %v1100 = vadd.f32 0.0, %v1099
      %v1101 = vpop.f32.mrf.mxu0
      %1102 = vmatprep.mubr.f32.mxu0 %v912
      %1103 = vmatmul.mubr.f32.gmra.mxu0 %v911
      %v1104 = vpop.f32.mrf.mxu0
      %v1105 = vadd.f32 0.0, %v1104
      %v1106 = vpop.f32.mrf.mxu0
      %1107 = vmatprep.mubr.f32.mxu0 %v915
      %1108 = vmatmul.mubr.f32.gmra.mxu0 %v914
      %v1109 = vpop.f32.mrf.mxu0
      %v1110 = vadd.f32 0.0, %v1109
      %v1111 = vpop.f32.mrf.mxu0
      %1112 = vmatprep.mubr.f32.mxu0 %v918
      %1113 = vmatmul.mubr.f32.gmra.mxu0 %v917
      %v1114 = vpop.f32.mrf.mxu0
      %v1115 = vadd.f32 0.0, %v1114
      %v1116 = vpop.f32.mrf.mxu0
      %1117 = vmatprep.mubr.f32.mxu0 %v921
      %1118 = vmatmul.mubr.f32.gmra.mxu0 %v920
      %v1119 = vpop.f32.mrf.mxu0
      %v1120 = vadd.f32 0.0, %v1119
      %v1121 = vpop.f32.mrf.mxu0
      %1122 = vmatprep.mubr.f32.mxu0 %v924
      %1123 = vmatmul.mubr.f32.gmra.mxu0 %v923
      %v1124 = vpop.f32.mrf.mxu0
      %v1125 = vadd.f32 0.0, %v1124
      %v1126 = vpop.f32.mrf.mxu0
      %1127 = vmatprep.mubr.f32.mxu0 %v927
      %1128 = vmatmul.mubr.f32.gmra.mxu0 %v926
      %v1129 = vpop.f32.mrf.mxu0
      %v1130 = vadd.f32 0.0, %v1129
      %v1131 = vpop.f32.mrf.mxu0
      %1132 = vmatprep.mubr.f32.mxu0 %v930
      %1133 = vmatmul.mubr.f32.gmra.mxu0 %v929
      %v1134 = vpop.f32.mrf.mxu0
      %v1135 = vadd.f32 0.0, %v1134
      %v1136 = vpop.f32.mrf.mxu0
      %1137 = vmatprep.mubr.f32.mxu0 %v933
      %1138 = vmatmul.mubr.f32.gmra.mxu0 %v932
      %v1139 = vpop.f32.mrf.mxu0
      %v1140 = vadd.f32 0.0, %v1139
      %v1141 = vpop.f32.mrf.mxu0
      %1142 = vmatprep.mubr.f32.mxu0 %v936
      %1143 = vmatmul.mubr.f32.gmra.mxu0 %v935
      %v1144 = vpop.f32.mrf.mxu0
      %v1145 = vadd.f32 0.0, %v1144
      %v1146 = vpop.f32.mrf.mxu0
      %1147 = vdwg.mxu0
      %1148 = vmatprep.subr.mxu0 0.0
      %1149 = vmatpush1.msra.mxu0 0.0
      %1150 = vmatprep.subr.mxu0 0.0
      %1151 = vmatpush1.msra.mxu0 0.0
      %1152 = vmatprep.subr.mxu0 0.0
      %1153 = vmatpush1.msra.mxu0 0.0
      %1154 = vmatprep.subr.mxu0 0.0
      %1155 = vmatpush1.msra.mxu0 %v985
      %1156 = vmatprep.subr.mxu0 0.0
      %1157 = vmatpush1.msra.mxu0 %v984
      %1158 = vmatprep.subr.mxu0 0.0
      %1159 = vmatpush1.msra.mxu0 %v983
      %1160 = vmatprep.subr.mxu0 0.0
      %1161 = vmatpush1.msra.mxu0 %v982
      %1162 = vmatprep.subr.mxu0 0.0
      %1163 = vmatpush1.msra.mxu0 %v981
      %1164 = vmatprep.subr.mxu0 0.0
      %1165 = vmatpush1.msra.mxu0 %v980
      %1166 = vmatprep.subr.mxu0 0.0
      %1167 = vmatpush1.msra.mxu0 %v979
      %1168 = vmatprep.subr.mxu0 0.0
      %1169 = vmatpush1.msra.mxu0 %v978
      %1170 = vmatprep.subr.mxu0 0.0
      %1171 = vmatpush1.msra.mxu0 %v977
      %1172 = vmatprep.subr.mxu0 0.0
      %1173 = vmatpush1.msra.mxu0 %v976
      %1174 = vmatprep.subr.mxu0 0.0
      %1175 = vmatpush1.msra.mxu0 %v975
      %1176 = vmatprep.subr.mxu0 0.0
      %1177 = vmatpush1.msra.mxu0 %v974
      %1178 = vmatprep.subr.mxu0 0.0
      %1179 = vmatpush1.msra.mxu0 %v973
      %1180 = vmatprep.subr.mxu0 0.0
      %1181 = vmatpush2.msra.mxu0 0.0
      %1182 = vmatprep.subr.mxu0 0.0
      %1183 = vmatpush2.msra.mxu0 0.0
      %1184 = vmatprep.subr.mxu0 0.0
      %1185 = vmatpush2.msra.mxu0 0.0
      %1186 = vmatprep.subr.mxu0 0.0
      %1187 = vmatpush2.msra.mxu0 0.0
      %1188 = vmatprep.subr.mxu0 0.0
      %1189 = vmatpush2.msra.mxu0 0.0
      %1190 = vmatprep.subr.mxu0 0.0
      %1191 = vmatpush2.msra.mxu0 0.0
      %1192 = vmatprep.subr.mxu0 0.0
      %1193 = vmatpush2.msra.mxu0 0.0
      %1194 = vmatprep.subr.mxu0 0.0
      %1195 = vmatpush2.msra.mxu0 0.0
      %1196 = vmatprep.subr.mxu0 0.0
      %1197 = vmatpush2.msra.mxu0 0.0
      %1198 = vmatprep.subr.mxu0 0.0
      %1199 = vmatpush2.msra.mxu0 0.0
      %1200 = vmatprep.subr.mxu0 0.0
      %1201 = vmatpush2.msra.mxu0 0.0
      %1202 = vmatprep.subr.mxu0 0.0
      %1203 = vmatpush2.msra.mxu0 0.0
      %1204 = vmatprep.subr.mxu0 0.0
      %1205 = vmatpush2.msra.mxu0 0.0
      %1206 = vmatprep.subr.mxu0 0.0
      %1207 = vmatpush2.msra.mxu0 0.0
      %1208 = vmatprep.subr.mxu0 0.0
      %1209 = vmatpush2.msra.mxu0 0.0
      %1210 = vmatprep.subr.mxu0 0.0
      %1211 = vmatpush2.msra.mxu0 0.0
      %1212 = vmatprep.mubr.f32.mxu0 0.0
      %1213 = vmatmul.mubr.f32.gmra.mxu0 %v988
      %v1214 = vpop.f32.mrf.mxu0
      %v1215 = vadd.f32 %v1090, %v1214
      %v1216 = vpop.f32.mrf.mxu0
      %1217 = vmatprep.mubr.f32.mxu0 0.0
      %1218 = vmatmul.mubr.f32.gmra.mxu0 %v991
      %v1219 = vpop.f32.mrf.mxu0
      %v1220 = vadd.f32 %v1095, %v1219
      %v1221 = vpop.f32.mrf.mxu0
      %1222 = vmatprep.mubr.f32.mxu0 0.0
      %1223 = vmatmul.mubr.f32.gmra.mxu0 %v994
      %v1224 = vpop.f32.mrf.mxu0
      %v1225 = vadd.f32 %v1100, %v1224
      %v1226 = vpop.f32.mrf.mxu0
      %1227 = vmatprep.mubr.f32.mxu0 0.0
      %1228 = vmatmul.mubr.f32.gmra.mxu0 %v997
      %v1229 = vpop.f32.mrf.mxu0
      %v1230 = vadd.f32 %v1105, %v1229
      %v1231 = vpop.f32.mrf.mxu0
      %1232 = vmatprep.mubr.f32.mxu0 0.0
      %1233 = vmatmul.mubr.f32.gmra.mxu0 %v1000
      %v1234 = vpop.f32.mrf.mxu0
      %v1235 = vadd.f32 %v1110, %v1234
      %v1236 = vpop.f32.mrf.mxu0
      %1237 = vmatprep.mubr.f32.mxu0 0.0
      %1238 = vmatmul.mubr.f32.gmra.mxu0 %v1003
      %v1239 = vpop.f32.mrf.mxu0
      %v1240 = vadd.f32 %v1115, %v1239
      %v1241 = vpop.f32.mrf.mxu0
      %1242 = vmatprep.mubr.f32.mxu0 0.0
      %1243 = vmatmul.mubr.f32.gmra.mxu0 %v1006
      %v1244 = vpop.f32.mrf.mxu0
      %v1245 = vadd.f32 %v1120, %v1244
      %v1246 = vpop.f32.mrf.mxu0
      %1247 = vmatprep.mubr.f32.mxu0 0.0
      %1248 = vmatmul.mubr.f32.gmra.mxu0 %v1009
      %v1249 = vpop.f32.mrf.mxu0
      %v1250 = vadd.f32 %v1125, %v1249
      %v1251 = vpop.f32.mrf.mxu0
      %1252 = vmatprep.mubr.f32.mxu0 0.0
      %1253 = vmatmul.mubr.f32.gmra.mxu0 %v1012
      %v1254 = vpop.f32.mrf.mxu0
      %v1255 = vadd.f32 %v1130, %v1254
      %v1256 = vpop.f32.mrf.mxu0
      %1257 = vmatprep.mubr.f32.mxu0 0.0
      %1258 = vmatmul.mubr.f32.gmra.mxu0 %v1015
      %v1259 = vpop.f32.mrf.mxu0
      %v1260 = vadd.f32 %v1135, %v1259
      %v1261 = vpop.f32.mrf.mxu0
      %1262 = vmatprep.mubr.f32.mxu0 0.0
      %1263 = vmatmul.mubr.f32.gmra.mxu0 %v1018
      %v1264 = vpop.f32.mrf.mxu0
      %v1265 = vadd.f32 %v1140, %v1264
      %v1266 = vpop.f32.mrf.mxu0
      %1267 = vmatprep.mubr.f32.mxu0 0.0
      %1268 = vmatmul.mubr.f32.gmra.mxu0 %v1021
      %v1269 = vpop.f32.mrf.mxu0
      %v1270 = vadd.f32 %v1145, %v1269
      %v1271 = vpop.f32.mrf.mxu0
      %1272 = vdwg.mxu0
      %v1273 = vmax.f32 %v1215, %v1230
      %v1274 = vmax.f32 %v1220, %v1235
      %v1275 = vmax.f32 %v1225, %v1240
      %v1276 = vmax.f32 %v1273, %v1245
      %v1277 = vmax.f32 %v1274, %v1250
      %v1278 = vmax.f32 %v1275, %v1255
      %v1279 = vmax.f32 %v1276, %v1260
      %v1280 = vmax.f32 %v1277, %v1265
      %v1281 = vmax.f32 %v1278, %v1270
      %1283 = vset.pattern.permute.xlu0 0
      %1284 = vperm.xlu0 %1283, %v938
      %v1285 = vpop.permute.xlu0 %1284
      %1288 = vset.pattern.permute.xlu0 0
      %1289 = vperm.xlu0 %1288, %v939
      %v1290 = vpop.permute.xlu0 %1289
      %1293 = vset.pattern.permute.xlu0 0
      %1294 = vperm.xlu0 %1293, %v940
      %v1295 = vpop.permute.xlu0 %1294
      %v1297 = vadd.f32 %v1279, %v1285
      %v1298 = vadd.f32 %v1280, %v1290
      %v1299 = vadd.f32 %v1281, %v1295
      %v1300 = vmax.f32 %v1297, 0.0
      %v1301 = vmax.f32 %v1298, 0.0
      %v1302 = vmax.f32 %v1299, 0.0
      %1303 = vst [vmem:[%s170] sm:$0xff] %v1300
      %1304 = vst [vmem:[%s170 + $0x8] sm:$0xff] %v1301
      %1305 = vst [vmem:[%s170 + $0x10] sm:$0xf] %v1302
      %p1306 = scmp.lt.s32.totalorder %s14, 1
      %s1307 = scalar_select %p1306, %s14, 1
      %s1308 = smul.addr %s1307, 3
      %s1309 = smul.addr %s1308, 8
      %s1310 = scalar_lea.vmem %s3, %s1309
      // Predicated region
      $region33: #{net_forward.4} parent=31 // pred_check
        %p1311 = pneg %p100
      $region34: #{net_forward.4} parent=31 // pred_check_branch
        %1313 = sbr.rel (%p1311) target = $region36
      $region35: #{net_forward.4} parent=31 // pred_region
        _
      $region36: #{net_forward.4} parent=31 // pred_fallthru
        _
    $region32: #{net_forward.4} parent=5 // pred_fallthru
      _
    %p1314 = scmp.le.s32.totalorder 2, %s9
    // Predicated region
    $region37: #{net_forward.4} parent=5 // pred_check
      %p1315 = pneg %p1314
    $region38: #{net_forward.4} parent=5 // pred_check_branch
      %1317 = sbr.rel (%p1315) target = $region40
    $region39: #{net_forward.4} parent=5 // pred_region
      %s1318 = ssub.s32 %s9, 2
      // Predicated region
      $region41: #{net_forward.4} parent=39 // pred_check
        %p1319 = pneg %p106
      $region42: #{net_forward.4} parent=39 // pred_check_branch
        %1321 = sbr.rel (%p1319) target = $region44
      $region43: #{net_forward.4} parent=39 // pred_region
        %p1322 = scmp.lt.s32.totalorder %s15, 1
        %s1323 = scalar_select %p1322, %s15, 1
        %s1324 = smul.addr %s1323, 3
        %s1325 = smul.addr %s1324, 8
        %s1326 = scalar_lea.vmem %s3, %s1325
      $region44: #{net_forward.4} parent=39 // pred_fallthru
        _
    $region40: #{net_forward.4} parent=5 // pred_fallthru
      _
  $region6: #{net_forward.4} parent=0 // loop_footer
    %s13 = sadd.s32 1, %s9
  $region7: #{net_forward.4} parent=0 // loop_footer_branch
    %8 = sbr.rel target = $region3
  $region8: #{net_forward.4} parent=0 // loop_exit
    _

</llo_original>
